<compile_context>
chip_gen: v7x
topology: tpu7x:2x2x1
jax: 0.10.0
libtpu: 0.0.40
codegen_flags: <defaults>
</compile_context>

<pallas_src>
import numpy as np
import jax
import jax.numpy as jnp
from jax.experimental import pallas as pl
from jax.experimental.pallas import tpu as pltpu

PAD = 4      # max dilation of the 3x3 convs -> row halo
EPS = 1e-5


def _pick_tile(n, limit):
    """Largest divisor of n that is <= limit (>= 1)."""
    best = 1
    for t in range(1, n + 1):
        if n % t == 0 and t <= limit:
            best = t
    return best


# ----------------------------------------------------------------------------
# Weight folding: collapse conv1x1 + three dilated 3x3 convs into a stack of
# per-row-shift (W*C, W*C) matrices.  Row index = w_in*C + ci, column index =
# w_out*C + co.  Zero padding along W is implicit (out-of-range taps absent).
# ----------------------------------------------------------------------------
def _build_weights(params, W, C):
    taps = {}

    def add(dy, dx, m):
        taps[(dy, dx)] = taps.get((dy, dx), 0.0) + m

    add(0, 0, jnp.transpose(params['w1'][:, :, 0, 0]))              # (Cin, Cout)
    for name, d in (('w31', 1), ('w32', 2), ('w33', 4)):
        wk = params[name]
        for ky in range(3):
            for kx in range(3):
                add((ky - 1) * d, (kx - 1) * d,
                    jnp.transpose(wk[:, :, ky, kx]))

    dys = sorted({dy for dy, _ in taps})
    blocks = []
    for dy in dys:
        acc = jnp.zeros((W * C, W * C), jnp.float32)
        for (tdy, dx), m in taps.items():
            if tdy != dy:
                continue
            s = np.zeros((W, W), np.float32)
            for w in range(W):
                wi = w + dx
                if 0 <= wi < W:
                    s[wi, w] = 1.0          # input col w+dx feeds output col w
            acc = acc + jnp.kron(jnp.asarray(s), m)
        blocks.append(acc)
    return dys, jnp.stack(blocks, axis=0)                  # (n_dy, WC, WC)


# ----------------------------------------------------------------------------
# Pass 1 kernel: fused conv as n_dy accumulated MXU dots (no im2col scratch)
# plus one-pass BN partial statistics packed into a single output block.
# ----------------------------------------------------------------------------
def _make_conv_kernel(TB, H, WC, dys):
    def kernel(xp_ref, w_ref, bias_ref, feat_ref, stat_ref):
        # xp_ref: (TB, H+2*PAD, WC); w_ref: (n_dy, WC, WC); bias_ref: (1, WC)
        acc = jnp.zeros((TB * H, WC), jnp.float32)
        for i, dy in enumerate(dys):
            xs = xp_ref[:, PAD + dy:PAD + dy + H, :].reshape(TB * H, WC)
            acc = acc + jnp.dot(xs, w_ref[i],
                                preferred_element_type=jnp.float32,
                                precision=jax.lax.Precision.HIGHEST)
        feat = acc + bias_ref[...]
        f3 = feat.reshape(TB, H, WC)
        feat_ref[...] = f3
        # per-image, per-lane sum / sum-of-squares, packed into one block
        s = jnp.sum(f3, axis=1)                             # (TB, WC)
        sq = jnp.sum(f3 * f3, axis=1)                       # (TB, WC)
        stat_ref[...] = jnp.concatenate(
            [s[:, None, :], sq[:, None, :]], axis=1)        # (TB, 2, WC)

    return kernel


# ----------------------------------------------------------------------------
# Pass 2 kernel: y = relu(feat * scale + shift), lane-dense elementwise.
# ----------------------------------------------------------------------------
def _scale_shift_relu_kernel(feat_ref, scale_ref, shift_ref, out_ref):
    out_ref[...] = jnp.maximum(
        feat_ref[...] * scale_ref[...] + shift_ref[...], 0.0)


# ----------------------------------------------------------------------------
# Public wrapper: NCHW in, NCHW out (matches the PyTorch MTAM module).
# ----------------------------------------------------------------------------
def mtam_forward(x_nchw, params):
    B, C, H, W = x_nchw.shape
    WC = W * C
    dys, wstk = _build_weights(params, W, C)
    n_dy = len(dys)

    bsum = params['b1'] + params['b31'] + params['b32'] + params['b33']
    bias_ld = jnp.tile(bsum, W).reshape(1, WC)              # lane index = w*C + c

    # NCHW -> lane-dense (B, H + 2*PAD, W*C); only H needs a halo pad.
    x_nhwc = jnp.transpose(x_nchw, (0, 2, 3, 1))
    x_pad = jnp.pad(x_nhwc, ((0, 0), (PAD, PAD), (0, 0), (0, 0)))
    x_pad = x_pad.reshape(B, H + 2 * PAD, WC)

    # Pack batch images per step to raise MXU M-occupancy (target ~256 rows).
    TB = _pick_tile(B, max(1, 256 // H))
    nb = B // TB

    conv_cost = pl.CostEstimate(
        flops=2 * B * H * (n_dy * WC) * WC,
        transcendentals=0,
        bytes_accessed=4 * (x_pad.size + wstk.size + bias_ld.size
                            + B * H * WC + 2 * B * WC))

    feat, stats = pl.pallas_call(
        _make_conv_kernel(TB, H, WC, dys),
        out_shape=(jax.ShapeDtypeStruct((B, H, WC), jnp.float32),
                   jax.ShapeDtypeStruct((B, 2, WC), jnp.float32)),
        grid_spec=pltpu.PrefetchScalarGridSpec(
            num_scalar_prefetch=0,
            grid=(nb,),
            in_specs=[pl.BlockSpec((TB, H + 2 * PAD, WC), lambda b: (b, 0, 0)),
                      pl.BlockSpec((n_dy, WC, WC), lambda b: (0, 0, 0)),
                      pl.BlockSpec((1, WC), lambda b: (0, 0))],
            out_specs=(pl.BlockSpec((TB, H, WC), lambda b: (b, 0, 0)),
                       pl.BlockSpec((TB, 2, WC), lambda b: (b, 0, 0)))),
        compiler_params=pltpu.CompilerParams(
            dimension_semantics=("parallel",)),
        cost_estimate=conv_cost,
    )(x_pad, wstk, bias_ld)

    # ---- tiny (B, C) glue: channel attention MLP + BN batch statistics ----
    HW = H * W
    sum_c = stats[:, 0, :].reshape(B, W, C).sum(axis=1)     # (B, C) sum over H,W
    sq_c = stats[:, 1, :].reshape(B, W, C).sum(axis=1)      # (B, C) sum of squares
    avg = sum_c / HW
    hid = jax.nn.relu(avg @ params['wfc1'].T + params['bfc1'])
    cw = jax.nn.sigmoid(hid @ params['wfc2'].T + params['bfc2'])    # (B, C)

    tot = B * HW                                             # out = feat * cw[b]
    mu = jnp.sum(cw * sum_c, axis=0) / tot                   # (C,)
    ex2 = jnp.sum(cw * cw * sq_c, axis=0) / tot
    # TODO(synk): E[x^2]-mu^2 cancels catastrophically when |mean| >> std; a
    # shifted / Welford reduction would be safer on real data.
    var = jnp.maximum(ex2 - mu * mu, 0.0)                    # biased, training-mode BN
    inv = params['gamma'] * jax.lax.rsqrt(var + EPS)
    scale_b = cw * inv[None, :]                              # (B, C)
    shift = params['beta'] - mu * inv                        # (C,)
    scale_ld = jnp.tile(scale_b, (1, W)).reshape(B, 1, WC)
    shift_ld = jnp.tile(shift, W).reshape(1, 1, WC)

    # ---- pass 2: scale/shift + ReLU, lane-dense, big pipelined tiles ----
    TH = _pick_tile(H, 512)
    TB2 = _pick_tile(B, max(1, 1024 // TH))
    tail_cost = pl.CostEstimate(
        flops=2 * B * H * WC, transcendentals=0,
        bytes_accessed=4 * (2 * B * H * WC + B * WC + WC))
    out_ld = pl.pallas_call(
        _scale_shift_relu_kernel,
        out_shape=jax.ShapeDtypeStruct((B, H, WC), jnp.float32),
        grid_spec=pltpu.PrefetchScalarGridSpec(
            num_scalar_prefetch=0,
            grid=(B // TB2, H // TH),
            in_specs=[pl.BlockSpec((TB2, TH, WC), lambda b, t: (b, t, 0)),
                      pl.BlockSpec((TB2, 1, WC), lambda b, t: (b, 0, 0)),
                      pl.BlockSpec((1, 1, WC), lambda b, t: (0, 0, 0))],
            out_specs=pl.BlockSpec((TB2, TH, WC), lambda b, t: (b, t, 0))),
        compiler_params=pltpu.CompilerParams(
            dimension_semantics=("parallel", "parallel")),
        cost_estimate=tail_cost,
    )(feat, scale_ld, shift_ld)

    out_nhwc = out_ld.reshape(B, H, W, C)
    return jnp.transpose(out_nhwc, (0, 3, 1, 2))


# ----------------------------------------------------------------------------
# Pure-JAX reference (lax convs), used only for correctness checking.
# ----------------------------------------------------------------------------
def mtam_reference(x, params):
    def conv(x, w, b, d, k):
        pad = 0 if k == 1 else d
        y = jax.lax.conv_general_dilated(
            x, w, window_strides=(1, 1),
            padding=((pad, pad), (pad, pad)),
            rhs_dilation=(d, d),
            dimension_numbers=('NCHW', 'OIHW', 'NCHW'),
            precision=jax.lax.Precision.HIGHEST)
        return y + b[None, :, None, None]

    feat = (conv(x, params['w1'], params['b1'], 1, 1)
            + conv(x, params['w31'], params['b31'], 1, 3)
            + conv(x, params['w32'], params['b32'], 2, 3)
            + conv(x, params['w33'], params['b33'], 4, 3))
    avg = jnp.mean(feat, axis=(2, 3))
    hid = jax.nn.relu(avg @ params['wfc1'].T + params['bfc1'])
    cw = jax.nn.sigmoid(hid @ params['wfc2'].T + params['bfc2'])
    out = feat * cw[:, :, None, None]
    mu = jnp.mean(out, axis=(0, 2, 3), keepdims=True)
    var = jnp.mean((out - mu) ** 2, axis=(0, 2, 3), keepdims=True)
    y = (out - mu) / jnp.sqrt(var + EPS) * params['gamma'][None, :, None, None] \
        + params['beta'][None, :, None, None]
    return jax.nn.relu(y)


if __name__ == "__main__":
    B, C, H, W = 2, 8, 16, 16        # W*C == 128 -> fully lane-dense layout
    key = jax.random.PRNGKey(0)
    ks = jax.random.split(key, 16)

    def rn(k, shape, scale=0.1):
        return scale * jax.random.normal(k, shape, jnp.float32)

    params = {
        'w1':  rn(ks[0], (C, C, 1, 1)),  'b1':  rn(ks[1], (C,)),
        'w31': rn(ks[2], (C, C, 3, 3)),  'b31': rn(ks[3], (C,)),
        'w32': rn(ks[4], (C, C, 3, 3)),  'b32': rn(ks[5], (C,)),
        'w33': rn(ks[6], (C, C, 3, 3)),  'b33': rn(ks[7], (C,)),
        'wfc1': rn(ks[8], (C // 4, C)),  'bfc1': rn(ks[9], (C // 4,)),
        'wfc2': rn(ks[10], (C, C // 4)), 'bfc2': rn(ks[11], (C,)),
        'gamma': 1.0 + rn(ks[12], (C,)), 'beta': rn(ks[13], (C,)),
    }
    x = jax.random.normal(ks[14], (B, C, H, W), jnp.float32)

    fwd = jax.jit(mtam_forward)
    out = jax.block_until_ready(fwd(x, params))
    ref = jax.block_until_ready(mtam_reference(x, params))

    assert out.shape == (B, C, H, W)
    np.testing.assert_allclose(np.asarray(out), np.asarray(ref),
                               rtol=2e-3, atol=2e-3)
    print("KERNEL_OK")
</pallas_src>

<mosaic_0001>
module attributes {stable_mosaic.version = 11 : i64} {
  func.func @kernel(%arg0: i32, %arg1: memref<2x24x128xf32, #tpu.memory_space<vmem>>, %arg2: memref<7x128x128xf32, #tpu.memory_space<vmem>>, %arg3: memref<1x128xf32, #tpu.memory_space<vmem>>, %arg4: memref<2x16x128xf32, #tpu.memory_space<vmem>>, %arg5: memref<2x2x128xf32, #tpu.memory_space<vmem>>) attributes {dimension_semantics = [#tpu.dimension_semantics<parallel>], iteration_bounds = array<i64: 1>, scalar_prefetch = 0 : i64, scratch_operands = 0 : i64, tpu.core_type = #tpu.core_type<tc>, window_params = [{transform_indices = @transform_0, window_bounds = array<i64: 2, 24, 128>}, {pipeline_mode = #tpu.pipeline_mode<synchronous>, transform_indices = @transform_1, window_bounds = array<i64: 7, 128, 128>}, {pipeline_mode = #tpu.pipeline_mode<synchronous>, transform_indices = @transform_2, window_bounds = array<i64: 1, 128>}, {transform_indices = @transform_3, window_bounds = array<i64: 2, 16, 128>}, {transform_indices = @transform_4, window_bounds = array<i64: 2, 2, 128>}]} {
    %cst = arith.constant 0.000000e+00 : f32
    %0 = vector.broadcast %cst : f32 to vector<32x128xf32>
    %c0 = arith.constant 0 : index
    %c0_0 = arith.constant 0 : index
    %c0_1 = arith.constant 0 : index
    %1 = vector.load %arg1[%c0, %c0_0, %c0_1] : memref<2x24x128xf32, #tpu.memory_space<vmem>>, vector<2x16x128xf32>
    %2 = vector.shape_cast %1 : vector<2x16x128xf32> to vector<32x128xf32>
    %c0_2 = arith.constant 0 : index
    %c0_3 = arith.constant 0 : index
    %c0_4 = arith.constant 0 : index
    %3 = vector.load %arg2[%c0_2, %c0_3, %c0_4] : memref<7x128x128xf32, #tpu.memory_space<vmem>>, vector<1x128x128xf32>
    %4 = vector.shape_cast %3 : vector<1x128x128xf32> to vector<128x128xf32>
    %cst_5 = arith.constant dense<0.000000e+00> : vector<32x128xf32>
    %5 = tpu.matmul %2, %4, %cst_5 {dimension_numbers = #tpu.dot_dimension_numbers<[1], [0], [0], [1], [0, 0, 1, 1], [], []>, precision = #tpu.contract_precision<fp32>} : vector<32x128xf32>, vector<128x128xf32>, vector<32x128xf32> -> vector<32x128xf32>
    %6 = arith.addf %0, %5 : vector<32x128xf32>
    %c0_6 = arith.constant 0 : index
    %c2 = arith.constant 2 : index
    %c0_7 = arith.constant 0 : index
    %7 = vector.load %arg1[%c0_6, %c2, %c0_7] : memref<2x24x128xf32, #tpu.memory_space<vmem>>, vector<2x16x128xf32>
    %8 = vector.shape_cast %7 : vector<2x16x128xf32> to vector<32x128xf32>
    %c1 = arith.constant 1 : index
    %c0_8 = arith.constant 0 : index
    %c0_9 = arith.constant 0 : index
    %9 = vector.load %arg2[%c1, %c0_8, %c0_9] : memref<7x128x128xf32, #tpu.memory_space<vmem>>, vector<1x128x128xf32>
    %10 = vector.shape_cast %9 : vector<1x128x128xf32> to vector<128x128xf32>
    %cst_10 = arith.constant dense<0.000000e+00> : vector<32x128xf32>
    %11 = tpu.matmul %8, %10, %cst_10 {dimension_numbers = #tpu.dot_dimension_numbers<[1], [0], [0], [1], [0, 0, 1, 1], [], []>, precision = #tpu.contract_precision<fp32>} : vector<32x128xf32>, vector<128x128xf32>, vector<32x128xf32> -> vector<32x128xf32>
    %12 = arith.addf %6, %11 : vector<32x128xf32>
    %c0_11 = arith.constant 0 : index
    %c3 = arith.constant 3 : index
    %c0_12 = arith.constant 0 : index
    %13 = vector.load %arg1[%c0_11, %c3, %c0_12] : memref<2x24x128xf32, #tpu.memory_space<vmem>>, vector<2x16x128xf32>
    %14 = vector.shape_cast %13 : vector<2x16x128xf32> to vector<32x128xf32>
    %c2_13 = arith.constant 2 : index
    %c0_14 = arith.constant 0 : index
    %c0_15 = arith.constant 0 : index
    %15 = vector.load %arg2[%c2_13, %c0_14, %c0_15] : memref<7x128x128xf32, #tpu.memory_space<vmem>>, vector<1x128x128xf32>
    %16 = vector.shape_cast %15 : vector<1x128x128xf32> to vector<128x128xf32>
    %cst_16 = arith.constant dense<0.000000e+00> : vector<32x128xf32>
    %17 = tpu.matmul %14, %16, %cst_16 {dimension_numbers = #tpu.dot_dimension_numbers<[1], [0], [0], [1], [0, 0, 1, 1], [], []>, precision = #tpu.contract_precision<fp32>} : vector<32x128xf32>, vector<128x128xf32>, vector<32x128xf32> -> vector<32x128xf32>
    %18 = arith.addf %12, %17 : vector<32x128xf32>
    %c0_17 = arith.constant 0 : index
    %c4 = arith.constant 4 : index
    %c0_18 = arith.constant 0 : index
    %19 = vector.load %arg1[%c0_17, %c4, %c0_18] : memref<2x24x128xf32, #tpu.memory_space<vmem>>, vector<2x16x128xf32>
    %20 = vector.shape_cast %19 : vector<2x16x128xf32> to vector<32x128xf32>
    %c3_19 = arith.constant 3 : index
    %c0_20 = arith.constant 0 : index
    %c0_21 = arith.constant 0 : index
    %21 = vector.load %arg2[%c3_19, %c0_20, %c0_21] : memref<7x128x128xf32, #tpu.memory_space<vmem>>, vector<1x128x128xf32>
    %22 = vector.shape_cast %21 : vector<1x128x128xf32> to vector<128x128xf32>
    %cst_22 = arith.constant dense<0.000000e+00> : vector<32x128xf32>
    %23 = tpu.matmul %20, %22, %cst_22 {dimension_numbers = #tpu.dot_dimension_numbers<[1], [0], [0], [1], [0, 0, 1, 1], [], []>, precision = #tpu.contract_precision<fp32>} : vector<32x128xf32>, vector<128x128xf32>, vector<32x128xf32> -> vector<32x128xf32>
    %24 = arith.addf %18, %23 : vector<32x128xf32>
    %c0_23 = arith.constant 0 : index
    %c5 = arith.constant 5 : index
    %c0_24 = arith.constant 0 : index
    %25 = vector.load %arg1[%c0_23, %c5, %c0_24] : memref<2x24x128xf32, #tpu.memory_space<vmem>>, vector<2x16x128xf32>
    %26 = vector.shape_cast %25 : vector<2x16x128xf32> to vector<32x128xf32>
    %c4_25 = arith.constant 4 : index
    %c0_26 = arith.constant 0 : index
    %c0_27 = arith.constant 0 : index
    %27 = vector.load %arg2[%c4_25, %c0_26, %c0_27] : memref<7x128x128xf32, #tpu.memory_space<vmem>>, vector<1x128x128xf32>
    %28 = vector.shape_cast %27 : vector<1x128x128xf32> to vector<128x128xf32>
    %cst_28 = arith.constant dense<0.000000e+00> : vector<32x128xf32>
    %29 = tpu.matmul %26, %28, %cst_28 {dimension_numbers = #tpu.dot_dimension_numbers<[1], [0], [0], [1], [0, 0, 1, 1], [], []>, precision = #tpu.contract_precision<fp32>} : vector<32x128xf32>, vector<128x128xf32>, vector<32x128xf32> -> vector<32x128xf32>
    %30 = arith.addf %24, %29 : vector<32x128xf32>
    %c0_29 = arith.constant 0 : index
    %c6 = arith.constant 6 : index
    %c0_30 = arith.constant 0 : index
    %31 = vector.load %arg1[%c0_29, %c6, %c0_30] : memref<2x24x128xf32, #tpu.memory_space<vmem>>, vector<2x16x128xf32>
    %32 = vector.shape_cast %31 : vector<2x16x128xf32> to vector<32x128xf32>
    %c5_31 = arith.constant 5 : index
    %c0_32 = arith.constant 0 : index
    %c0_33 = arith.constant 0 : index
    %33 = vector.load %arg2[%c5_31, %c0_32, %c0_33] : memref<7x128x128xf32, #tpu.memory_space<vmem>>, vector<1x128x128xf32>
    %34 = vector.shape_cast %33 : vector<1x128x128xf32> to vector<128x128xf32>
    %cst_34 = arith.constant dense<0.000000e+00> : vector<32x128xf32>
    %35 = tpu.matmul %32, %34, %cst_34 {dimension_numbers = #tpu.dot_dimension_numbers<[1], [0], [0], [1], [0, 0, 1, 1], [], []>, precision = #tpu.contract_precision<fp32>} : vector<32x128xf32>, vector<128x128xf32>, vector<32x128xf32> -> vector<32x128xf32>
    %36 = arith.addf %30, %35 : vector<32x128xf32>
    %c0_35 = arith.constant 0 : index
    %c8 = arith.constant 8 : index
    %c0_36 = arith.constant 0 : index
    %37 = vector.load %arg1[%c0_35, %c8, %c0_36] : memref<2x24x128xf32, #tpu.memory_space<vmem>>, vector<2x16x128xf32>
    %38 = vector.shape_cast %37 : vector<2x16x128xf32> to vector<32x128xf32>
    %c6_37 = arith.constant 6 : index
    %c0_38 = arith.constant 0 : index
    %c0_39 = arith.constant 0 : index
    %39 = vector.load %arg2[%c6_37, %c0_38, %c0_39] : memref<7x128x128xf32, #tpu.memory_space<vmem>>, vector<1x128x128xf32>
    %40 = vector.shape_cast %39 : vector<1x128x128xf32> to vector<128x128xf32>
    %cst_40 = arith.constant dense<0.000000e+00> : vector<32x128xf32>
    %41 = tpu.matmul %38, %40, %cst_40 {dimension_numbers = #tpu.dot_dimension_numbers<[1], [0], [0], [1], [0, 0, 1, 1], [], []>, precision = #tpu.contract_precision<fp32>} : vector<32x128xf32>, vector<128x128xf32>, vector<32x128xf32> -> vector<32x128xf32>
    %42 = arith.addf %36, %41 : vector<32x128xf32>
    %c0_41 = arith.constant 0 : index
    %c0_42 = arith.constant 0 : index
    %43 = vector.load %arg3[%c0_41, %c0_42] : memref<1x128xf32, #tpu.memory_space<vmem>>, vector<1x128xf32>
    %44 = vector.broadcast %43 : vector<1x128xf32> to vector<32x128xf32>
    %45 = arith.addf %42, %44 : vector<32x128xf32>
    %46 = vector.shape_cast %45 : vector<32x128xf32> to vector<2x16x128xf32>
    %c0_43 = arith.constant 0 : index
    %c0_44 = arith.constant 0 : index
    %c0_45 = arith.constant 0 : index
    %47 = vector.load %arg4[%c0_43, %c0_44, %c0_45] : memref<2x16x128xf32, #tpu.memory_space<vmem>>, vector<2x16x128xf32>
    tpu.vector_store %arg4[%c0_43, %c0_44, %c0_45], %46 {strides = array<i32>} : memref<2x16x128xf32, #tpu.memory_space<vmem>>, vector<2x16x128xf32>,
    %cst_46 = arith.constant dense<0.000000e+00> : vector<2x128xf32>
    %48 = vector.multi_reduction <add>, %46, %cst_46 [1] : vector<2x16x128xf32> to vector<2x128xf32>
    %49 = arith.mulf %46, %46 : vector<2x16x128xf32>
    %cst_47 = arith.constant dense<0.000000e+00> : vector<2x128xf32>
    %50 = vector.multi_reduction <add>, %49, %cst_47 [1] : vector<2x16x128xf32> to vector<2x128xf32>
    %51 = vector.shape_cast %48 : vector<2x128xf32> to vector<2x1x128xf32>
    %52 = vector.shape_cast %50 : vector<2x128xf32> to vector<2x1x128xf32>
    %53 = tpu.concatenate %51, %52 in 1 : vector<2x1x128xf32>, vector<2x1x128xf32> -> vector<2x2x128xf32>
    %c0_48 = arith.constant 0 : index
    %c0_49 = arith.constant 0 : index
    %c0_50 = arith.constant 0 : index
    %54 = vector.load %arg5[%c0_48, %c0_49, %c0_50] : memref<2x2x128xf32, #tpu.memory_space<vmem>>, vector<2x2x128xf32>
    tpu.vector_store %arg5[%c0_48, %c0_49, %c0_50], %53 {strides = array<i32>} : memref<2x2x128xf32, #tpu.memory_space<vmem>>, vector<2x2x128xf32>,
    return
  }
  func.func @transform_0(%arg0: i32) -> (i32, i32, i32) {
    %c0_i32 = arith.constant 0 : i32
    %c0_i32_0 = arith.constant 0 : i32
    %c0_i32_1 = arith.constant 0 : i32
    return %arg0, %c0_i32, %c0_i32_0 : i32, i32, i32
  }
  func.func @transform_1(%arg0: i32) -> (i32, i32, i32) {
    %c0_i32 = arith.constant 0 : i32
    %c0_i32_0 = arith.constant 0 : i32
    %c0_i32_1 = arith.constant 0 : i32
    %c0_i32_2 = arith.constant 0 : i32
    return %c0_i32, %c0_i32_0, %c0_i32_1 : i32, i32, i32
  }
  func.func @transform_2(%arg0: i32) -> (i32, i32) {
    %c0_i32 = arith.constant 0 : i32
    %c0_i32_0 = arith.constant 0 : i32
    %c0_i32_1 = arith.constant 0 : i32
    return %c0_i32, %c0_i32_0 : i32, i32
  }
  func.func @transform_3(%arg0: i32) -> (i32, i32, i32) {
    %c0_i32 = arith.constant 0 : i32
    %c0_i32_0 = arith.constant 0 : i32
    %c0_i32_1 = arith.constant 0 : i32
    return %arg0, %c0_i32, %c0_i32_0 : i32, i32, i32
  }
  func.func @transform_4(%arg0: i32) -> (i32, i32, i32) {
    %c0_i32 = arith.constant 0 : i32
    %c0_i32_0 = arith.constant 0 : i32
    %c0_i32_1 = arith.constant 0 : i32
    return %arg0, %c0_i32, %c0_i32_0 : i32, i32, i32
  }
}

module attributes {stable_mosaic.version = 11 : i64} {
  func.func @_scale_shift_relu_kernel(%arg0: i32, %arg1: i32, %arg2: memref<2x16x128xf32, #tpu.memory_space<vmem>>, %arg3: memref<2x1x128xf32, #tpu.memory_space<vmem>>, %arg4: memref<1x1x128xf32, #tpu.memory_space<vmem>>, %arg5: memref<2x16x128xf32, #tpu.memory_space<vmem>>) attributes {dimension_semantics = [#tpu.dimension_semantics<parallel>, #tpu.dimension_semantics<parallel>], iteration_bounds = array<i64: 1, 1>, scalar_prefetch = 0 : i64, scratch_operands = 0 : i64, tpu.core_type = #tpu.core_type<tc>, window_params = [{transform_indices = @transform_0, window_bounds = array<i64: 2, 16, 128>}, {transform_indices = @transform_1, window_bounds = array<i64: 2, 1, 128>}, {pipeline_mode = #tpu.pipeline_mode<synchronous>, transform_indices = @transform_2, window_bounds = array<i64: 1, 1, 128>}, {transform_indices = @transform_3, window_bounds = array<i64: 2, 16, 128>}]} {
    %c0 = arith.constant 0 : index
    %c0_0 = arith.constant 0 : index
    %c0_1 = arith.constant 0 : index
    %0 = vector.load %arg2[%c0, %c0_0, %c0_1] : memref<2x16x128xf32, #tpu.memory_space<vmem>>, vector<2x16x128xf32>
    %c0_2 = arith.constant 0 : index
    %c0_3 = arith.constant 0 : index
    %c0_4 = arith.constant 0 : index
    %1 = vector.load %arg3[%c0_2, %c0_3, %c0_4] : memref<2x1x128xf32, #tpu.memory_space<vmem>>, vector<2x1x128xf32>
    %2 = vector.broadcast %1 : vector<2x1x128xf32> to vector<2x16x128xf32>
    %3 = arith.mulf %0, %2 : vector<2x16x128xf32>
    %c0_5 = arith.constant 0 : index
    %c0_6 = arith.constant 0 : index
    %c0_7 = arith.constant 0 : index
    %4 = vector.load %arg4[%c0_5, %c0_6, %c0_7] : memref<1x1x128xf32, #tpu.memory_space<vmem>>, vector<1x1x128xf32>
    %5 = vector.broadcast %4 : vector<1x1x128xf32> to vector<2x16x128xf32>
    %6 = arith.addf %3, %5 : vector<2x16x128xf32>
    %cst = arith.constant 0.000000e+00 : f32
    %7 = vector.broadcast %cst : f32 to vector<2x16x128xf32>
    %8 = arith.maximumf %6, %7 : vector<2x16x128xf32>
    %c0_8 = arith.constant 0 : index
    %c0_9 = arith.constant 0 : index
    %c0_10 = arith.constant 0 : index
    %9 = vector.load %arg5[%c0_8, %c0_9, %c0_10] : memref<2x16x128xf32, #tpu.memory_space<vmem>>, vector<2x16x128xf32>
    tpu.vector_store %arg5[%c0_8, %c0_9, %c0_10], %8 {strides = array<i32>} : memref<2x16x128xf32, #tpu.memory_space<vmem>>, vector<2x16x128xf32>,
    return
  }
  func.func @transform_0(%arg0: i32, %arg1: i32) -> (i32, i32, i32) {
    %c0_i32 = arith.constant 0 : i32
    %c0_i32_0 = arith.constant 0 : i32
    return %arg0, %arg1, %c0_i32 : i32, i32, i32
  }
  func.func @transform_1(%arg0: i32, %arg1: i32) -> (i32, i32, i32) {
    %c0_i32 = arith.constant 0 : i32
    %c0_i32_0 = arith.constant 0 : i32
    %c0_i32_1 = arith.constant 0 : i32
    return %arg0, %c0_i32, %c0_i32_0 : i32, i32, i32
  }
  func.func @transform_2(%arg0: i32, %arg1: i32) -> (i32, i32, i32) {
    %c0_i32 = arith.constant 0 : i32
    %c0_i32_0 = arith.constant 0 : i32
    %c0_i32_1 = arith.constant 0 : i32
    %c0_i32_2 = arith.constant 0 : i32
    return %c0_i32, %c0_i32_0, %c0_i32_1 : i32, i32, i32
  }
  func.func @transform_3(%arg0: i32, %arg1: i32) -> (i32, i32, i32) {
    %c0_i32 = arith.constant 0 : i32
    %c0_i32_0 = arith.constant 0 : i32
    return %arg0, %arg1, %c0_i32 : i32, i32, i32
  }
}

</mosaic_0001>

<llo_original>
// kernel: tile.18
$region0: #{tile.18}
  #allocation0 [shape = 's32[1]{0}', space=sflag, size = 0x4, scoped, tag = 'scoped memory for tile.18']
  %s0 = inlined_call_operand.vmem [shape: f32[8], index: 0, kind: input, shape index: {}]
  %s1 = inlined_call_operand.vmem [shape: f32[16,8], index: 1, kind: output, shape index: {}]
  // Predicated region
  $region2: #{tile.18} parent=0 // pred_check
    _
  $region3: #{tile.18} parent=0 // pred_check_branch
    %3 = sbr.rel (0) target = $region5
  $region4: #{tile.18} parent=0 // pred_region
    _
  $region5: #{tile.18} parent=0 // pred_fallthru
    _
  %v4 = vld [vmem:[%s0] ss:$0 sm:$0xff]
  %5 = vst [vmem:[%s1] sm:$0xff] %v4
  %s6 = scalar_lea.vmem %s1, 8
  %7 = vst [vmem:[%s6] sm:$0xff] %v4

// kernel: tile.19
$region0: #{tile.19}
  %s0 = inlined_call_operand.vmem [shape: f32[16,8], index: 0, kind: input, shape index: {}]
  %s1 = inlined_call_operand.vmem [shape: f32[1,128], index: 1, kind: output, shape index: {}]
  $region1: #{tile.19} parent=0
    #allocation0 [shape = 'u8[4096]{0}', space=vmem, size = 0x1000, scoped, tag = 'scoped mem for output reshape']
    %v2 = vld [vmem:[%s0] sm:$0x1]
    %vm3 = vcmask 64512
    %4 = vst.msk [vmem:[#allocation0] sm:$0x1] %vm3, %v2
    %s5 = scalar_lea.vmem %s0, 15
    %v6 = vld [vmem:[%s5] sm:$0x1]
    %7 = vrot.lane.b32.xlu0 %v6, 120
    %v8 = vpop.permute.xlu0 %7
    %vm9 = vcmask 1048512
    %10 = vst.msk [vmem:[#allocation0] sm:$0x1] %vm9, %v8
    %s11 = scalar_lea.vmem %s0, 14
    %v12 = vld [vmem:[%s11] sm:$0x1]
    %13 = vrot.lane.b32.xlu0 %v12, 112
    %v14 = vpop.permute.xlu0 %13
    %vm15 = vcmask 982912
    %16 = vst.msk [vmem:[#allocation0] sm:$0x1] %vm15, %v14
    %s17 = scalar_lea.vmem %s0, 13
    %v18 = vld [vmem:[%s17] sm:$0x1]
    %19 = vrot.lane.b32.xlu0 %v18, 104
    %v20 = vpop.permute.xlu0 %19
    %vm21 = vcmask 917312
    %22 = vst.msk [vmem:[#allocation0] sm:$0x1] %vm21, %v20
    %s23 = scalar_lea.vmem %s0, 12
    %v24 = vld [vmem:[%s23] sm:$0x1]
    %25 = vrot.lane.b32.xlu0 %v24, 96
    %v26 = vpop.permute.xlu0 %25
    %vm27 = vcmask 851712
    %28 = vst.msk [vmem:[#allocation0] sm:$0x1] %vm27, %v26
    %s29 = scalar_lea.vmem %s0, 11
    %v30 = vld [vmem:[%s29] sm:$0x1]
    %31 = vrot.lane.b32.xlu0 %v30, 88
    %v32 = vpop.permute.xlu0 %31
    %vm33 = vcmask 786112
    %34 = vst.msk [vmem:[#allocation0] sm:$0x1] %vm33, %v32
    %s35 = scalar_lea.vmem %s0, 10
    %v36 = vld [vmem:[%s35] sm:$0x1]
    %37 = vrot.lane.b32.xlu0 %v36, 80
    %v38 = vpop.permute.xlu0 %37
    %vm39 = vcmask 720512
    %40 = vst.msk [vmem:[#allocation0] sm:$0x1] %vm39, %v38
    %s41 = scalar_lea.vmem %s0, 9
    %v42 = vld [vmem:[%s41] sm:$0x1]
    %43 = vrot.lane.b32.xlu0 %v42, 72
    %v44 = vpop.permute.xlu0 %43
    %vm45 = vcmask 654912
    %46 = vst.msk [vmem:[#allocation0] sm:$0x1] %vm45, %v44
    %s47 = scalar_lea.vmem %s0, 8
    %v48 = vld [vmem:[%s47] sm:$0x1]
    %49 = vrot.lane.b32.xlu0 %v48, 64
    %v50 = vpop.permute.xlu0 %49
    %vm51 = vcmask 589312
    %52 = vst.msk [vmem:[#allocation0] sm:$0x1] %vm51, %v50
    %s53 = scalar_lea.vmem %s0, 7
    %v54 = vld [vmem:[%s53] sm:$0x1]
    %55 = vrot.lane.b32.xlu0 %v54, 56
    %v56 = vpop.permute.xlu0 %55
    %vm57 = vcmask 523712
    %58 = vst.msk [vmem:[#allocation0] sm:$0x1] %vm57, %v56
    %s59 = scalar_lea.vmem %s0, 6
    %v60 = vld [vmem:[%s59] sm:$0x1]
    %61 = vrot.lane.b32.xlu0 %v60, 48
    %v62 = vpop.permute.xlu0 %61
    %vm63 = vcmask 458112
    %64 = vst.msk [vmem:[#allocation0] sm:$0x1] %vm63, %v62
    %s65 = scalar_lea.vmem %s0, 5
    %v66 = vld [vmem:[%s65] sm:$0x1]
    %67 = vrot.lane.b32.xlu0 %v66, 40
    %v68 = vpop.permute.xlu0 %67
    %vm69 = vcmask 392512
    %70 = vst.msk [vmem:[#allocation0] sm:$0x1] %vm69, %v68
    %s71 = scalar_lea.vmem %s0, 4
    %v72 = vld [vmem:[%s71] sm:$0x1]
    %73 = vrot.lane.b32.xlu0 %v72, 32
    %v74 = vpop.permute.xlu0 %73
    %vm75 = vcmask 326912
    %76 = vst.msk [vmem:[#allocation0] sm:$0x1] %vm75, %v74
    %s77 = scalar_lea.vmem %s0, 3
    %v78 = vld [vmem:[%s77] sm:$0x1]
    %79 = vrot.lane.b32.xlu0 %v78, 24
    %v80 = vpop.permute.xlu0 %79
    %vm81 = vcmask 261312
    %82 = vst.msk [vmem:[#allocation0] sm:$0x1] %vm81, %v80
    %s83 = scalar_lea.vmem %s0, 2
    %v84 = vld [vmem:[%s83] sm:$0x1]
    %85 = vrot.lane.b32.xlu0 %v84, 16
    %v86 = vpop.permute.xlu0 %85
    %vm87 = vcmask 195712
    %88 = vst.msk [vmem:[#allocation0] sm:$0x1] %vm87, %v86
    %s89 = scalar_lea.vmem %s0, 1
    %v90 = vld [vmem:[%s89] sm:$0x1]
    %91 = vrot.lane.b32.xlu0 %v90, 8
    %v92 = vpop.permute.xlu0 %91
    %vm93 = vcmask 130112
    %94 = vst.msk [vmem:[#allocation0] sm:$0x1] %vm93, %v92
    %s96 = sshllo.u32 0, 1
    %v98 = vld [vmem:[#allocation0] sm:%s96]
    %s99 = sshllo.u32 0, 1
    %100 = vst [vmem:[%s1] sm:%s99] %v98

// kernel: mtam_forward.2
$region0: #{mtam_forward.2}
  #allocation0 [shape = 'u32[]', space=smem, size = 0x4, offset = 0x4, fixed_abs, tag = 'smem constant byte address 0x4 - core index']
  #allocation1 [shape = 'u32[144,128]{1,0:T(1,128)}', space=vmem, size = 0x12000, scoped, tag = 'internal scratch']
  %s0 = inlined_call_operand.vmem [shape: f32[2,24,128], index: 0, kind: input, shape index: {}]
  %s1 = inlined_call_operand.vmem [shape: f32[7,128,128], index: 1, kind: input, shape index: {}]
  %s2 = inlined_call_operand.vmem [shape: f32[1,128], index: 2, kind: input, shape index: {}]
  %s3 = inlined_call_operand.vmem [shape: f32[2,16,128], index: 3, kind: output, shape index: {0}]
  %s4 = inlined_call_operand.vmem [shape: f32[2,2,128], index: 4, kind: output, shape index: {1}]
  %5 = xla_tuple %s3, %s4
  %s6 = sld [smem:[#allocation0]]
  $region30: #{mtam_forward.2} parent=0
    _
  %s8 = ssub.s32 1, %s6
  %s9 = scalar_select 0, %s8, %s6
  // Predicated region
  $region2: #{mtam_forward.2} parent=0 // pred_check
    _
  $region3: #{mtam_forward.2} parent=0 // pred_check_branch
    %11 = sbr.rel (0) target = $region5
  $region4: #{mtam_forward.2} parent=0 // pred_region
    _
  $region5: #{mtam_forward.2} parent=0 // pred_fallthru
    _
  // Predicated region
  $region6: #{mtam_forward.2} parent=0 // pred_check
    _
  $region7: #{mtam_forward.2} parent=0 // pred_check_branch
    %13 = sbr.rel (0) target = $region9
  $region8: #{mtam_forward.2} parent=0 // pred_region
    _
  $region9: #{mtam_forward.2} parent=0 // pred_fallthru
    _
  // Predicated region
  $region10: #{mtam_forward.2} parent=0 // pred_check
    _
  $region11: #{mtam_forward.2} parent=0 // pred_check_branch
    %15 = sbr.rel (0) target = $region13
  $region12: #{mtam_forward.2} parent=0 // pred_region
    _
  $region13: #{mtam_forward.2} parent=0 // pred_fallthru
    _
  %v16 = vld [vmem:[%s0] sm:$0xff]
  %v17 = vld [vmem:[%s0 + $0x8] sm:$0xff]
  %v18 = vld [vmem:[%s0 + $0x18] sm:$0xff]
  %v19 = vld [vmem:[%s0 + $0x20] sm:$0xff]
  %v20 = vld [vmem:[%s1] sm:$0xff]
  %v21 = vld [vmem:[%s1 + $0x8] sm:$0xff]
  %v22 = vld [vmem:[%s1 + $0x10] sm:$0xff]
  %v23 = vld [vmem:[%s1 + $0x18] sm:$0xff]
  %v24 = vld [vmem:[%s1 + $0x20] sm:$0xff]
  %v25 = vld [vmem:[%s1 + $0x28] sm:$0xff]
  %v26 = vld [vmem:[%s1 + $0x30] sm:$0xff]
  %v27 = vld [vmem:[%s1 + $0x38] sm:$0xff]
  %v28 = vld [vmem:[%s1 + $0x40] sm:$0xff]
  %v29 = vld [vmem:[%s1 + $0x48] sm:$0xff]
  %v30 = vld [vmem:[%s1 + $0x50] sm:$0xff]
  %v31 = vld [vmem:[%s1 + $0x58] sm:$0xff]
  %v32 = vld [vmem:[%s1 + $0x60] sm:$0xff]
  %v33 = vld [vmem:[%s1 + $0x68] sm:$0xff]
  %v34 = vld [vmem:[%s1 + $0x70] sm:$0xff]
  %v35 = vld [vmem:[%s1 + $0x78] sm:$0xff]
  %v36 = vld [vmem:[%s0 + $0x2] sm:$0xff]
  %v37 = vld [vmem:[%s0 + $0xa] sm:$0xff]
  %v38 = vld [vmem:[%s0 + $0x1a] sm:$0xff]
  %v39 = vld [vmem:[%s0 + $0x22] sm:$0xff]
  %s40 = scalar_lea.vmem %s1, 128
  %v41 = vld [vmem:[%s40] sm:$0xff]
  %v42 = vld [vmem:[%s40 + $0x8] sm:$0xff]
  %v43 = vld [vmem:[%s40 + $0x10] sm:$0xff]
  %v44 = vld [vmem:[%s40 + $0x18] sm:$0xff]
  %v45 = vld [vmem:[%s40 + $0x20] sm:$0xff]
  %v46 = vld [vmem:[%s40 + $0x28] sm:$0xff]
  %v47 = vld [vmem:[%s40 + $0x30] sm:$0xff]
  %v48 = vld [vmem:[%s40 + $0x38] sm:$0xff]
  %v49 = vld [vmem:[%s40 + $0x40] sm:$0xff]
  %v50 = vld [vmem:[%s40 + $0x48] sm:$0xff]
  %v51 = vld [vmem:[%s40 + $0x50] sm:$0xff]
  %v52 = vld [vmem:[%s40 + $0x58] sm:$0xff]
  %v53 = vld [vmem:[%s40 + $0x60] sm:$0xff]
  %v54 = vld [vmem:[%s40 + $0x68] sm:$0xff]
  %v55 = vld [vmem:[%s40 + $0x70] sm:$0xff]
  %v56 = vld [vmem:[%s40 + $0x78] sm:$0xff]
  %57 = vmatprep.subr.mxu0 0.0
  %v58 = vand.u32 %v41, 4294901760
  %59 = vmatpush1.msra.mxu0 %v58
  %60 = vmatprep.subr.mxu0 0.0
  %v61 = vand.u32 %v42, 4294901760
  %62 = vmatpush1.msra.mxu0 %v61
  %63 = vmatprep.subr.mxu0 0.0
  %v64 = vand.u32 %v43, 4294901760
  %65 = vmatpush1.msra.mxu0 %v64
  %66 = vmatprep.subr.mxu0 0.0
  %v67 = vand.u32 %v44, 4294901760
  %68 = vmatpush1.msra.mxu0 %v67
  %69 = vmatprep.subr.mxu0 0.0
  %v70 = vand.u32 %v45, 4294901760
  %71 = vmatpush1.msra.mxu0 %v70
  %72 = vmatprep.subr.mxu0 0.0
  %v73 = vand.u32 %v46, 4294901760
  %74 = vmatpush1.msra.mxu0 %v73
  %75 = vmatprep.subr.mxu0 0.0
  %v76 = vand.u32 %v47, 4294901760
  %77 = vmatpush1.msra.mxu0 %v76
  %78 = vmatprep.subr.mxu0 0.0
  %v79 = vand.u32 %v48, 4294901760
  %80 = vmatpush1.msra.mxu0 %v79
  %81 = vmatprep.subr.mxu0 0.0
  %v82 = vand.u32 %v49, 4294901760
  %83 = vmatpush1.msra.mxu0 %v82
  %84 = vmatprep.subr.mxu0 0.0
  %v85 = vand.u32 %v50, 4294901760
  %86 = vmatpush1.msra.mxu0 %v85
  %87 = vmatprep.subr.mxu0 0.0
  %v88 = vand.u32 %v51, 4294901760
  %89 = vmatpush1.msra.mxu0 %v88
  %90 = vmatprep.subr.mxu0 0.0
  %v91 = vand.u32 %v52, 4294901760
  %92 = vmatpush1.msra.mxu0 %v91
  %93 = vmatprep.subr.mxu0 0.0
  %v94 = vand.u32 %v53, 4294901760
  %95 = vmatpush1.msra.mxu0 %v94
  %96 = vmatprep.subr.mxu0 0.0
  %v97 = vand.u32 %v54, 4294901760
  %98 = vmatpush1.msra.mxu0 %v97
  %99 = vmatprep.subr.mxu0 0.0
  %v100 = vand.u32 %v55, 4294901760
  %101 = vmatpush1.msra.mxu0 %v100
  %102 = vmatprep.subr.mxu0 0.0
  %v103 = vand.u32 %v56, 4294901760
  %104 = vmatpush1.msra.mxu0 %v103
  %105 = vmatprep.subr.mxu0 0.0
  %106 = vmatpush1.msra.mxu0 0.0
  %107 = vmatprep.subr.mxu0 0.0
  %108 = vmatpush1.msra.mxu0 0.0
  %109 = vmatprep.subr.mxu0 0.0
  %110 = vmatpush1.msra.mxu0 0.0
  %111 = vmatprep.subr.mxu0 0.0
  %112 = vmatpush1.msra.mxu0 0.0
  %113 = vmatprep.subr.mxu0 0.0
  %114 = vmatpush1.msra.mxu0 0.0
  %115 = vmatprep.subr.mxu0 0.0
  %116 = vmatpush1.msra.mxu0 0.0
  %117 = vmatprep.subr.mxu0 0.0
  %118 = vmatpush1.msra.mxu0 0.0
  %119 = vmatprep.subr.mxu0 0.0
  %120 = vmatpush1.msra.mxu0 0.0
  %121 = vmatprep.subr.mxu0 0.0
  %122 = vmatpush1.msra.mxu0 0.0
  %123 = vmatprep.subr.mxu0 0.0
  %124 = vmatpush1.msra.mxu0 0.0
  %125 = vmatprep.subr.mxu0 0.0
  %126 = vmatpush1.msra.mxu0 0.0
  %127 = vmatprep.subr.mxu0 0.0
  %128 = vmatpush1.msra.mxu0 0.0
  %129 = vmatprep.subr.mxu0 0.0
  %130 = vmatpush1.msra.mxu0 0.0
  %131 = vmatprep.subr.mxu0 0.0
  %132 = vmatpush1.msra.mxu0 0.0
  %133 = vmatprep.subr.mxu0 0.0
  %134 = vmatpush1.msra.mxu0 0.0
  %135 = vmatprep.subr.mxu0 0.0
  %136 = vmatpush1.msra.mxu0 0.0
  %137 = vmatprep.mubr.f32.mxu0 0.0
  %v138 = vand.u32 %v36, 4294901760
  %v139 = vsub.f32 %v36, %v138
  %v140 = vand.u32 %v139, 4294901760
  %v141 = vsub.f32 %v139, %v140
  %v142 = vand.u32 %v141, 4294901760
  %143 = vmatmul.mubr.f32.gmra.mrb[0].mxu0 %v142
  %v144 = vpop.f32.mrb[0].mxu0
  %v145 = vadd.f32 0.0, %v144
  %v146 = vpop.f32.mrb[0].mxu0
  %147 = vmatprep.mubr.f32.mxu0 0.0
  %v148 = vand.u32 %v37, 4294901760
  %v149 = vsub.f32 %v37, %v148
  %v150 = vand.u32 %v149, 4294901760
  %v151 = vsub.f32 %v149, %v150
  %v152 = vand.u32 %v151, 4294901760
  %153 = vmatmul.mubr.f32.gmra.mrb[0].mxu0 %v152
  %v154 = vpop.f32.mrb[0].mxu0
  %v155 = vadd.f32 0.0, %v154
  %v156 = vpop.f32.mrb[0].mxu0
  %157 = vmatprep.mubr.f32.mxu0 0.0
  %v158 = vand.u32 %v38, 4294901760
  %v159 = vsub.f32 %v38, %v158
  %v160 = vand.u32 %v159, 4294901760
  %v161 = vsub.f32 %v159, %v160
  %v162 = vand.u32 %v161, 4294901760
  %163 = vmatmul.mubr.f32.gmra.mrb[0].mxu0 %v162
  %v164 = vpop.f32.mrb[0].mxu0
  %v165 = vadd.f32 0.0, %v164
  %v166 = vpop.f32.mrb[0].mxu0
  %167 = vmatprep.mubr.f32.mxu0 0.0
  %v168 = vand.u32 %v39, 4294901760
  %v169 = vsub.f32 %v39, %v168
  %v170 = vand.u32 %v169, 4294901760
  %v171 = vsub.f32 %v169, %v170
  %v172 = vand.u32 %v171, 4294901760
  %173 = vmatmul.mubr.f32.gmra.mrb[0].mxu0 %v172
  %v174 = vpop.f32.mrb[0].mxu0
  %v175 = vadd.f32 0.0, %v174
  %v176 = vpop.f32.mrb[0].mxu0
  %177 = vdwg.mxu0
  %178 = vmatprep.subr.mxu0 0.0
  %v179 = vand.u32 %v41, 4294901760
  %v180 = vsub.f32 %v41, %v179
  %v181 = vand.u32 %v180, 4294901760
  %v182 = vsub.f32 %v180, %v181
  %v183 = vand.u32 %v182, 4294901760
  %184 = vmatpush1.msra.mxu0 %v183
  %185 = vmatprep.subr.mxu0 0.0
  %v186 = vand.u32 %v42, 4294901760
  %v187 = vsub.f32 %v42, %v186
  %v188 = vand.u32 %v187, 4294901760
  %v189 = vsub.f32 %v187, %v188
  %v190 = vand.u32 %v189, 4294901760
  %191 = vmatpush1.msra.mxu0 %v190
  %192 = vmatprep.subr.mxu0 0.0
  %v193 = vand.u32 %v43, 4294901760
  %v194 = vsub.f32 %v43, %v193
  %v195 = vand.u32 %v194, 4294901760
  %v196 = vsub.f32 %v194, %v195
  %v197 = vand.u32 %v196, 4294901760
  %198 = vmatpush1.msra.mxu0 %v197
  %199 = vmatprep.subr.mxu0 0.0
  %v200 = vand.u32 %v44, 4294901760
  %v201 = vsub.f32 %v44, %v200
  %v202 = vand.u32 %v201, 4294901760
  %v203 = vsub.f32 %v201, %v202
  %v204 = vand.u32 %v203, 4294901760
  %205 = vmatpush1.msra.mxu0 %v204
  %206 = vmatprep.subr.mxu0 0.0
  %v207 = vand.u32 %v45, 4294901760
  %v208 = vsub.f32 %v45, %v207
  %v209 = vand.u32 %v208, 4294901760
  %v210 = vsub.f32 %v208, %v209
  %v211 = vand.u32 %v210, 4294901760
  %212 = vmatpush1.msra.mxu0 %v211
  %213 = vmatprep.subr.mxu0 0.0
  %v214 = vand.u32 %v46, 4294901760
  %v215 = vsub.f32 %v46, %v214
  %v216 = vand.u32 %v215, 4294901760
  %v217 = vsub.f32 %v215, %v216
  %v218 = vand.u32 %v217, 4294901760
  %219 = vmatpush1.msra.mxu0 %v218
  %220 = vmatprep.subr.mxu0 0.0
  %v221 = vand.u32 %v47, 4294901760
  %v222 = vsub.f32 %v47, %v221
  %v223 = vand.u32 %v222, 4294901760
  %v224 = vsub.f32 %v222, %v223
  %v225 = vand.u32 %v224, 4294901760
  %226 = vmatpush1.msra.mxu0 %v225
  %227 = vmatprep.subr.mxu0 0.0
  %v228 = vand.u32 %v48, 4294901760
  %v229 = vsub.f32 %v48, %v228
  %v230 = vand.u32 %v229, 4294901760
  %v231 = vsub.f32 %v229, %v230
  %v232 = vand.u32 %v231, 4294901760
  %233 = vmatpush1.msra.mxu0 %v232
  %234 = vmatprep.subr.mxu0 0.0
  %v235 = vand.u32 %v49, 4294901760
  %v236 = vsub.f32 %v49, %v235
  %v237 = vand.u32 %v236, 4294901760
  %v238 = vsub.f32 %v236, %v237
  %v239 = vand.u32 %v238, 4294901760
  %240 = vmatpush1.msra.mxu0 %v239
  %241 = vmatprep.subr.mxu0 0.0
  %v242 = vand.u32 %v50, 4294901760
  %v243 = vsub.f32 %v50, %v242
  %v244 = vand.u32 %v243, 4294901760
  %v245 = vsub.f32 %v243, %v244
  %v246 = vand.u32 %v245, 4294901760
  %247 = vmatpush1.msra.mxu0 %v246
  %248 = vmatprep.subr.mxu0 0.0
  %v249 = vand.u32 %v51, 4294901760
  %v250 = vsub.f32 %v51, %v249
  %v251 = vand.u32 %v250, 4294901760
  %v252 = vsub.f32 %v250, %v251
  %v253 = vand.u32 %v252, 4294901760
  %254 = vmatpush1.msra.mxu0 %v253
  %255 = vmatprep.subr.mxu0 0.0
  %v256 = vand.u32 %v52, 4294901760
  %v257 = vsub.f32 %v52, %v256
  %v258 = vand.u32 %v257, 4294901760
  %v259 = vsub.f32 %v257, %v258
  %v260 = vand.u32 %v259, 4294901760
  %261 = vmatpush1.msra.mxu0 %v260
  %262 = vmatprep.subr.mxu0 0.0
  %v263 = vand.u32 %v53, 4294901760
  %v264 = vsub.f32 %v53, %v263
  %v265 = vand.u32 %v264, 4294901760
  %v266 = vsub.f32 %v264, %v265
  %v267 = vand.u32 %v266, 4294901760
  %268 = vmatpush1.msra.mxu0 %v267
  %269 = vmatprep.subr.mxu0 0.0
  %v270 = vand.u32 %v54, 4294901760
  %v271 = vsub.f32 %v54, %v270
  %v272 = vand.u32 %v271, 4294901760
  %v273 = vsub.f32 %v271, %v272
  %v274 = vand.u32 %v273, 4294901760
  %275 = vmatpush1.msra.mxu0 %v274
  %276 = vmatprep.subr.mxu0 0.0
  %v277 = vand.u32 %v55, 4294901760
  %v278 = vsub.f32 %v55, %v277
  %v279 = vand.u32 %v278, 4294901760
  %v280 = vsub.f32 %v278, %v279
  %v281 = vand.u32 %v280, 4294901760
  %282 = vmatpush1.msra.mxu0 %v281
  %283 = vmatprep.subr.mxu0 0.0
  %v284 = vand.u32 %v56, 4294901760
  %v285 = vsub.f32 %v56, %v284
  %v286 = vand.u32 %v285, 4294901760
  %v287 = vsub.f32 %v285, %v286
  %v288 = vand.u32 %v287, 4294901760
  %289 = vmatpush1.msra.mxu0 %v288
  %290 = vmatprep.subr.mxu0 0.0
  %291 = vmatpush1.msra.mxu0 0.0
  %292 = vmatprep.subr.mxu0 0.0
  %293 = vmatpush1.msra.mxu0 0.0
  %294 = vmatprep.subr.mxu0 0.0
  %295 = vmatpush1.msra.mxu0 0.0
  %296 = vmatprep.subr.mxu0 0.0
  %297 = vmatpush1.msra.mxu0 0.0
  %298 = vmatprep.subr.mxu0 0.0
  %299 = vmatpush1.msra.mxu0 0.0
  %300 = vmatprep.subr.mxu0 0.0
  %301 = vmatpush1.msra.mxu0 0.0
  %302 = vmatprep.subr.mxu0 0.0
  %303 = vmatpush1.msra.mxu0 0.0
  %304 = vmatprep.subr.mxu0 0.0
  %305 = vmatpush1.msra.mxu0 0.0
  %306 = vmatprep.subr.mxu0 0.0
  %307 = vmatpush1.msra.mxu0 0.0
  %308 = vmatprep.subr.mxu0 0.0
  %309 = vmatpush1.msra.mxu0 0.0
  %310 = vmatprep.subr.mxu0 0.0
  %311 = vmatpush1.msra.mxu0 0.0
  %312 = vmatprep.subr.mxu0 0.0
  %313 = vmatpush1.msra.mxu0 0.0
  %314 = vmatprep.subr.mxu0 0.0
  %315 = vmatpush1.msra.mxu0 0.0
  %316 = vmatprep.subr.mxu0 0.0
  %317 = vmatpush1.msra.mxu0 0.0
  %318 = vmatprep.subr.mxu0 0.0
  %319 = vmatpush1.msra.mxu0 0.0
  %320 = vmatprep.subr.mxu0 0.0
  %321 = vmatpush1.msra.mxu0 0.0
  %322 = vmatprep.mubr.f32.mxu0 0.0
  %v323 = vand.u32 %v36, 4294901760
  %324 = vmatmul.mubr.f32.gmra.mrb[0].mxu0 %v323
  %v325 = vpop.f32.mrb[0].mxu0
  %v326 = vadd.f32 %v145, %v325
  %v327 = vpop.f32.mrb[0].mxu0
  %328 = vmatprep.mubr.f32.mxu0 0.0
  %v329 = vand.u32 %v37, 4294901760
  %330 = vmatmul.mubr.f32.gmra.mrb[0].mxu0 %v329
  %v331 = vpop.f32.mrb[0].mxu0
  %v332 = vadd.f32 %v155, %v331
  %v333 = vpop.f32.mrb[0].mxu0
  %334 = vmatprep.mubr.f32.mxu0 0.0
  %v335 = vand.u32 %v38, 4294901760
  %336 = vmatmul.mubr.f32.gmra.mrb[0].mxu0 %v335
  %v337 = vpop.f32.mrb[0].mxu0
  %v338 = vadd.f32 %v165, %v337
  %v339 = vpop.f32.mrb[0].mxu0
  %340 = vmatprep.mubr.f32.mxu0 0.0
  %v341 = vand.u32 %v39, 4294901760
  %342 = vmatmul.mubr.f32.gmra.mrb[0].mxu0 %v341
  %v343 = vpop.f32.mrb[0].mxu0
  %v344 = vadd.f32 %v175, %v343
  %v345 = vpop.f32.mrb[0].mxu0
  %346 = vdwg.mxu0
  %347 = vmatprep.subr.mxu0 0.0
  %v348 = vand.u32 %v41, 4294901760
  %v349 = vsub.f32 %v41, %v348
  %350 = vmatpush1.msra.mxu0 %v349
  %351 = vmatprep.subr.mxu0 0.0
  %v352 = vand.u32 %v42, 4294901760
  %v353 = vsub.f32 %v42, %v352
  %354 = vmatpush1.msra.mxu0 %v353
  %355 = vmatprep.subr.mxu0 0.0
  %v356 = vand.u32 %v43, 4294901760
  %v357 = vsub.f32 %v43, %v356
  %358 = vmatpush1.msra.mxu0 %v357
  %359 = vmatprep.subr.mxu0 0.0
  %v360 = vand.u32 %v44, 4294901760
  %v361 = vsub.f32 %v44, %v360
  %362 = vmatpush1.msra.mxu0 %v361
  %363 = vmatprep.subr.mxu0 0.0
  %v364 = vand.u32 %v45, 4294901760
  %v365 = vsub.f32 %v45, %v364
  %366 = vmatpush1.msra.mxu0 %v365
  %367 = vmatprep.subr.mxu0 0.0
  %v368 = vand.u32 %v46, 4294901760
  %v369 = vsub.f32 %v46, %v368
  %370 = vmatpush1.msra.mxu0 %v369
  %371 = vmatprep.subr.mxu0 0.0
  %v372 = vand.u32 %v47, 4294901760
  %v373 = vsub.f32 %v47, %v372
  %374 = vmatpush1.msra.mxu0 %v373
  %375 = vmatprep.subr.mxu0 0.0
  %v376 = vand.u32 %v48, 4294901760
  %v377 = vsub.f32 %v48, %v376
  %378 = vmatpush1.msra.mxu0 %v377
  %379 = vmatprep.subr.mxu0 0.0
  %v380 = vand.u32 %v49, 4294901760
  %v381 = vsub.f32 %v49, %v380
  %382 = vmatpush1.msra.mxu0 %v381
  %383 = vmatprep.subr.mxu0 0.0
  %v384 = vand.u32 %v50, 4294901760
  %v385 = vsub.f32 %v50, %v384
  %386 = vmatpush1.msra.mxu0 %v385
  %387 = vmatprep.subr.mxu0 0.0
  %v388 = vand.u32 %v51, 4294901760
  %v389 = vsub.f32 %v51, %v388
  %390 = vmatpush1.msra.mxu0 %v389
  %391 = vmatprep.subr.mxu0 0.0
  %v392 = vand.u32 %v52, 4294901760
  %v393 = vsub.f32 %v52, %v392
  %394 = vmatpush1.msra.mxu0 %v393
  %395 = vmatprep.subr.mxu0 0.0
  %v396 = vand.u32 %v53, 4294901760
  %v397 = vsub.f32 %v53, %v396
  %398 = vmatpush1.msra.mxu0 %v397
  %399 = vmatprep.subr.mxu0 0.0
  %v400 = vand.u32 %v54, 4294901760
  %v401 = vsub.f32 %v54, %v400
  %402 = vmatpush1.msra.mxu0 %v401
  %403 = vmatprep.subr.mxu0 0.0
  %v404 = vand.u32 %v55, 4294901760
  %v405 = vsub.f32 %v55, %v404
  %406 = vmatpush1.msra.mxu0 %v405
  %407 = vmatprep.subr.mxu0 0.0
  %v408 = vand.u32 %v56, 4294901760
  %v409 = vsub.f32 %v56, %v408
  %410 = vmatpush1.msra.mxu0 %v409
  %411 = vmatprep.subr.mxu0 0.0
  %412 = vmatpush1.msra.mxu0 0.0
  %413 = vmatprep.subr.mxu0 0.0
  %414 = vmatpush1.msra.mxu0 0.0
  %415 = vmatprep.subr.mxu0 0.0
  %416 = vmatpush1.msra.mxu0 0.0
  %417 = vmatprep.subr.mxu0 0.0
  %418 = vmatpush1.msra.mxu0 0.0
  %419 = vmatprep.subr.mxu0 0.0
  %420 = vmatpush1.msra.mxu0 0.0
  %421 = vmatprep.subr.mxu0 0.0
  %422 = vmatpush1.msra.mxu0 0.0
  %423 = vmatprep.subr.mxu0 0.0
  %424 = vmatpush1.msra.mxu0 0.0
  %425 = vmatprep.subr.mxu0 0.0
  %426 = vmatpush1.msra.mxu0 0.0
  %427 = vmatprep.subr.mxu0 0.0
  %428 = vmatpush1.msra.mxu0 0.0
  %429 = vmatprep.subr.mxu0 0.0
  %430 = vmatpush1.msra.mxu0 0.0
  %431 = vmatprep.subr.mxu0 0.0
  %432 = vmatpush1.msra.mxu0 0.0
  %433 = vmatprep.subr.mxu0 0.0
  %434 = vmatpush1.msra.mxu0 0.0
  %435 = vmatprep.subr.mxu0 0.0
  %436 = vmatpush1.msra.mxu0 0.0
  %437 = vmatprep.subr.mxu0 0.0
  %438 = vmatpush1.msra.mxu0 0.0
  %439 = vmatprep.subr.mxu0 0.0
  %440 = vmatpush1.msra.mxu0 0.0
  %441 = vmatprep.subr.mxu0 0.0
  %442 = vmatpush1.msra.mxu0 0.0
  %443 = vmatprep.mubr.f32.mxu0 0.0
  %v444 = vand.u32 %v36, 4294901760
  %v445 = vsub.f32 %v36, %v444
  %446 = vmatmul.mubr.f32.gmra.mrb[0].mxu0 %v445
  %v447 = vpop.f32.mrb[0].mxu0
  %v448 = vadd.f32 %v326, %v447
  %v449 = vpop.f32.mrb[0].mxu0
  %450 = vmatprep.mubr.f32.mxu0 0.0
  %v451 = vand.u32 %v37, 4294901760
  %v452 = vsub.f32 %v37, %v451
  %453 = vmatmul.mubr.f32.gmra.mrb[0].mxu0 %v452
  %v454 = vpop.f32.mrb[0].mxu0
  %v455 = vadd.f32 %v332, %v454
  %v456 = vpop.f32.mrb[0].mxu0
  %457 = vmatprep.mubr.f32.mxu0 0.0
  %v458 = vand.u32 %v38, 4294901760
  %v459 = vsub.f32 %v38, %v458
  %460 = vmatmul.mubr.f32.gmra.mrb[0].mxu0 %v459
  %v461 = vpop.f32.mrb[0].mxu0
  %v462 = vadd.f32 %v338, %v461
  %v463 = vpop.f32.mrb[0].mxu0
  %464 = vmatprep.mubr.f32.mxu0 0.0
  %v465 = vand.u32 %v39, 4294901760
  %v466 = vsub.f32 %v39, %v465
  %467 = vmatmul.mubr.f32.gmra.mrb[0].mxu0 %v466
  %v468 = vpop.f32.mrb[0].mxu0
  %v469 = vadd.f32 %v344, %v468
  %v470 = vpop.f32.mrb[0].mxu0
  %471 = vdwg.mxu0
  %472 = vmatprep.subr.mxu0 0.0
  %v473 = vand.u32 %v41, 4294901760
  %474 = vmatpush1.msra.mxu0 %v473
  %475 = vmatprep.subr.mxu0 0.0
  %v476 = vand.u32 %v42, 4294901760
  %477 = vmatpush1.msra.mxu0 %v476
  %478 = vmatprep.subr.mxu0 0.0
  %v479 = vand.u32 %v43, 4294901760
  %480 = vmatpush1.msra.mxu0 %v479
  %481 = vmatprep.subr.mxu0 0.0
  %v482 = vand.u32 %v44, 4294901760
  %483 = vmatpush1.msra.mxu0 %v482
  %484 = vmatprep.subr.mxu0 0.0
  %v485 = vand.u32 %v45, 4294901760
  %486 = vmatpush1.msra.mxu0 %v485
  %487 = vmatprep.subr.mxu0 0.0
  %v488 = vand.u32 %v46, 4294901760
  %489 = vmatpush1.msra.mxu0 %v488
  %490 = vmatprep.subr.mxu0 0.0
  %v491 = vand.u32 %v47, 4294901760
  %492 = vmatpush1.msra.mxu0 %v491
  %493 = vmatprep.subr.mxu0 0.0
  %v494 = vand.u32 %v48, 4294901760
  %495 = vmatpush1.msra.mxu0 %v494
  %496 = vmatprep.subr.mxu0 0.0
  %v497 = vand.u32 %v49, 4294901760
  %498 = vmatpush1.msra.mxu0 %v497
  %499 = vmatprep.subr.mxu0 0.0
  %v500 = vand.u32 %v50, 4294901760
  %501 = vmatpush1.msra.mxu0 %v500
  %502 = vmatprep.subr.mxu0 0.0
  %v503 = vand.u32 %v51, 4294901760
  %504 = vmatpush1.msra.mxu0 %v503
  %505 = vmatprep.subr.mxu0 0.0
  %v506 = vand.u32 %v52, 4294901760
  %507 = vmatpush1.msra.mxu0 %v506
  %508 = vmatprep.subr.mxu0 0.0
  %v509 = vand.u32 %v53, 4294901760
  %510 = vmatpush1.msra.mxu0 %v509
  %511 = vmatprep.subr.mxu0 0.0
  %v512 = vand.u32 %v54, 4294901760
  %513 = vmatpush1.msra.mxu0 %v512
  %514 = vmatprep.subr.mxu0 0.0
  %v515 = vand.u32 %v55, 4294901760
  %516 = vmatpush1.msra.mxu0 %v515
  %517 = vmatprep.subr.mxu0 0.0
  %v518 = vand.u32 %v56, 4294901760
  %519 = vmatpush1.msra.mxu0 %v518
  %520 = vmatprep.subr.mxu0 0.0
  %521 = vmatpush1.msra.mxu0 0.0
  %522 = vmatprep.subr.mxu0 0.0
  %523 = vmatpush1.msra.mxu0 0.0
  %524 = vmatprep.subr.mxu0 0.0
  %525 = vmatpush1.msra.mxu0 0.0
  %526 = vmatprep.subr.mxu0 0.0
  %527 = vmatpush1.msra.mxu0 0.0
  %528 = vmatprep.subr.mxu0 0.0
  %529 = vmatpush1.msra.mxu0 0.0
  %530 = vmatprep.subr.mxu0 0.0
  %531 = vmatpush1.msra.mxu0 0.0
  %532 = vmatprep.subr.mxu0 0.0
  %533 = vmatpush1.msra.mxu0 0.0
  %534 = vmatprep.subr.mxu0 0.0
  %535 = vmatpush1.msra.mxu0 0.0
  %536 = vmatprep.subr.mxu0 0.0
  %537 = vmatpush1.msra.mxu0 0.0
  %538 = vmatprep.subr.mxu0 0.0
  %539 = vmatpush1.msra.mxu0 0.0
  %540 = vmatprep.subr.mxu0 0.0
  %541 = vmatpush1.msra.mxu0 0.0
  %542 = vmatprep.subr.mxu0 0.0
  %543 = vmatpush1.msra.mxu0 0.0
  %544 = vmatprep.subr.mxu0 0.0
  %545 = vmatpush1.msra.mxu0 0.0
  %546 = vmatprep.subr.mxu0 0.0
  %547 = vmatpush1.msra.mxu0 0.0
  %548 = vmatprep.subr.mxu0 0.0
  %549 = vmatpush1.msra.mxu0 0.0
  %550 = vmatprep.subr.mxu0 0.0
  %551 = vmatpush1.msra.mxu0 0.0
  %552 = vmatprep.mubr.f32.mxu0 0.0
  %v553 = vand.u32 %v36, 4294901760
  %v554 = vsub.f32 %v36, %v553
  %v555 = vand.u32 %v554, 4294901760
  %556 = vmatmul.mubr.f32.gmra.mrb[0].mxu0 %v555
  %v557 = vpop.f32.mrb[0].mxu0
  %v558 = vadd.f32 %v448, %v557
  %v559 = vpop.f32.mrb[0].mxu0
  %560 = vmatprep.mubr.f32.mxu0 0.0
  %v561 = vand.u32 %v37, 4294901760
  %v562 = vsub.f32 %v37, %v561
  %v563 = vand.u32 %v562, 4294901760
  %564 = vmatmul.mubr.f32.gmra.mrb[0].mxu0 %v563
  %v565 = vpop.f32.mrb[0].mxu0
  %v566 = vadd.f32 %v455, %v565
  %v567 = vpop.f32.mrb[0].mxu0
  %568 = vmatprep.mubr.f32.mxu0 0.0
  %v569 = vand.u32 %v38, 4294901760
  %v570 = vsub.f32 %v38, %v569
  %v571 = vand.u32 %v570, 4294901760
  %572 = vmatmul.mubr.f32.gmra.mrb[0].mxu0 %v571
  %v573 = vpop.f32.mrb[0].mxu0
  %v574 = vadd.f32 %v462, %v573
  %v575 = vpop.f32.mrb[0].mxu0
  %576 = vmatprep.mubr.f32.mxu0 0.0
  %v577 = vand.u32 %v39, 4294901760
  %v578 = vsub.f32 %v39, %v577
  %v579 = vand.u32 %v578, 4294901760
  %580 = vmatmul.mubr.f32.gmra.mrb[0].mxu0 %v579
  %v581 = vpop.f32.mrb[0].mxu0
  %v582 = vadd.f32 %v469, %v581
  %v583 = vpop.f32.mrb[0].mxu0
  %584 = vdwg.mxu0
  %585 = vmatprep.subr.mxu0 0.0
  %v586 = vand.u32 %v41, 4294901760
  %v587 = vsub.f32 %v41, %v586
  %v588 = vand.u32 %v587, 4294901760
  %589 = vmatpush1.msra.mxu0 %v588
  %590 = vmatprep.subr.mxu0 0.0
  %v591 = vand.u32 %v42, 4294901760
  %v592 = vsub.f32 %v42, %v591
  %v593 = vand.u32 %v592, 4294901760
  %594 = vmatpush1.msra.mxu0 %v593
  %595 = vmatprep.subr.mxu0 0.0
  %v596 = vand.u32 %v43, 4294901760
  %v597 = vsub.f32 %v43, %v596
  %v598 = vand.u32 %v597, 4294901760
  %599 = vmatpush1.msra.mxu0 %v598
  %600 = vmatprep.subr.mxu0 0.0
  %v601 = vand.u32 %v44, 4294901760
  %v602 = vsub.f32 %v44, %v601
  %v603 = vand.u32 %v602, 4294901760
  %604 = vmatpush1.msra.mxu0 %v603
  %605 = vmatprep.subr.mxu0 0.0
  %v606 = vand.u32 %v45, 4294901760
  %v607 = vsub.f32 %v45, %v606
  %v608 = vand.u32 %v607, 4294901760
  %609 = vmatpush1.msra.mxu0 %v608
  %610 = vmatprep.subr.mxu0 0.0
  %v611 = vand.u32 %v46, 4294901760
  %v612 = vsub.f32 %v46, %v611
  %v613 = vand.u32 %v612, 4294901760
  %614 = vmatpush1.msra.mxu0 %v613
  %615 = vmatprep.subr.mxu0 0.0
  %v616 = vand.u32 %v47, 4294901760
  %v617 = vsub.f32 %v47, %v616
  %v618 = vand.u32 %v617, 4294901760
  %619 = vmatpush1.msra.mxu0 %v618
  %620 = vmatprep.subr.mxu0 0.0
  %v621 = vand.u32 %v48, 4294901760
  %v622 = vsub.f32 %v48, %v621
  %v623 = vand.u32 %v622, 4294901760
  %624 = vmatpush1.msra.mxu0 %v623
  %625 = vmatprep.subr.mxu0 0.0
  %v626 = vand.u32 %v49, 4294901760
  %v627 = vsub.f32 %v49, %v626
  %v628 = vand.u32 %v627, 4294901760
  %629 = vmatpush1.msra.mxu0 %v628
  %630 = vmatprep.subr.mxu0 0.0
  %v631 = vand.u32 %v50, 4294901760
  %v632 = vsub.f32 %v50, %v631
  %v633 = vand.u32 %v632, 4294901760
  %634 = vmatpush1.msra.mxu0 %v633
  %635 = vmatprep.subr.mxu0 0.0
  %v636 = vand.u32 %v51, 4294901760
  %v637 = vsub.f32 %v51, %v636
  %v638 = vand.u32 %v637, 4294901760
  %639 = vmatpush1.msra.mxu0 %v638
  %640 = vmatprep.subr.mxu0 0.0
  %v641 = vand.u32 %v52, 4294901760
  %v642 = vsub.f32 %v52, %v641
  %v643 = vand.u32 %v642, 4294901760
  %644 = vmatpush1.msra.mxu0 %v643
  %645 = vmatprep.subr.mxu0 0.0
  %v646 = vand.u32 %v53, 4294901760
  %v647 = vsub.f32 %v53, %v646
  %v648 = vand.u32 %v647, 4294901760
  %649 = vmatpush1.msra.mxu0 %v648
  %650 = vmatprep.subr.mxu0 0.0
  %v651 = vand.u32 %v54, 4294901760
  %v652 = vsub.f32 %v54, %v651
  %v653 = vand.u32 %v652, 4294901760
  %654 = vmatpush1.msra.mxu0 %v653
  %655 = vmatprep.subr.mxu0 0.0
  %v656 = vand.u32 %v55, 4294901760
  %v657 = vsub.f32 %v55, %v656
  %v658 = vand.u32 %v657, 4294901760
  %659 = vmatpush1.msra.mxu0 %v658
  %660 = vmatprep.subr.mxu0 0.0
  %v661 = vand.u32 %v56, 4294901760
  %v662 = vsub.f32 %v56, %v661
  %v663 = vand.u32 %v662, 4294901760
  %664 = vmatpush1.msra.mxu0 %v663
  %665 = vmatprep.subr.mxu0 0.0
  %666 = vmatpush1.msra.mxu0 0.0
  %667 = vmatprep.subr.mxu0 0.0
  %668 = vmatpush1.msra.mxu0 0.0
  %669 = vmatprep.subr.mxu0 0.0
  %670 = vmatpush1.msra.mxu0 0.0
  %671 = vmatprep.subr.mxu0 0.0
  %672 = vmatpush1.msra.mxu0 0.0
  %673 = vmatprep.subr.mxu0 0.0
  %674 = vmatpush1.msra.mxu0 0.0
  %675 = vmatprep.subr.mxu0 0.0
  %676 = vmatpush1.msra.mxu0 0.0
  %677 = vmatprep.subr.mxu0 0.0
  %678 = vmatpush1.msra.mxu0 0.0
  %679 = vmatprep.subr.mxu0 0.0
  %680 = vmatpush1.msra.mxu0 0.0
  %681 = vmatprep.subr.mxu0 0.0
  %682 = vmatpush1.msra.mxu0 0.0
  %683 = vmatprep.subr.mxu0 0.0
  %684 = vmatpush1.msra.mxu0 0.0
  %685 = vmatprep.subr.mxu0 0.0
  %686 = vmatpush1.msra.mxu0 0.0
  %687 = vmatprep.subr.mxu0 0.0
  %688 = vmatpush1.msra.mxu0 0.0
  %689 = vmatprep.subr.mxu0 0.0
  %690 = vmatpush1.msra.mxu0 0.0
  %691 = vmatprep.subr.mxu0 0.0
  %692 = vmatpush1.msra.mxu0 0.0
  %693 = vmatprep.subr.mxu0 0.0
  %694 = vmatpush1.msra.mxu0 0.0
  %695 = vmatprep.subr.mxu0 0.0
  %696 = vmatpush1.msra.mxu0 0.0
  %697 = vmatprep.mubr.f32.mxu0 0.0
  %v698 = vand.u32 %v36, 4294901760
  %699 = vmatmul.mubr.f32.gmra.mrb[0].mxu0 %v698
  %v700 = vpop.f32.mrb[0].mxu0
  %v701 = vadd.f32 %v558, %v700
  %v702 = vpop.f32.mrb[0].mxu0
  %703 = vmatprep.mubr.f32.mxu0 0.0
  %v704 = vand.u32 %v37, 4294901760
  %705 = vmatmul.mubr.f32.gmra.mrb[0].mxu0 %v704
  %v706 = vpop.f32.mrb[0].mxu0
  %v707 = vadd.f32 %v566, %v706
  %v708 = vpop.f32.mrb[0].mxu0
  %709 = vmatprep.mubr.f32.mxu0 0.0
  %v710 = vand.u32 %v38, 4294901760
  %711 = vmatmul.mubr.f32.gmra.mrb[0].mxu0 %v710
  %v712 = vpop.f32.mrb[0].mxu0
  %v713 = vadd.f32 %v574, %v712
  %v714 = vpop.f32.mrb[0].mxu0
  %715 = vmatprep.mubr.f32.mxu0 0.0
  %v716 = vand.u32 %v39, 4294901760
  %717 = vmatmul.mubr.f32.gmra.mrb[0].mxu0 %v716
  %v718 = vpop.f32.mrb[0].mxu0
  %v719 = vadd.f32 %v582, %v718
  %v720 = vpop.f32.mrb[0].mxu0
  %721 = vdwg.mxu0
  %722 = vmatprep.subr.mxu0 0.0
  %v723 = vand.u32 %v41, 4294901760
  %724 = vmatpush1.msra.mxu0 %v723
  %725 = vmatprep.subr.mxu0 0.0
  %v726 = vand.u32 %v42, 4294901760
  %727 = vmatpush1.msra.mxu0 %v726
  %728 = vmatprep.subr.mxu0 0.0
  %v729 = vand.u32 %v43, 4294901760
  %730 = vmatpush1.msra.mxu0 %v729
  %731 = vmatprep.subr.mxu0 0.0
  %v732 = vand.u32 %v44, 4294901760
  %733 = vmatpush1.msra.mxu0 %v732
  %734 = vmatprep.subr.mxu0 0.0
  %v735 = vand.u32 %v45, 4294901760
  %736 = vmatpush1.msra.mxu0 %v735
  %737 = vmatprep.subr.mxu0 0.0
  %v738 = vand.u32 %v46, 4294901760
  %739 = vmatpush1.msra.mxu0 %v738
  %740 = vmatprep.subr.mxu0 0.0
  %v741 = vand.u32 %v47, 4294901760
  %742 = vmatpush1.msra.mxu0 %v741
  %743 = vmatprep.subr.mxu0 0.0
  %v744 = vand.u32 %v48, 4294901760
  %745 = vmatpush1.msra.mxu0 %v744
  %746 = vmatprep.subr.mxu0 0.0
  %v747 = vand.u32 %v49, 4294901760
  %748 = vmatpush1.msra.mxu0 %v747
  %749 = vmatprep.subr.mxu0 0.0
  %v750 = vand.u32 %v50, 4294901760
  %751 = vmatpush1.msra.mxu0 %v750
  %752 = vmatprep.subr.mxu0 0.0
  %v753 = vand.u32 %v51, 4294901760
  %754 = vmatpush1.msra.mxu0 %v753
  %755 = vmatprep.subr.mxu0 0.0
  %v756 = vand.u32 %v52, 4294901760
  %757 = vmatpush1.msra.mxu0 %v756
  %758 = vmatprep.subr.mxu0 0.0
  %v759 = vand.u32 %v53, 4294901760
  %760 = vmatpush1.msra.mxu0 %v759
  %761 = vmatprep.subr.mxu0 0.0
  %v762 = vand.u32 %v54, 4294901760
  %763 = vmatpush1.msra.mxu0 %v762
  %764 = vmatprep.subr.mxu0 0.0
  %v765 = vand.u32 %v55, 4294901760
  %766 = vmatpush1.msra.mxu0 %v765
  %767 = vmatprep.subr.mxu0 0.0
  %v768 = vand.u32 %v56, 4294901760
  %769 = vmatpush1.msra.mxu0 %v768
  %770 = vmatprep.subr.mxu0 0.0
  %771 = vmatpush1.msra.mxu0 0.0
  %772 = vmatprep.subr.mxu0 0.0
  %773 = vmatpush1.msra.mxu0 0.0
  %774 = vmatprep.subr.mxu0 0.0
  %775 = vmatpush1.msra.mxu0 0.0
  %776 = vmatprep.subr.mxu0 0.0
  %777 = vmatpush1.msra.mxu0 0.0
  %778 = vmatprep.subr.mxu0 0.0
  %779 = vmatpush1.msra.mxu0 0.0
  %780 = vmatprep.subr.mxu0 0.0
  %781 = vmatpush1.msra.mxu0 0.0
  %782 = vmatprep.subr.mxu0 0.0
  %783 = vmatpush1.msra.mxu0 0.0
  %784 = vmatprep.subr.mxu0 0.0
  %785 = vmatpush1.msra.mxu0 0.0
  %786 = vmatprep.subr.mxu0 0.0
  %787 = vmatpush1.msra.mxu0 0.0
  %788 = vmatprep.subr.mxu0 0.0
  %789 = vmatpush1.msra.mxu0 0.0
  %790 = vmatprep.subr.mxu0 0.0
  %791 = vmatpush1.msra.mxu0 0.0
  %792 = vmatprep.subr.mxu0 0.0
  %793 = vmatpush1.msra.mxu0 0.0
  %794 = vmatprep.subr.mxu0 0.0
  %795 = vmatpush1.msra.mxu0 0.0
  %796 = vmatprep.subr.mxu0 0.0
  %797 = vmatpush1.msra.mxu0 0.0
  %798 = vmatprep.subr.mxu0 0.0
  %799 = vmatpush1.msra.mxu0 0.0
  %800 = vmatprep.subr.mxu0 0.0
  %801 = vmatpush1.msra.mxu0 0.0
  %802 = vmatprep.mubr.f32.mxu0 0.0
  %v803 = vand.u32 %v36, 4294901760
  %804 = vmatmul.mubr.f32.gmra.mrb[0].mxu0 %v803
  %v805 = vpop.f32.mrb[0].mxu0
  %v806 = vadd.f32 %v701, %v805
  %v807 = vpop.f32.mrb[0].mxu0
  %808 = vmatprep.mubr.f32.mxu0 0.0
  %v809 = vand.u32 %v37, 4294901760
  %810 = vmatmul.mubr.f32.gmra.mrb[0].mxu0 %v809
  %v811 = vpop.f32.mrb[0].mxu0
  %v812 = vadd.f32 %v707, %v811
  %v813 = vpop.f32.mrb[0].mxu0
  %814 = vmatprep.mubr.f32.mxu0 0.0
  %v815 = vand.u32 %v38, 4294901760
  %816 = vmatmul.mubr.f32.gmra.mrb[0].mxu0 %v815
  %v817 = vpop.f32.mrb[0].mxu0
  %v818 = vadd.f32 %v713, %v817
  %v819 = vpop.f32.mrb[0].mxu0
  %820 = vmatprep.mubr.f32.mxu0 0.0
  %v821 = vand.u32 %v39, 4294901760
  %822 = vmatmul.mubr.f32.gmra.mrb[0].mxu0 %v821
  %v823 = vpop.f32.mrb[0].mxu0
  %v824 = vadd.f32 %v719, %v823
  %v825 = vpop.f32.mrb[0].mxu0
  %826 = vdwg.mxu0
  %827 = vmatprep.subr.mxu0 0.0
  %v828 = vand.u32 %v20, 4294901760
  %829 = vmatpush1.msra.mxu0 %v828
  %830 = vmatprep.subr.mxu0 0.0
  %v831 = vand.u32 %v21, 4294901760
  %832 = vmatpush1.msra.mxu0 %v831
  %833 = vmatprep.subr.mxu0 0.0
  %v834 = vand.u32 %v22, 4294901760
  %835 = vmatpush1.msra.mxu0 %v834
  %836 = vmatprep.subr.mxu0 0.0
  %v837 = vand.u32 %v23, 4294901760
  %838 = vmatpush1.msra.mxu0 %v837
  %839 = vmatprep.subr.mxu0 0.0
  %v840 = vand.u32 %v24, 4294901760
  %841 = vmatpush1.msra.mxu0 %v840
  %842 = vmatprep.subr.mxu0 0.0
  %v843 = vand.u32 %v25, 4294901760
  %844 = vmatpush1.msra.mxu0 %v843
  %845 = vmatprep.subr.mxu0 0.0
  %v846 = vand.u32 %v26, 4294901760
  %847 = vmatpush1.msra.mxu0 %v846
  %848 = vmatprep.subr.mxu0 0.0
  %v849 = vand.u32 %v27, 4294901760
  %850 = vmatpush1.msra.mxu0 %v849
  %851 = vmatprep.subr.mxu0 0.0
  %v852 = vand.u32 %v28, 4294901760
  %853 = vmatpush1.msra.mxu0 %v852
  %854 = vmatprep.subr.mxu0 0.0
  %v855 = vand.u32 %v29, 4294901760
  %856 = vmatpush1.msra.mxu0 %v855
  %857 = vmatprep.subr.mxu0 0.0
  %v858 = vand.u32 %v30, 4294901760
  %859 = vmatpush1.msra.mxu0 %v858
  %860 = vmatprep.subr.mxu0 0.0
  %v861 = vand.u32 %v31, 4294901760
  %862 = vmatpush1.msra.mxu0 %v861
  %863 = vmatprep.subr.mxu0 0.0
  %v864 = vand.u32 %v32, 4294901760
  %865 = vmatpush1.msra.mxu0 %v864
  %866 = vmatprep.subr.mxu0 0.0
  %v867 = vand.u32 %v33, 4294901760
  %868 = vmatpush1.msra.mxu0 %v867
  %869 = vmatprep.subr.mxu0 0.0
  %v870 = vand.u32 %v34, 4294901760
  %871 = vmatpush1.msra.mxu0 %v870
  %872 = vmatprep.subr.mxu0 0.0
  %v873 = vand.u32 %v35, 4294901760
  %874 = vmatpush1.msra.mxu0 %v873
  %875 = vmatprep.subr.mxu0 0.0
  %876 = vmatpush1.msra.mxu0 0.0
  %877 = vmatprep.subr.mxu0 0.0
  %878 = vmatpush1.msra.mxu0 0.0
  %879 = vmatprep.subr.mxu0 0.0
  %880 = vmatpush1.msra.mxu0 0.0
  %881 = vmatprep.subr.mxu0 0.0
  %882 = vmatpush1.msra.mxu0 0.0
  %883 = vmatprep.subr.mxu0 0.0
  %884 = vmatpush1.msra.mxu0 0.0
  %885 = vmatprep.subr.mxu0 0.0
  %886 = vmatpush1.msra.mxu0 0.0
  %887 = vmatprep.subr.mxu0 0.0
  %888 = vmatpush1.msra.mxu0 0.0
  %889 = vmatprep.subr.mxu0 0.0
  %890 = vmatpush1.msra.mxu0 0.0
  %891 = vmatprep.subr.mxu0 0.0
  %892 = vmatpush1.msra.mxu0 0.0
  %893 = vmatprep.subr.mxu0 0.0
  %894 = vmatpush1.msra.mxu0 0.0
  %895 = vmatprep.subr.mxu0 0.0
  %896 = vmatpush1.msra.mxu0 0.0
  %897 = vmatprep.subr.mxu0 0.0
  %898 = vmatpush1.msra.mxu0 0.0
  %899 = vmatprep.subr.mxu0 0.0
  %900 = vmatpush1.msra.mxu0 0.0
  %901 = vmatprep.subr.mxu0 0.0
  %902 = vmatpush1.msra.mxu0 0.0
  %903 = vmatprep.subr.mxu0 0.0
  %904 = vmatpush1.msra.mxu0 0.0
  %905 = vmatprep.subr.mxu0 0.0
  %906 = vmatpush1.msra.mxu0 0.0
  %907 = vmatprep.mubr.f32.mxu0 0.0
  %v908 = vand.u32 %v16, 4294901760
  %v909 = vsub.f32 %v16, %v908
  %v910 = vand.u32 %v909, 4294901760
  %v911 = vsub.f32 %v909, %v910
  %v912 = vand.u32 %v911, 4294901760
  %913 = vmatmul.mubr.f32.gmra.mrb[0].mxu0 %v912
  %v914 = vpop.f32.mrb[0].mxu0
  %v915 = vadd.f32 %v806, %v914
  %v916 = vpop.f32.mrb[0].mxu0
  %917 = vmatprep.mubr.f32.mxu0 0.0
  %v918 = vand.u32 %v17, 4294901760
  %v919 = vsub.f32 %v17, %v918
  %v920 = vand.u32 %v919, 4294901760
  %v921 = vsub.f32 %v919, %v920
  %v922 = vand.u32 %v921, 4294901760
  %923 = vmatmul.mubr.f32.gmra.mrb[0].mxu0 %v922
  %v924 = vpop.f32.mrb[0].mxu0
  %v925 = vadd.f32 %v812, %v924
  %v926 = vpop.f32.mrb[0].mxu0
  %927 = vmatprep.mubr.f32.mxu0 0.0
  %v928 = vand.u32 %v18, 4294901760
  %v929 = vsub.f32 %v18, %v928
  %v930 = vand.u32 %v929, 4294901760
  %v931 = vsub.f32 %v929, %v930
  %v932 = vand.u32 %v931, 4294901760
  %933 = vmatmul.mubr.f32.gmra.mrb[0].mxu0 %v932
  %v934 = vpop.f32.mrb[0].mxu0
  %v935 = vadd.f32 %v818, %v934
  %v936 = vpop.f32.mrb[0].mxu0
  %937 = vmatprep.mubr.f32.mxu0 0.0
  %v938 = vand.u32 %v19, 4294901760
  %v939 = vsub.f32 %v19, %v938
  %v940 = vand.u32 %v939, 4294901760
  %v941 = vsub.f32 %v939, %v940
  %v942 = vand.u32 %v941, 4294901760
  %943 = vmatmul.mubr.f32.gmra.mrb[0].mxu0 %v942
  %v944 = vpop.f32.mrb[0].mxu0
  %v945 = vadd.f32 %v824, %v944
  %v946 = vpop.f32.mrb[0].mxu0
  %947 = vdwg.mxu0
  %948 = vmatprep.subr.mxu0 0.0
  %v949 = vand.u32 %v20, 4294901760
  %v950 = vsub.f32 %v20, %v949
  %v951 = vand.u32 %v950, 4294901760
  %v952 = vsub.f32 %v950, %v951
  %v953 = vand.u32 %v952, 4294901760
  %954 = vmatpush1.msra.mxu0 %v953
  %955 = vmatprep.subr.mxu0 0.0
  %v956 = vand.u32 %v21, 4294901760
  %v957 = vsub.f32 %v21, %v956
  %v958 = vand.u32 %v957, 4294901760
  %v959 = vsub.f32 %v957, %v958
  %v960 = vand.u32 %v959, 4294901760
  %961 = vmatpush1.msra.mxu0 %v960
  %962 = vmatprep.subr.mxu0 0.0
  %v963 = vand.u32 %v22, 4294901760
  %v964 = vsub.f32 %v22, %v963
  %v965 = vand.u32 %v964, 4294901760
  %v966 = vsub.f32 %v964, %v965
  %v967 = vand.u32 %v966, 4294901760
  %968 = vmatpush1.msra.mxu0 %v967
  %969 = vmatprep.subr.mxu0 0.0
  %v970 = vand.u32 %v23, 4294901760
  %v971 = vsub.f32 %v23, %v970
  %v972 = vand.u32 %v971, 4294901760
  %v973 = vsub.f32 %v971, %v972
  %v974 = vand.u32 %v973, 4294901760
  %975 = vmatpush1.msra.mxu0 %v974
  %976 = vmatprep.subr.mxu0 0.0
  %v977 = vand.u32 %v24, 4294901760
  %v978 = vsub.f32 %v24, %v977
  %v979 = vand.u32 %v978, 4294901760
  %v980 = vsub.f32 %v978, %v979
  %v981 = vand.u32 %v980, 4294901760
  %982 = vmatpush1.msra.mxu0 %v981
  %983 = vmatprep.subr.mxu0 0.0
  %v984 = vand.u32 %v25, 4294901760
  %v985 = vsub.f32 %v25, %v984
  %v986 = vand.u32 %v985, 4294901760
  %v987 = vsub.f32 %v985, %v986
  %v988 = vand.u32 %v987, 4294901760
  %989 = vmatpush1.msra.mxu0 %v988
  %990 = vmatprep.subr.mxu0 0.0
  %v991 = vand.u32 %v26, 4294901760
  %v992 = vsub.f32 %v26, %v991
  %v993 = vand.u32 %v992, 4294901760
  %v994 = vsub.f32 %v992, %v993
  %v995 = vand.u32 %v994, 4294901760
  %996 = vmatpush1.msra.mxu0 %v995
  %997 = vmatprep.subr.mxu0 0.0
  %v998 = vand.u32 %v27, 4294901760
  %v999 = vsub.f32 %v27, %v998
  %v1000 = vand.u32 %v999, 4294901760
  %v1001 = vsub.f32 %v999, %v1000
  %v1002 = vand.u32 %v1001, 4294901760
  %1003 = vmatpush1.msra.mxu0 %v1002
  %1004 = vmatprep.subr.mxu0 0.0
  %v1005 = vand.u32 %v28, 4294901760
  %v1006 = vsub.f32 %v28, %v1005
  %v1007 = vand.u32 %v1006, 4294901760
  %v1008 = vsub.f32 %v1006, %v1007
  %v1009 = vand.u32 %v1008, 4294901760
  %1010 = vmatpush1.msra.mxu0 %v1009
  %1011 = vmatprep.subr.mxu0 0.0
  %v1012 = vand.u32 %v29, 4294901760
  %v1013 = vsub.f32 %v29, %v1012
  %v1014 = vand.u32 %v1013, 4294901760
  %v1015 = vsub.f32 %v1013, %v1014
  %v1016 = vand.u32 %v1015, 4294901760
  %1017 = vmatpush1.msra.mxu0 %v1016
  %1018 = vmatprep.subr.mxu0 0.0
  %v1019 = vand.u32 %v30, 4294901760
  %v1020 = vsub.f32 %v30, %v1019
  %v1021 = vand.u32 %v1020, 4294901760
  %v1022 = vsub.f32 %v1020, %v1021
  %v1023 = vand.u32 %v1022, 4294901760
  %1024 = vmatpush1.msra.mxu0 %v1023
  %1025 = vmatprep.subr.mxu0 0.0
  %v1026 = vand.u32 %v31, 4294901760
  %v1027 = vsub.f32 %v31, %v1026
  %v1028 = vand.u32 %v1027, 4294901760
  %v1029 = vsub.f32 %v1027, %v1028
  %v1030 = vand.u32 %v1029, 4294901760
  %1031 = vmatpush1.msra.mxu0 %v1030
  %1032 = vmatprep.subr.mxu0 0.0
  %v1033 = vand.u32 %v32, 4294901760
  %v1034 = vsub.f32 %v32, %v1033
  %v1035 = vand.u32 %v1034, 4294901760
  %v1036 = vsub.f32 %v1034, %v1035
  %v1037 = vand.u32 %v1036, 4294901760
  %1038 = vmatpush1.msra.mxu0 %v1037
  %1039 = vmatprep.subr.mxu0 0.0
  %v1040 = vand.u32 %v33, 4294901760
  %v1041 = vsub.f32 %v33, %v1040
  %v1042 = vand.u32 %v1041, 4294901760
  %v1043 = vsub.f32 %v1041, %v1042
  %v1044 = vand.u32 %v1043, 4294901760
  %1045 = vmatpush1.msra.mxu0 %v1044
  %1046 = vmatprep.subr.mxu0 0.0
  %v1047 = vand.u32 %v34, 4294901760
  %v1048 = vsub.f32 %v34, %v1047
  %v1049 = vand.u32 %v1048, 4294901760
  %v1050 = vsub.f32 %v1048, %v1049
  %v1051 = vand.u32 %v1050, 4294901760
  %1052 = vmatpush1.msra.mxu0 %v1051
  %1053 = vmatprep.subr.mxu0 0.0
  %v1054 = vand.u32 %v35, 4294901760
  %v1055 = vsub.f32 %v35, %v1054
  %v1056 = vand.u32 %v1055, 4294901760
  %v1057 = vsub.f32 %v1055, %v1056
  %v1058 = vand.u32 %v1057, 4294901760
  %1059 = vmatpush1.msra.mxu0 %v1058
  %1060 = vmatprep.subr.mxu0 0.0
  %1061 = vmatpush1.msra.mxu0 0.0
  %1062 = vmatprep.subr.mxu0 0.0
  %1063 = vmatpush1.msra.mxu0 0.0
  %1064 = vmatprep.subr.mxu0 0.0
  %1065 = vmatpush1.msra.mxu0 0.0
  %1066 = vmatprep.subr.mxu0 0.0
  %1067 = vmatpush1.msra.mxu0 0.0
  %1068 = vmatprep.subr.mxu0 0.0
  %1069 = vmatpush1.msra.mxu0 0.0
  %1070 = vmatprep.subr.mxu0 0.0
  %1071 = vmatpush1.msra.mxu0 0.0
  %1072 = vmatprep.subr.mxu0 0.0
  %1073 = vmatpush1.msra.mxu0 0.0
  %1074 = vmatprep.subr.mxu0 0.0
  %1075 = vmatpush1.msra.mxu0 0.0
  %1076 = vmatprep.subr.mxu0 0.0
  %1077 = vmatpush1.msra.mxu0 0.0
  %1078 = vmatprep.subr.mxu0 0.0
  %1079 = vmatpush1.msra.mxu0 0.0
  %1080 = vmatprep.subr.mxu0 0.0
  %1081 = vmatpush1.msra.mxu0 0.0
  %1082 = vmatprep.subr.mxu0 0.0
  %1083 = vmatpush1.msra.mxu0 0.0
  %1084 = vmatprep.subr.mxu0 0.0
  %1085 = vmatpush1.msra.mxu0 0.0
  %1086 = vmatprep.subr.mxu0 0.0
  %1087 = vmatpush1.msra.mxu0 0.0
  %1088 = vmatprep.subr.mxu0 0.0
  %1089 = vmatpush1.msra.mxu0 0.0
  %1090 = vmatprep.subr.mxu0 0.0
  %1091 = vmatpush1.msra.mxu0 0.0
  %1092 = vmatprep.mubr.f32.mxu0 0.0
  %v1093 = vand.u32 %v16, 4294901760
  %1094 = vmatmul.mubr.f32.gmra.mrb[0].mxu0 %v1093
  %v1095 = vpop.f32.mrb[0].mxu0
  %v1096 = vadd.f32 %v915, %v1095
  %v1097 = vpop.f32.mrb[0].mxu0
  %1098 = vmatprep.mubr.f32.mxu0 0.0
  %v1099 = vand.u32 %v17, 4294901760
  %1100 = vmatmul.mubr.f32.gmra.mrb[0].mxu0 %v1099
  %v1101 = vpop.f32.mrb[0].mxu0
  %v1102 = vadd.f32 %v925, %v1101
  %v1103 = vpop.f32.mrb[0].mxu0
  %1104 = vmatprep.mubr.f32.mxu0 0.0
  %v1105 = vand.u32 %v18, 4294901760
  %1106 = vmatmul.mubr.f32.gmra.mrb[0].mxu0 %v1105
  %v1107 = vpop.f32.mrb[0].mxu0
  %v1108 = vadd.f32 %v935, %v1107
  %v1109 = vpop.f32.mrb[0].mxu0
  %1110 = vmatprep.mubr.f32.mxu0 0.0
  %v1111 = vand.u32 %v19, 4294901760
  %1112 = vmatmul.mubr.f32.gmra.mrb[0].mxu0 %v1111
  %v1113 = vpop.f32.mrb[0].mxu0
  %v1114 = vadd.f32 %v945, %v1113
  %v1115 = vpop.f32.mrb[0].mxu0
  %1116 = vdwg.mxu0
  %1117 = vmatprep.subr.mxu0 0.0
  %v1118 = vand.u32 %v20, 4294901760
  %v1119 = vsub.f32 %v20, %v1118
  %1120 = vmatpush1.msra.mxu0 %v1119
  %1121 = vmatprep.subr.mxu0 0.0
  %v1122 = vand.u32 %v21, 4294901760
  %v1123 = vsub.f32 %v21, %v1122
  %1124 = vmatpush1.msra.mxu0 %v1123
  %1125 = vmatprep.subr.mxu0 0.0
  %v1126 = vand.u32 %v22, 4294901760
  %v1127 = vsub.f32 %v22, %v1126
  %1128 = vmatpush1.msra.mxu0 %v1127
  %1129 = vmatprep.subr.mxu0 0.0
  %v1130 = vand.u32 %v23, 4294901760
  %v1131 = vsub.f32 %v23, %v1130
  %1132 = vmatpush1.msra.mxu0 %v1131
  %1133 = vmatprep.subr.mxu0 0.0
  %v1134 = vand.u32 %v24, 4294901760
  %v1135 = vsub.f32 %v24, %v1134
  %1136 = vmatpush1.msra.mxu0 %v1135
  %1137 = vmatprep.subr.mxu0 0.0
  %v1138 = vand.u32 %v25, 4294901760
  %v1139 = vsub.f32 %v25, %v1138
  %1140 = vmatpush1.msra.mxu0 %v1139
  %1141 = vmatprep.subr.mxu0 0.0
  %v1142 = vand.u32 %v26, 4294901760
  %v1143 = vsub.f32 %v26, %v1142
  %1144 = vmatpush1.msra.mxu0 %v1143
  %1145 = vmatprep.subr.mxu0 0.0
  %v1146 = vand.u32 %v27, 4294901760
  %v1147 = vsub.f32 %v27, %v1146
  %1148 = vmatpush1.msra.mxu0 %v1147
  %1149 = vmatprep.subr.mxu0 0.0
  %v1150 = vand.u32 %v28, 4294901760
  %v1151 = vsub.f32 %v28, %v1150
  %1152 = vmatpush1.msra.mxu0 %v1151
  %1153 = vmatprep.subr.mxu0 0.0
  %v1154 = vand.u32 %v29, 4294901760
  %v1155 = vsub.f32 %v29, %v1154
  %1156 = vmatpush1.msra.mxu0 %v1155
  %1157 = vmatprep.subr.mxu0 0.0
  %v1158 = vand.u32 %v30, 4294901760
  %v1159 = vsub.f32 %v30, %v1158
  %1160 = vmatpush1.msra.mxu0 %v1159
  %1161 = vmatprep.subr.mxu0 0.0
  %v1162 = vand.u32 %v31, 4294901760
  %v1163 = vsub.f32 %v31, %v1162
  %1164 = vmatpush1.msra.mxu0 %v1163
  %1165 = vmatprep.subr.mxu0 0.0
  %v1166 = vand.u32 %v32, 4294901760
  %v1167 = vsub.f32 %v32, %v1166
  %1168 = vmatpush1.msra.mxu0 %v1167
  %1169 = vmatprep.subr.mxu0 0.0
  %v1170 = vand.u32 %v33, 4294901760
  %v1171 = vsub.f32 %v33, %v1170
  %1172 = vmatpush1.msra.mxu0 %v1171
  %1173 = vmatprep.subr.mxu0 0.0
  %v1174 = vand.u32 %v34, 4294901760
  %v1175 = vsub.f32 %v34, %v1174
  %1176 = vmatpush1.msra.mxu0 %v1175
  %1177 = vmatprep.subr.mxu0 0.0
  %v1178 = vand.u32 %v35, 4294901760
  %v1179 = vsub.f32 %v35, %v1178
  %1180 = vmatpush1.msra.mxu0 %v1179
  %1181 = vmatprep.subr.mxu0 0.0
  %1182 = vmatpush1.msra.mxu0 0.0
  %1183 = vmatprep.subr.mxu0 0.0
  %1184 = vmatpush1.msra.mxu0 0.0
  %1185 = vmatprep.subr.mxu0 0.0
  %1186 = vmatpush1.msra.mxu0 0.0
  %1187 = vmatprep.subr.mxu0 0.0
  %1188 = vmatpush1.msra.mxu0 0.0
  %1189 = vmatprep.subr.mxu0 0.0
  %1190 = vmatpush1.msra.mxu0 0.0
  %1191 = vmatprep.subr.mxu0 0.0
  %1192 = vmatpush1.msra.mxu0 0.0
  %1193 = vmatprep.subr.mxu0 0.0
  %1194 = vmatpush1.msra.mxu0 0.0
  %1195 = vmatprep.subr.mxu0 0.0
  %1196 = vmatpush1.msra.mxu0 0.0
  %1197 = vmatprep.subr.mxu0 0.0
  %1198 = vmatpush1.msra.mxu0 0.0
  %1199 = vmatprep.subr.mxu0 0.0
  %1200 = vmatpush1.msra.mxu0 0.0
  %1201 = vmatprep.subr.mxu0 0.0
  %1202 = vmatpush1.msra.mxu0 0.0
  %1203 = vmatprep.subr.mxu0 0.0
  %1204 = vmatpush1.msra.mxu0 0.0
  %1205 = vmatprep.subr.mxu0 0.0
  %1206 = vmatpush1.msra.mxu0 0.0
  %1207 = vmatprep.subr.mxu0 0.0
  %1208 = vmatpush1.msra.mxu0 0.0
  %1209 = vmatprep.subr.mxu0 0.0
  %1210 = vmatpush1.msra.mxu0 0.0
  %1211 = vmatprep.subr.mxu0 0.0
  %1212 = vmatpush1.msra.mxu0 0.0
  %1213 = vmatprep.mubr.f32.mxu0 0.0
  %v1214 = vand.u32 %v16, 4294901760
  %v1215 = vsub.f32 %v16, %v1214
  %1216 = vmatmul.mubr.f32.gmra.mrb[0].mxu0 %v1215
  %v1217 = vpop.f32.mrb[0].mxu0
  %v1218 = vadd.f32 %v1096, %v1217
  %v1219 = vpop.f32.mrb[0].mxu0
  %1220 = vmatprep.mubr.f32.mxu0 0.0
  %v1221 = vand.u32 %v17, 4294901760
  %v1222 = vsub.f32 %v17, %v1221
  %1223 = vmatmul.mubr.f32.gmra.mrb[0].mxu0 %v1222
  %v1224 = vpop.f32.mrb[0].mxu0
  %v1225 = vadd.f32 %v1102, %v1224
  %v1226 = vpop.f32.mrb[0].mxu0
  %1227 = vmatprep.mubr.f32.mxu0 0.0
  %v1228 = vand.u32 %v18, 4294901760
  %v1229 = vsub.f32 %v18, %v1228
  %1230 = vmatmul.mubr.f32.gmra.mrb[0].mxu0 %v1229
  %v1231 = vpop.f32.mrb[0].mxu0
  %v1232 = vadd.f32 %v1108, %v1231
  %v1233 = vpop.f32.mrb[0].mxu0
  %1234 = vmatprep.mubr.f32.mxu0 0.0
  %v1235 = vand.u32 %v19, 4294901760
  %v1236 = vsub.f32 %v19, %v1235
  %1237 = vmatmul.mubr.f32.gmra.mrb[0].mxu0 %v1236
  %v1238 = vpop.f32.mrb[0].mxu0
  %v1239 = vadd.f32 %v1114, %v1238
  %v1240 = vpop.f32.mrb[0].mxu0
  %1241 = vdwg.mxu0
  %1242 = vmatprep.subr.mxu0 0.0
  %v1243 = vand.u32 %v20, 4294901760
  %1244 = vmatpush1.msra.mxu0 %v1243
  %1245 = vmatprep.subr.mxu0 0.0
  %v1246 = vand.u32 %v21, 4294901760
  %1247 = vmatpush1.msra.mxu0 %v1246
  %1248 = vmatprep.subr.mxu0 0.0
  %v1249 = vand.u32 %v22, 4294901760
  %1250 = vmatpush1.msra.mxu0 %v1249
  %1251 = vmatprep.subr.mxu0 0.0
  %v1252 = vand.u32 %v23, 4294901760
  %1253 = vmatpush1.msra.mxu0 %v1252
  %1254 = vmatprep.subr.mxu0 0.0
  %v1255 = vand.u32 %v24, 4294901760
  %1256 = vmatpush1.msra.mxu0 %v1255
  %1257 = vmatprep.subr.mxu0 0.0
  %v1258 = vand.u32 %v25, 4294901760
  %1259 = vmatpush1.msra.mxu0 %v1258
  %1260 = vmatprep.subr.mxu0 0.0
  %v1261 = vand.u32 %v26, 4294901760
  %1262 = vmatpush1.msra.mxu0 %v1261
  %1263 = vmatprep.subr.mxu0 0.0
  %v1264 = vand.u32 %v27, 4294901760
  %1265 = vmatpush1.msra.mxu0 %v1264
  %1266 = vmatprep.subr.mxu0 0.0
  %v1267 = vand.u32 %v28, 4294901760
  %1268 = vmatpush1.msra.mxu0 %v1267
  %1269 = vmatprep.subr.mxu0 0.0
  %v1270 = vand.u32 %v29, 4294901760
  %1271 = vmatpush1.msra.mxu0 %v1270
  %1272 = vmatprep.subr.mxu0 0.0
  %v1273 = vand.u32 %v30, 4294901760
  %1274 = vmatpush1.msra.mxu0 %v1273
  %1275 = vmatprep.subr.mxu0 0.0
  %v1276 = vand.u32 %v31, 4294901760
  %1277 = vmatpush1.msra.mxu0 %v1276
  %1278 = vmatprep.subr.mxu0 0.0
  %v1279 = vand.u32 %v32, 4294901760
  %1280 = vmatpush1.msra.mxu0 %v1279
  %1281 = vmatprep.subr.mxu0 0.0
  %v1282 = vand.u32 %v33, 4294901760
  %1283 = vmatpush1.msra.mxu0 %v1282
  %1284 = vmatprep.subr.mxu0 0.0
  %v1285 = vand.u32 %v34, 4294901760
  %1286 = vmatpush1.msra.mxu0 %v1285
  %1287 = vmatprep.subr.mxu0 0.0
  %v1288 = vand.u32 %v35, 4294901760
  %1289 = vmatpush1.msra.mxu0 %v1288
  %1290 = vmatprep.subr.mxu0 0.0
  %1291 = vmatpush1.msra.mxu0 0.0
  %1292 = vmatprep.subr.mxu0 0.0
  %1293 = vmatpush1.msra.mxu0 0.0
  %1294 = vmatprep.subr.mxu0 0.0
  %1295 = vmatpush1.msra.mxu0 0.0
  %1296 = vmatprep.subr.mxu0 0.0
  %1297 = vmatpush1.msra.mxu0 0.0
  %1298 = vmatprep.subr.mxu0 0.0
  %1299 = vmatpush1.msra.mxu0 0.0
  %1300 = vmatprep.subr.mxu0 0.0
  %1301 = vmatpush1.msra.mxu0 0.0
  %1302 = vmatprep.subr.mxu0 0.0
  %1303 = vmatpush1.msra.mxu0 0.0
  %1304 = vmatprep.subr.mxu0 0.0
  %1305 = vmatpush1.msra.mxu0 0.0
  %1306 = vmatprep.subr.mxu0 0.0
  %1307 = vmatpush1.msra.mxu0 0.0
  %1308 = vmatprep.subr.mxu0 0.0
  %1309 = vmatpush1.msra.mxu0 0.0
  %1310 = vmatprep.subr.mxu0 0.0
  %1311 = vmatpush1.msra.mxu0 0.0
  %1312 = vmatprep.subr.mxu0 0.0
  %1313 = vmatpush1.msra.mxu0 0.0
  %1314 = vmatprep.subr.mxu0 0.0
  %1315 = vmatpush1.msra.mxu0 0.0
  %1316 = vmatprep.subr.mxu0 0.0
  %1317 = vmatpush1.msra.mxu0 0.0
  %1318 = vmatprep.subr.mxu0 0.0
  %1319 = vmatpush1.msra.mxu0 0.0
  %1320 = vmatprep.subr.mxu0 0.0
  %1321 = vmatpush1.msra.mxu0 0.0
  %1322 = vmatprep.mubr.f32.mxu0 0.0
  %v1323 = vand.u32 %v16, 4294901760
  %v1324 = vsub.f32 %v16, %v1323
  %v1325 = vand.u32 %v1324, 4294901760
  %1326 = vmatmul.mubr.f32.gmra.mrb[0].mxu0 %v1325
  %v1327 = vpop.f32.mrb[0].mxu0
  %v1328 = vadd.f32 %v1218, %v1327
  %v1329 = vpop.f32.mrb[0].mxu0
  %1330 = vmatprep.mubr.f32.mxu0 0.0
  %v1331 = vand.u32 %v17, 4294901760
  %v1332 = vsub.f32 %v17, %v1331
  %v1333 = vand.u32 %v1332, 4294901760
  %1334 = vmatmul.mubr.f32.gmra.mrb[0].mxu0 %v1333
  %v1335 = vpop.f32.mrb[0].mxu0
  %v1336 = vadd.f32 %v1225, %v1335
  %v1337 = vpop.f32.mrb[0].mxu0
  %1338 = vmatprep.mubr.f32.mxu0 0.0
  %v1339 = vand.u32 %v18, 4294901760
  %v1340 = vsub.f32 %v18, %v1339
  %v1341 = vand.u32 %v1340, 4294901760
  %1342 = vmatmul.mubr.f32.gmra.mrb[0].mxu0 %v1341
  %v1343 = vpop.f32.mrb[0].mxu0
  %v1344 = vadd.f32 %v1232, %v1343
  %v1345 = vpop.f32.mrb[0].mxu0
  %1346 = vmatprep.mubr.f32.mxu0 0.0
  %v1347 = vand.u32 %v19, 4294901760
  %v1348 = vsub.f32 %v19, %v1347
  %v1349 = vand.u32 %v1348, 4294901760
  %1350 = vmatmul.mubr.f32.gmra.mrb[0].mxu0 %v1349
  %v1351 = vpop.f32.mrb[0].mxu0
  %v1352 = vadd.f32 %v1239, %v1351
  %v1353 = vpop.f32.mrb[0].mxu0
  %1354 = vdwg.mxu0
  %1355 = vmatprep.subr.mxu0 0.0
  %v1356 = vand.u32 %v20, 4294901760
  %v1357 = vsub.f32 %v20, %v1356
  %v1358 = vand.u32 %v1357, 4294901760
  %1359 = vmatpush1.msra.mxu0 %v1358
  %1360 = vmatprep.subr.mxu0 0.0
  %v1361 = vand.u32 %v21, 4294901760
  %v1362 = vsub.f32 %v21, %v1361
  %v1363 = vand.u32 %v1362, 4294901760
  %1364 = vmatpush1.msra.mxu0 %v1363
  %1365 = vmatprep.subr.mxu0 0.0
  %v1366 = vand.u32 %v22, 4294901760
  %v1367 = vsub.f32 %v22, %v1366
  %v1368 = vand.u32 %v1367, 4294901760
  %1369 = vmatpush1.msra.mxu0 %v1368
  %1370 = vmatprep.subr.mxu0 0.0
  %v1371 = vand.u32 %v23, 4294901760
  %v1372 = vsub.f32 %v23, %v1371
  %v1373 = vand.u32 %v1372, 4294901760
  %1374 = vmatpush1.msra.mxu0 %v1373
  %1375 = vmatprep.subr.mxu0 0.0
  %v1376 = vand.u32 %v24, 4294901760
  %v1377 = vsub.f32 %v24, %v1376
  %v1378 = vand.u32 %v1377, 4294901760
  %1379 = vmatpush1.msra.mxu0 %v1378
  %1380 = vmatprep.subr.mxu0 0.0
  %v1381 = vand.u32 %v25, 4294901760
  %v1382 = vsub.f32 %v25, %v1381
  %v1383 = vand.u32 %v1382, 4294901760
  %1384 = vmatpush1.msra.mxu0 %v1383
  %1385 = vmatprep.subr.mxu0 0.0
  %v1386 = vand.u32 %v26, 4294901760
  %v1387 = vsub.f32 %v26, %v1386
  %v1388 = vand.u32 %v1387, 4294901760
  %1389 = vmatpush1.msra.mxu0 %v1388
  %1390 = vmatprep.subr.mxu0 0.0
  %v1391 = vand.u32 %v27, 4294901760
  %v1392 = vsub.f32 %v27, %v1391
  %v1393 = vand.u32 %v1392, 4294901760
  %1394 = vmatpush1.msra.mxu0 %v1393
  %1395 = vmatprep.subr.mxu0 0.0
  %v1396 = vand.u32 %v28, 4294901760
  %v1397 = vsub.f32 %v28, %v1396
  %v1398 = vand.u32 %v1397, 4294901760
  %1399 = vmatpush1.msra.mxu0 %v1398
  %1400 = vmatprep.subr.mxu0 0.0
  %v1401 = vand.u32 %v29, 4294901760
  %v1402 = vsub.f32 %v29, %v1401
  %v1403 = vand.u32 %v1402, 4294901760
  %1404 = vmatpush1.msra.mxu0 %v1403
  %1405 = vmatprep.subr.mxu0 0.0
  %v1406 = vand.u32 %v30, 4294901760
  %v1407 = vsub.f32 %v30, %v1406
  %v1408 = vand.u32 %v1407, 4294901760
  %1409 = vmatpush1.msra.mxu0 %v1408
  %1410 = vmatprep.subr.mxu0 0.0
  %v1411 = vand.u32 %v31, 4294901760
  %v1412 = vsub.f32 %v31, %v1411
  %v1413 = vand.u32 %v1412, 4294901760
  %1414 = vmatpush1.msra.mxu0 %v1413
  %1415 = vmatprep.subr.mxu0 0.0
  %v1416 = vand.u32 %v32, 4294901760
  %v1417 = vsub.f32 %v32, %v1416
  %v1418 = vand.u32 %v1417, 4294901760
  %1419 = vmatpush1.msra.mxu0 %v1418
  %1420 = vmatprep.subr.mxu0 0.0
  %v1421 = vand.u32 %v33, 4294901760
  %v1422 = vsub.f32 %v33, %v1421
  %v1423 = vand.u32 %v1422, 4294901760
  %1424 = vmatpush1.msra.mxu0 %v1423
  %1425 = vmatprep.subr.mxu0 0.0
  %v1426 = vand.u32 %v34, 4294901760
  %v1427 = vsub.f32 %v34, %v1426
  %v1428 = vand.u32 %v1427, 4294901760
  %1429 = vmatpush1.msra.mxu0 %v1428
  %1430 = vmatprep.subr.mxu0 0.0
  %v1431 = vand.u32 %v35, 4294901760
  %v1432 = vsub.f32 %v35, %v1431
  %v1433 = vand.u32 %v1432, 4294901760
  %1434 = vmatpush1.msra.mxu0 %v1433
  %1435 = vmatprep.subr.mxu0 0.0
  %1436 = vmatpush1.msra.mxu0 0.0
  %1437 = vmatprep.subr.mxu0 0.0
  %1438 = vmatpush1.msra.mxu0 0.0
  %1439 = vmatprep.subr.mxu0 0.0
  %1440 = vmatpush1.msra.mxu0 0.0
  %1441 = vmatprep.subr.mxu0 0.0
  %1442 = vmatpush1.msra.mxu0 0.0
  %1443 = vmatprep.subr.mxu0 0.0
  %1444 = vmatpush1.msra.mxu0 0.0
  %1445 = vmatprep.subr.mxu0 0.0
  %1446 = vmatpush1.msra.mxu0 0.0
  %1447 = vmatprep.subr.mxu0 0.0
  %1448 = vmatpush1.msra.mxu0 0.0
  %1449 = vmatprep.subr.mxu0 0.0
  %1450 = vmatpush1.msra.mxu0 0.0
  %1451 = vmatprep.subr.mxu0 0.0
  %1452 = vmatpush1.msra.mxu0 0.0
  %1453 = vmatprep.subr.mxu0 0.0
  %1454 = vmatpush1.msra.mxu0 0.0
  %1455 = vmatprep.subr.mxu0 0.0
  %1456 = vmatpush1.msra.mxu0 0.0
  %1457 = vmatprep.subr.mxu0 0.0
  %1458 = vmatpush1.msra.mxu0 0.0
  %1459 = vmatprep.subr.mxu0 0.0
  %1460 = vmatpush1.msra.mxu0 0.0
  %1461 = vmatprep.subr.mxu0 0.0
  %1462 = vmatpush1.msra.mxu0 0.0
  %1463 = vmatprep.subr.mxu0 0.0
  %1464 = vmatpush1.msra.mxu0 0.0
  %1465 = vmatprep.subr.mxu0 0.0
  %1466 = vmatpush1.msra.mxu0 0.0
  %1467 = vmatprep.mubr.f32.mxu0 0.0
  %v1468 = vand.u32 %v16, 4294901760
  %1469 = vmatmul.mubr.f32.gmra.mrb[0].mxu0 %v1468
  %v1470 = vpop.f32.mrb[0].mxu0
  %v1471 = vadd.f32 %v1328, %v1470
  %v1472 = vpop.f32.mrb[0].mxu0
  %1473 = vmatprep.mubr.f32.mxu0 0.0
  %v1474 = vand.u32 %v17, 4294901760
  %1475 = vmatmul.mubr.f32.gmra.mrb[0].mxu0 %v1474
  %v1476 = vpop.f32.mrb[0].mxu0
  %v1477 = vadd.f32 %v1336, %v1476
  %v1478 = vpop.f32.mrb[0].mxu0
  %1479 = vmatprep.mubr.f32.mxu0 0.0
  %v1480 = vand.u32 %v18, 4294901760
  %1481 = vmatmul.mubr.f32.gmra.mrb[0].mxu0 %v1480
  %v1482 = vpop.f32.mrb[0].mxu0
  %v1483 = vadd.f32 %v1344, %v1482
  %v1484 = vpop.f32.mrb[0].mxu0
  %1485 = vmatprep.mubr.f32.mxu0 0.0
  %v1486 = vand.u32 %v19, 4294901760
  %1487 = vmatmul.mubr.f32.gmra.mrb[0].mxu0 %v1486
  %v1488 = vpop.f32.mrb[0].mxu0
  %v1489 = vadd.f32 %v1352, %v1488
  %v1490 = vpop.f32.mrb[0].mxu0
  %1491 = vdwg.mxu0
  %1492 = vmatprep.subr.mxu0 0.0
  %v1493 = vand.u32 %v20, 4294901760
  %1494 = vmatpush1.msra.mxu0 %v1493
  %1495 = vmatprep.subr.mxu0 0.0
  %v1496 = vand.u32 %v21, 4294901760
  %1497 = vmatpush1.msra.mxu0 %v1496
  %1498 = vmatprep.subr.mxu0 0.0
  %v1499 = vand.u32 %v22, 4294901760
  %1500 = vmatpush1.msra.mxu0 %v1499
  %1501 = vmatprep.subr.mxu0 0.0
  %v1502 = vand.u32 %v23, 4294901760
  %1503 = vmatpush1.msra.mxu0 %v1502
  %1504 = vmatprep.subr.mxu0 0.0
  %v1505 = vand.u32 %v24, 4294901760
  %1506 = vmatpush1.msra.mxu0 %v1505
  %1507 = vmatprep.subr.mxu0 0.0
  %v1508 = vand.u32 %v25, 4294901760
  %1509 = vmatpush1.msra.mxu0 %v1508
  %1510 = vmatprep.subr.mxu0 0.0
  %v1511 = vand.u32 %v26, 4294901760
  %1512 = vmatpush1.msra.mxu0 %v1511
  %1513 = vmatprep.subr.mxu0 0.0
  %v1514 = vand.u32 %v27, 4294901760
  %1515 = vmatpush1.msra.mxu0 %v1514
  %1516 = vmatprep.subr.mxu0 0.0
  %v1517 = vand.u32 %v28, 4294901760
  %1518 = vmatpush1.msra.mxu0 %v1517
  %1519 = vmatprep.subr.mxu0 0.0
  %v1520 = vand.u32 %v29, 4294901760
  %1521 = vmatpush1.msra.mxu0 %v1520
  %1522 = vmatprep.subr.mxu0 0.0
  %v1523 = vand.u32 %v30, 4294901760
  %1524 = vmatpush1.msra.mxu0 %v1523
  %1525 = vmatprep.subr.mxu0 0.0
  %v1526 = vand.u32 %v31, 4294901760
  %1527 = vmatpush1.msra.mxu0 %v1526
  %1528 = vmatprep.subr.mxu0 0.0
  %v1529 = vand.u32 %v32, 4294901760
  %1530 = vmatpush1.msra.mxu0 %v1529
  %1531 = vmatprep.subr.mxu0 0.0
  %v1532 = vand.u32 %v33, 4294901760
  %1533 = vmatpush1.msra.mxu0 %v1532
  %1534 = vmatprep.subr.mxu0 0.0
  %v1535 = vand.u32 %v34, 4294901760
  %1536 = vmatpush1.msra.mxu0 %v1535
  %1537 = vmatprep.subr.mxu0 0.0
  %v1538 = vand.u32 %v35, 4294901760
  %1539 = vmatpush1.msra.mxu0 %v1538
  %1540 = vmatprep.subr.mxu0 0.0
  %1541 = vmatpush1.msra.mxu0 0.0
  %1542 = vmatprep.subr.mxu0 0.0
  %1543 = vmatpush1.msra.mxu0 0.0
  %1544 = vmatprep.subr.mxu0 0.0
  %1545 = vmatpush1.msra.mxu0 0.0
  %1546 = vmatprep.subr.mxu0 0.0
  %1547 = vmatpush1.msra.mxu0 0.0
  %1548 = vmatprep.subr.mxu0 0.0
  %1549 = vmatpush1.msra.mxu0 0.0
  %1550 = vmatprep.subr.mxu0 0.0
  %1551 = vmatpush1.msra.mxu0 0.0
  %1552 = vmatprep.subr.mxu0 0.0
  %1553 = vmatpush1.msra.mxu0 0.0
  %1554 = vmatprep.subr.mxu0 0.0
  %1555 = vmatpush1.msra.mxu0 0.0
  %1556 = vmatprep.subr.mxu0 0.0
  %1557 = vmatpush1.msra.mxu0 0.0
  %1558 = vmatprep.subr.mxu0 0.0
  %1559 = vmatpush1.msra.mxu0 0.0
  %1560 = vmatprep.subr.mxu0 0.0
  %1561 = vmatpush1.msra.mxu0 0.0
  %1562 = vmatprep.subr.mxu0 0.0
  %1563 = vmatpush1.msra.mxu0 0.0
  %1564 = vmatprep.subr.mxu0 0.0
  %1565 = vmatpush1.msra.mxu0 0.0
  %1566 = vmatprep.subr.mxu0 0.0
  %1567 = vmatpush1.msra.mxu0 0.0
  %1568 = vmatprep.subr.mxu0 0.0
  %1569 = vmatpush1.msra.mxu0 0.0
  %1570 = vmatprep.subr.mxu0 0.0
  %1571 = vmatpush1.msra.mxu0 0.0
  %1572 = vmatprep.mubr.f32.mxu0 0.0
  %v1573 = vand.u32 %v16, 4294901760
  %1574 = vmatmul.mubr.f32.gmra.mrb[0].mxu0 %v1573
  %v1575 = vpop.f32.mrb[0].mxu0
  %v1576 = vadd.f32 %v1471, %v1575
  %v1577 = vpop.f32.mrb[0].mxu0
  %1578 = vmatprep.mubr.f32.mxu0 0.0
  %v1579 = vand.u32 %v17, 4294901760
  %1580 = vmatmul.mubr.f32.gmra.mrb[0].mxu0 %v1579
  %v1581 = vpop.f32.mrb[0].mxu0
  %v1582 = vadd.f32 %v1477, %v1581
  %v1583 = vpop.f32.mrb[0].mxu0
  %1584 = vmatprep.mubr.f32.mxu0 0.0
  %v1585 = vand.u32 %v18, 4294901760
  %1586 = vmatmul.mubr.f32.gmra.mrb[0].mxu0 %v1585
  %v1587 = vpop.f32.mrb[0].mxu0
  %v1588 = vadd.f32 %v1483, %v1587
  %v1589 = vpop.f32.mrb[0].mxu0
  %1590 = vmatprep.mubr.f32.mxu0 0.0
  %v1591 = vand.u32 %v19, 4294901760
  %1592 = vmatmul.mubr.f32.gmra.mrb[0].mxu0 %v1591
  %v1593 = vpop.f32.mrb[0].mxu0
  %v1594 = vadd.f32 %v1489, %v1593
  %v1595 = vpop.f32.mrb[0].mxu0
  %1596 = vdwg.mxu0
  %v1597 = vld [vmem:[%s0 + $0x3] sm:$0xff]
  %v1598 = vld [vmem:[%s0 + $0xb] sm:$0xff]
  %v1599 = vld [vmem:[%s0 + $0x1b] sm:$0xff]
  %v1600 = vld [vmem:[%s0 + $0x23] sm:$0xff]
  %s1601 = scalar_lea.vmem %s1, 256
  %v1602 = vld [vmem:[%s1601] sm:$0xff]
  %v1603 = vld [vmem:[%s1601 + $0x8] sm:$0xff]
  %v1604 = vld [vmem:[%s1601 + $0x10] sm:$0xff]
  %v1605 = vld [vmem:[%s1601 + $0x18] sm:$0xff]
  %v1606 = vld [vmem:[%s1601 + $0x20] sm:$0xff]
  %v1607 = vld [vmem:[%s1601 + $0x28] sm:$0xff]
  %v1608 = vld [vmem:[%s1601 + $0x30] sm:$0xff]
  %v1609 = vld [vmem:[%s1601 + $0x38] sm:$0xff]
  %v1610 = vld [vmem:[%s1601 + $0x40] sm:$0xff]
  %v1611 = vld [vmem:[%s1601 + $0x48] sm:$0xff]
  %v1612 = vld [vmem:[%s1601 + $0x50] sm:$0xff]
  %v1613 = vld [vmem:[%s1601 + $0x58] sm:$0xff]
  %v1614 = vld [vmem:[%s1601 + $0x60] sm:$0xff]
  %v1615 = vld [vmem:[%s1601 + $0x68] sm:$0xff]
  %v1616 = vld [vmem:[%s1601 + $0x70] sm:$0xff]
  %v1617 = vld [vmem:[%s1601 + $0x78] sm:$0xff]
  %1618 = vmatprep.subr.mxu0 0.0
  %v1619 = vand.u32 %v1602, 4294901760
  %1620 = vmatpush1.msra.mxu0 %v1619
  %1621 = vmatprep.subr.mxu0 0.0
  %v1622 = vand.u32 %v1603, 4294901760
  %1623 = vmatpush1.msra.mxu0 %v1622
  %1624 = vmatprep.subr.mxu0 0.0
  %v1625 = vand.u32 %v1604, 4294901760
  %1626 = vmatpush1.msra.mxu0 %v1625
  %1627 = vmatprep.subr.mxu0 0.0
  %v1628 = vand.u32 %v1605, 4294901760
  %1629 = vmatpush1.msra.mxu0 %v1628
  %1630 = vmatprep.subr.mxu0 0.0
  %v1631 = vand.u32 %v1606, 4294901760
  %1632 = vmatpush1.msra.mxu0 %v1631
  %1633 = vmatprep.subr.mxu0 0.0
  %v1634 = vand.u32 %v1607, 4294901760
  %1635 = vmatpush1.msra.mxu0 %v1634
  %1636 = vmatprep.subr.mxu0 0.0
  %v1637 = vand.u32 %v1608, 4294901760
  %1638 = vmatpush1.msra.mxu0 %v1637
  %1639 = vmatprep.subr.mxu0 0.0
  %v1640 = vand.u32 %v1609, 4294901760
  %1641 = vmatpush1.msra.mxu0 %v1640
  %1642 = vmatprep.subr.mxu0 0.0
  %v1643 = vand.u32 %v1610, 4294901760
  %1644 = vmatpush1.msra.mxu0 %v1643
  %1645 = vmatprep.subr.mxu0 0.0
  %v1646 = vand.u32 %v1611, 4294901760
  %1647 = vmatpush1.msra.mxu0 %v1646
  %1648 = vmatprep.subr.mxu0 0.0
  %v1649 = vand.u32 %v1612, 4294901760
  %1650 = vmatpush1.msra.mxu0 %v1649
  %1651 = vmatprep.subr.mxu0 0.0
  %v1652 = vand.u32 %v1613, 4294901760
  %1653 = vmatpush1.msra.mxu0 %v1652
  %1654 = vmatprep.subr.mxu0 0.0
  %v1655 = vand.u32 %v1614, 4294901760
  %1656 = vmatpush1.msra.mxu0 %v1655
  %1657 = vmatprep.subr.mxu0 0.0
  %v1658 = vand.u32 %v1615, 4294901760
  %1659 = vmatpush1.msra.mxu0 %v1658
  %1660 = vmatprep.subr.mxu0 0.0
  %v1661 = vand.u32 %v1616, 4294901760
  %1662 = vmatpush1.msra.mxu0 %v1661
  %1663 = vmatprep.subr.mxu0 0.0
  %v1664 = vand.u32 %v1617, 4294901760
  %1665 = vmatpush1.msra.mxu0 %v1664
  %1666 = vmatprep.subr.mxu0 0.0
  %1667 = vmatpush1.msra.mxu0 0.0
  %1668 = vmatprep.subr.mxu0 0.0
  %1669 = vmatpush1.msra.mxu0 0.0
  %1670 = vmatprep.subr.mxu0 0.0
  %1671 = vmatpush1.msra.mxu0 0.0
  %1672 = vmatprep.subr.mxu0 0.0
  %1673 = vmatpush1.msra.mxu0 0.0
  %1674 = vmatprep.subr.mxu0 0.0
  %1675 = vmatpush1.msra.mxu0 0.0
  %1676 = vmatprep.subr.mxu0 0.0
  %1677 = vmatpush1.msra.mxu0 0.0
  %1678 = vmatprep.subr.mxu0 0.0
  %1679 = vmatpush1.msra.mxu0 0.0
  %1680 = vmatprep.subr.mxu0 0.0
  %1681 = vmatpush1.msra.mxu0 0.0
  %1682 = vmatprep.subr.mxu0 0.0
  %1683 = vmatpush1.msra.mxu0 0.0
  %1684 = vmatprep.subr.mxu0 0.0
  %1685 = vmatpush1.msra.mxu0 0.0
  %1686 = vmatprep.subr.mxu0 0.0
  %1687 = vmatpush1.msra.mxu0 0.0
  %1688 = vmatprep.subr.mxu0 0.0
  %1689 = vmatpush1.msra.mxu0 0.0
  %1690 = vmatprep.subr.mxu0 0.0
  %1691 = vmatpush1.msra.mxu0 0.0
  %1692 = vmatprep.subr.mxu0 0.0
  %1693 = vmatpush1.msra.mxu0 0.0
  %1694 = vmatprep.subr.mxu0 0.0
  %1695 = vmatpush1.msra.mxu0 0.0
  %1696 = vmatprep.subr.mxu0 0.0
  %1697 = vmatpush1.msra.mxu0 0.0
  %1698 = vmatprep.mubr.f32.mxu0 0.0
  %v1699 = vand.u32 %v1597, 4294901760
  %v1700 = vsub.f32 %v1597, %v1699
  %v1701 = vand.u32 %v1700, 4294901760
  %v1702 = vsub.f32 %v1700, %v1701
  %v1703 = vand.u32 %v1702, 4294901760
  %1704 = vmatmul.mubr.f32.gmra.mrb[0].mxu0 %v1703
  %v1705 = vpop.f32.mrb[0].mxu0
  %v1706 = vadd.f32 0.0, %v1705
  %v1707 = vpop.f32.mrb[0].mxu0
  %1708 = vmatprep.mubr.f32.mxu0 0.0
  %v1709 = vand.u32 %v1598, 4294901760
  %v1710 = vsub.f32 %v1598, %v1709
  %v1711 = vand.u32 %v1710, 4294901760
  %v1712 = vsub.f32 %v1710, %v1711
  %v1713 = vand.u32 %v1712, 4294901760
  %1714 = vmatmul.mubr.f32.gmra.mrb[0].mxu0 %v1713
  %v1715 = vpop.f32.mrb[0].mxu0
  %v1716 = vadd.f32 0.0, %v1715
  %v1717 = vpop.f32.mrb[0].mxu0
  %1718 = vmatprep.mubr.f32.mxu0 0.0
  %v1719 = vand.u32 %v1599, 4294901760
  %v1720 = vsub.f32 %v1599, %v1719
  %v1721 = vand.u32 %v1720, 4294901760
  %v1722 = vsub.f32 %v1720, %v1721
  %v1723 = vand.u32 %v1722, 4294901760
  %1724 = vmatmul.mubr.f32.gmra.mrb[0].mxu0 %v1723
  %v1725 = vpop.f32.mrb[0].mxu0
  %v1726 = vadd.f32 0.0, %v1725
  %v1727 = vpop.f32.mrb[0].mxu0
  %1728 = vmatprep.mubr.f32.mxu0 0.0
  %v1729 = vand.u32 %v1600, 4294901760
  %v1730 = vsub.f32 %v1600, %v1729
  %v1731 = vand.u32 %v1730, 4294901760
  %v1732 = vsub.f32 %v1730, %v1731
  %v1733 = vand.u32 %v1732, 4294901760
  %1734 = vmatmul.mubr.f32.gmra.mrb[0].mxu0 %v1733
  %v1735 = vpop.f32.mrb[0].mxu0
  %v1736 = vadd.f32 0.0, %v1735
  %v1737 = vpop.f32.mrb[0].mxu0
  %1738 = vdwg.mxu0
  %1739 = vmatprep.subr.mxu0 0.0
  %v1740 = vand.u32 %v1602, 4294901760
  %v1741 = vsub.f32 %v1602, %v1740
  %v1742 = vand.u32 %v1741, 4294901760
  %v1743 = vsub.f32 %v1741, %v1742
  %v1744 = vand.u32 %v1743, 4294901760
  %1745 = vmatpush1.msra.mxu0 %v1744
  %1746 = vmatprep.subr.mxu0 0.0
  %v1747 = vand.u32 %v1603, 4294901760
  %v1748 = vsub.f32 %v1603, %v1747
  %v1749 = vand.u32 %v1748, 4294901760
  %v1750 = vsub.f32 %v1748, %v1749
  %v1751 = vand.u32 %v1750, 4294901760
  %1752 = vmatpush1.msra.mxu0 %v1751
  %1753 = vmatprep.subr.mxu0 0.0
  %v1754 = vand.u32 %v1604, 4294901760
  %v1755 = vsub.f32 %v1604, %v1754
  %v1756 = vand.u32 %v1755, 4294901760
  %v1757 = vsub.f32 %v1755, %v1756
  %v1758 = vand.u32 %v1757, 4294901760
  %1759 = vmatpush1.msra.mxu0 %v1758
  %1760 = vmatprep.subr.mxu0 0.0
  %v1761 = vand.u32 %v1605, 4294901760
  %v1762 = vsub.f32 %v1605, %v1761
  %v1763 = vand.u32 %v1762, 4294901760
  %v1764 = vsub.f32 %v1762, %v1763
  %v1765 = vand.u32 %v1764, 4294901760
  %1766 = vmatpush1.msra.mxu0 %v1765
  %1767 = vmatprep.subr.mxu0 0.0
  %v1768 = vand.u32 %v1606, 4294901760
  %v1769 = vsub.f32 %v1606, %v1768
  %v1770 = vand.u32 %v1769, 4294901760
  %v1771 = vsub.f32 %v1769, %v1770
  %v1772 = vand.u32 %v1771, 4294901760
  %1773 = vmatpush1.msra.mxu0 %v1772
  %1774 = vmatprep.subr.mxu0 0.0
  %v1775 = vand.u32 %v1607, 4294901760
  %v1776 = vsub.f32 %v1607, %v1775
  %v1777 = vand.u32 %v1776, 4294901760
  %v1778 = vsub.f32 %v1776, %v1777
  %v1779 = vand.u32 %v1778, 4294901760
  %1780 = vmatpush1.msra.mxu0 %v1779
  %1781 = vmatprep.subr.mxu0 0.0
  %v1782 = vand.u32 %v1608, 4294901760
  %v1783 = vsub.f32 %v1608, %v1782
  %v1784 = vand.u32 %v1783, 4294901760
  %v1785 = vsub.f32 %v1783, %v1784
  %v1786 = vand.u32 %v1785, 4294901760
  %1787 = vmatpush1.msra.mxu0 %v1786
  %1788 = vmatprep.subr.mxu0 0.0
  %v1789 = vand.u32 %v1609, 4294901760
  %v1790 = vsub.f32 %v1609, %v1789
  %v1791 = vand.u32 %v1790, 4294901760
  %v1792 = vsub.f32 %v1790, %v1791
  %v1793 = vand.u32 %v1792, 4294901760
  %1794 = vmatpush1.msra.mxu0 %v1793
  %1795 = vmatprep.subr.mxu0 0.0
  %v1796 = vand.u32 %v1610, 4294901760
  %v1797 = vsub.f32 %v1610, %v1796
  %v1798 = vand.u32 %v1797, 4294901760
  %v1799 = vsub.f32 %v1797, %v1798
  %v1800 = vand.u32 %v1799, 4294901760
  %1801 = vmatpush1.msra.mxu0 %v1800
  %1802 = vmatprep.subr.mxu0 0.0
  %v1803 = vand.u32 %v1611, 4294901760
  %v1804 = vsub.f32 %v1611, %v1803
  %v1805 = vand.u32 %v1804, 4294901760
  %v1806 = vsub.f32 %v1804, %v1805
  %v1807 = vand.u32 %v1806, 4294901760
  %1808 = vmatpush1.msra.mxu0 %v1807
  %1809 = vmatprep.subr.mxu0 0.0
  %v1810 = vand.u32 %v1612, 4294901760
  %v1811 = vsub.f32 %v1612, %v1810
  %v1812 = vand.u32 %v1811, 4294901760
  %v1813 = vsub.f32 %v1811, %v1812
  %v1814 = vand.u32 %v1813, 4294901760
  %1815 = vmatpush1.msra.mxu0 %v1814
  %1816 = vmatprep.subr.mxu0 0.0
  %v1817 = vand.u32 %v1613, 4294901760
  %v1818 = vsub.f32 %v1613, %v1817
  %v1819 = vand.u32 %v1818, 4294901760
  %v1820 = vsub.f32 %v1818, %v1819
  %v1821 = vand.u32 %v1820, 4294901760
  %1822 = vmatpush1.msra.mxu0 %v1821
  %1823 = vmatprep.subr.mxu0 0.0
  %v1824 = vand.u32 %v1614, 4294901760
  %v1825 = vsub.f32 %v1614, %v1824
  %v1826 = vand.u32 %v1825, 4294901760
  %v1827 = vsub.f32 %v1825, %v1826
  %v1828 = vand.u32 %v1827, 4294901760
  %1829 = vmatpush1.msra.mxu0 %v1828
  %1830 = vmatprep.subr.mxu0 0.0
  %v1831 = vand.u32 %v1615, 4294901760
  %v1832 = vsub.f32 %v1615, %v1831
  %v1833 = vand.u32 %v1832, 4294901760
  %v1834 = vsub.f32 %v1832, %v1833
  %v1835 = vand.u32 %v1834, 4294901760
  %1836 = vmatpush1.msra.mxu0 %v1835
  %1837 = vmatprep.subr.mxu0 0.0
  %v1838 = vand.u32 %v1616, 4294901760
  %v1839 = vsub.f32 %v1616, %v1838
  %v1840 = vand.u32 %v1839, 4294901760
  %v1841 = vsub.f32 %v1839, %v1840
  %v1842 = vand.u32 %v1841, 4294901760
  %1843 = vmatpush1.msra.mxu0 %v1842
  %1844 = vmatprep.subr.mxu0 0.0
  %v1845 = vand.u32 %v1617, 4294901760
  %v1846 = vsub.f32 %v1617, %v1845
  %v1847 = vand.u32 %v1846, 4294901760
  %v1848 = vsub.f32 %v1846, %v1847
  %v1849 = vand.u32 %v1848, 4294901760
  %1850 = vmatpush1.msra.mxu0 %v1849
  %1851 = vmatprep.subr.mxu0 0.0
  %1852 = vmatpush1.msra.mxu0 0.0
  %1853 = vmatprep.subr.mxu0 0.0
  %1854 = vmatpush1.msra.mxu0 0.0
  %1855 = vmatprep.subr.mxu0 0.0
  %1856 = vmatpush1.msra.mxu0 0.0
  %1857 = vmatprep.subr.mxu0 0.0
  %1858 = vmatpush1.msra.mxu0 0.0
  %1859 = vmatprep.subr.mxu0 0.0
  %1860 = vmatpush1.msra.mxu0 0.0
  %1861 = vmatprep.subr.mxu0 0.0
  %1862 = vmatpush1.msra.mxu0 0.0
  %1863 = vmatprep.subr.mxu0 0.0
  %1864 = vmatpush1.msra.mxu0 0.0
  %1865 = vmatprep.subr.mxu0 0.0
  %1866 = vmatpush1.msra.mxu0 0.0
  %1867 = vmatprep.subr.mxu0 0.0
  %1868 = vmatpush1.msra.mxu0 0.0
  %1869 = vmatprep.subr.mxu0 0.0
  %1870 = vmatpush1.msra.mxu0 0.0
  %1871 = vmatprep.subr.mxu0 0.0
  %1872 = vmatpush1.msra.mxu0 0.0
  %1873 = vmatprep.subr.mxu0 0.0
  %1874 = vmatpush1.msra.mxu0 0.0
  %1875 = vmatprep.subr.mxu0 0.0
  %1876 = vmatpush1.msra.mxu0 0.0
  %1877 = vmatprep.subr.mxu0 0.0
  %1878 = vmatpush1.msra.mxu0 0.0
  %1879 = vmatprep.subr.mxu0 0.0
  %1880 = vmatpush1.msra.mxu0 0.0
  %1881 = vmatprep.subr.mxu0 0.0
  %1882 = vmatpush1.msra.mxu0 0.0
  %1883 = vmatprep.mubr.f32.mxu0 0.0
  %v1884 = vand.u32 %v1597, 4294901760
  %1885 = vmatmul.mubr.f32.gmra.mrb[0].mxu0 %v1884
  %v1886 = vpop.f32.mrb[0].mxu0
  %v1887 = vadd.f32 %v1706, %v1886
  %v1888 = vpop.f32.mrb[0].mxu0
  %1889 = vmatprep.mubr.f32.mxu0 0.0
  %v1890 = vand.u32 %v1598, 4294901760
  %1891 = vmatmul.mubr.f32.gmra.mrb[0].mxu0 %v1890
  %v1892 = vpop.f32.mrb[0].mxu0
  %v1893 = vadd.f32 %v1716, %v1892
  %v1894 = vpop.f32.mrb[0].mxu0
  %1895 = vmatprep.mubr.f32.mxu0 0.0
  %v1896 = vand.u32 %v1599, 4294901760
  %1897 = vmatmul.mubr.f32.gmra.mrb[0].mxu0 %v1896
  %v1898 = vpop.f32.mrb[0].mxu0
  %v1899 = vadd.f32 %v1726, %v1898
  %v1900 = vpop.f32.mrb[0].mxu0
  %1901 = vmatprep.mubr.f32.mxu0 0.0
  %v1902 = vand.u32 %v1600, 4294901760
  %1903 = vmatmul.mubr.f32.gmra.mrb[0].mxu0 %v1902
  %v1904 = vpop.f32.mrb[0].mxu0
  %v1905 = vadd.f32 %v1736, %v1904
  %v1906 = vpop.f32.mrb[0].mxu0
  %1907 = vdwg.mxu0
  %1908 = vmatprep.subr.mxu0 0.0
  %v1909 = vand.u32 %v1602, 4294901760
  %v1910 = vsub.f32 %v1602, %v1909
  %1911 = vmatpush1.msra.mxu0 %v1910
  %1912 = vmatprep.subr.mxu0 0.0
  %v1913 = vand.u32 %v1603, 4294901760
  %v1914 = vsub.f32 %v1603, %v1913
  %1915 = vmatpush1.msra.mxu0 %v1914
  %1916 = vmatprep.subr.mxu0 0.0
  %v1917 = vand.u32 %v1604, 4294901760
  %v1918 = vsub.f32 %v1604, %v1917
  %1919 = vmatpush1.msra.mxu0 %v1918
  %1920 = vmatprep.subr.mxu0 0.0
  %v1921 = vand.u32 %v1605, 4294901760
  %v1922 = vsub.f32 %v1605, %v1921
  %1923 = vmatpush1.msra.mxu0 %v1922
  %1924 = vmatprep.subr.mxu0 0.0
  %v1925 = vand.u32 %v1606, 4294901760
  %v1926 = vsub.f32 %v1606, %v1925
  %1927 = vmatpush1.msra.mxu0 %v1926
  %1928 = vmatprep.subr.mxu0 0.0
  %v1929 = vand.u32 %v1607, 4294901760
  %v1930 = vsub.f32 %v1607, %v1929
  %1931 = vmatpush1.msra.mxu0 %v1930
  %1932 = vmatprep.subr.mxu0 0.0
  %v1933 = vand.u32 %v1608, 4294901760
  %v1934 = vsub.f32 %v1608, %v1933
  %1935 = vmatpush1.msra.mxu0 %v1934
  %1936 = vmatprep.subr.mxu0 0.0
  %v1937 = vand.u32 %v1609, 4294901760
  %v1938 = vsub.f32 %v1609, %v1937
  %1939 = vmatpush1.msra.mxu0 %v1938
  %1940 = vmatprep.subr.mxu0 0.0
  %v1941 = vand.u32 %v1610, 4294901760
  %v1942 = vsub.f32 %v1610, %v1941
  %1943 = vmatpush1.msra.mxu0 %v1942
  %1944 = vmatprep.subr.mxu0 0.0
  %v1945 = vand.u32 %v1611, 4294901760
  %v1946 = vsub.f32 %v1611, %v1945
  %1947 = vmatpush1.msra.mxu0 %v1946
  %1948 = vmatprep.subr.mxu0 0.0
  %v1949 = vand.u32 %v1612, 4294901760
  %v1950 = vsub.f32 %v1612, %v1949
  %1951 = vmatpush1.msra.mxu0 %v1950
  %1952 = vmatprep.subr.mxu0 0.0
  %v1953 = vand.u32 %v1613, 4294901760
  %v1954 = vsub.f32 %v1613, %v1953
  %1955 = vmatpush1.msra.mxu0 %v1954
  %1956 = vmatprep.subr.mxu0 0.0
  %v1957 = vand.u32 %v1614, 4294901760
  %v1958 = vsub.f32 %v1614, %v1957
  %1959 = vmatpush1.msra.mxu0 %v1958
  %1960 = vmatprep.subr.mxu0 0.0
  %v1961 = vand.u32 %v1615, 4294901760
  %v1962 = vsub.f32 %v1615, %v1961
  %1963 = vmatpush1.msra.mxu0 %v1962
  %1964 = vmatprep.subr.mxu0 0.0
  %v1965 = vand.u32 %v1616, 4294901760
  %v1966 = vsub.f32 %v1616, %v1965
  %1967 = vmatpush1.msra.mxu0 %v1966
  %1968 = vmatprep.subr.mxu0 0.0
  %v1969 = vand.u32 %v1617, 4294901760
  %v1970 = vsub.f32 %v1617, %v1969
  %1971 = vmatpush1.msra.mxu0 %v1970
  %1972 = vmatprep.subr.mxu0 0.0
  %1973 = vmatpush1.msra.mxu0 0.0
  %1974 = vmatprep.subr.mxu0 0.0
  %1975 = vmatpush1.msra.mxu0 0.0
  %1976 = vmatprep.subr.mxu0 0.0
  %1977 = vmatpush1.msra.mxu0 0.0
  %1978 = vmatprep.subr.mxu0 0.0
  %1979 = vmatpush1.msra.mxu0 0.0
  %1980 = vmatprep.subr.mxu0 0.0
  %1981 = vmatpush1.msra.mxu0 0.0
  %1982 = vmatprep.subr.mxu0 0.0
  %1983 = vmatpush1.msra.mxu0 0.0
  %1984 = vmatprep.subr.mxu0 0.0
  %1985 = vmatpush1.msra.mxu0 0.0
  %1986 = vmatprep.subr.mxu0 0.0
  %1987 = vmatpush1.msra.mxu0 0.0
  %1988 = vmatprep.subr.mxu0 0.0
  %1989 = vmatpush1.msra.mxu0 0.0
  %1990 = vmatprep.subr.mxu0 0.0
  %1991 = vmatpush1.msra.mxu0 0.0
  %1992 = vmatprep.subr.mxu0 0.0
  %1993 = vmatpush1.msra.mxu0 0.0
  %1994 = vmatprep.subr.mxu0 0.0
  %1995 = vmatpush1.msra.mxu0 0.0
  %1996 = vmatprep.subr.mxu0 0.0
  %1997 = vmatpush1.msra.mxu0 0.0
  %1998 = vmatprep.subr.mxu0 0.0
  %1999 = vmatpush1.msra.mxu0 0.0
  %2000 = vmatprep.subr.mxu0 0.0
  %2001 = vmatpush1.msra.mxu0 0.0
  %2002 = vmatprep.subr.mxu0 0.0
  %2003 = vmatpush1.msra.mxu0 0.0
  %2004 = vmatprep.mubr.f32.mxu0 0.0
  %v2005 = vand.u32 %v1597, 4294901760
  %v2006 = vsub.f32 %v1597, %v2005
  %2007 = vmatmul.mubr.f32.gmra.mrb[0].mxu0 %v2006
  %v2008 = vpop.f32.mrb[0].mxu0
  %v2009 = vadd.f32 %v1887, %v2008
  %v2010 = vpop.f32.mrb[0].mxu0
  %2011 = vmatprep.mubr.f32.mxu0 0.0
  %v2012 = vand.u32 %v1598, 4294901760
  %v2013 = vsub.f32 %v1598, %v2012
  %2014 = vmatmul.mubr.f32.gmra.mrb[0].mxu0 %v2013
  %v2015 = vpop.f32.mrb[0].mxu0
  %v2016 = vadd.f32 %v1893, %v2015
  %v2017 = vpop.f32.mrb[0].mxu0
  %2018 = vmatprep.mubr.f32.mxu0 0.0
  %v2019 = vand.u32 %v1599, 4294901760
  %v2020 = vsub.f32 %v1599, %v2019
  %2021 = vmatmul.mubr.f32.gmra.mrb[0].mxu0 %v2020
  %v2022 = vpop.f32.mrb[0].mxu0
  %v2023 = vadd.f32 %v1899, %v2022
  %v2024 = vpop.f32.mrb[0].mxu0
  %2025 = vmatprep.mubr.f32.mxu0 0.0
  %v2026 = vand.u32 %v1600, 4294901760
  %v2027 = vsub.f32 %v1600, %v2026
  %2028 = vmatmul.mubr.f32.gmra.mrb[0].mxu0 %v2027
  %v2029 = vpop.f32.mrb[0].mxu0
  %v2030 = vadd.f32 %v1905, %v2029
  %v2031 = vpop.f32.mrb[0].mxu0
  %2032 = vdwg.mxu0
  %2033 = vmatprep.subr.mxu0 0.0
  %v2034 = vand.u32 %v1602, 4294901760
  %2035 = vmatpush1.msra.mxu0 %v2034
  %2036 = vmatprep.subr.mxu0 0.0
  %v2037 = vand.u32 %v1603, 4294901760
  %2038 = vmatpush1.msra.mxu0 %v2037
  %2039 = vmatprep.subr.mxu0 0.0
  %v2040 = vand.u32 %v1604, 4294901760
  %2041 = vmatpush1.msra.mxu0 %v2040
  %2042 = vmatprep.subr.mxu0 0.0
  %v2043 = vand.u32 %v1605, 4294901760
  %2044 = vmatpush1.msra.mxu0 %v2043
  %2045 = vmatprep.subr.mxu0 0.0
  %v2046 = vand.u32 %v1606, 4294901760
  %2047 = vmatpush1.msra.mxu0 %v2046
  %2048 = vmatprep.subr.mxu0 0.0
  %v2049 = vand.u32 %v1607, 4294901760
  %2050 = vmatpush1.msra.mxu0 %v2049
  %2051 = vmatprep.subr.mxu0 0.0
  %v2052 = vand.u32 %v1608, 4294901760
  %2053 = vmatpush1.msra.mxu0 %v2052
  %2054 = vmatprep.subr.mxu0 0.0
  %v2055 = vand.u32 %v1609, 4294901760
  %2056 = vmatpush1.msra.mxu0 %v2055
  %2057 = vmatprep.subr.mxu0 0.0
  %v2058 = vand.u32 %v1610, 4294901760
  %2059 = vmatpush1.msra.mxu0 %v2058
  %2060 = vmatprep.subr.mxu0 0.0
  %v2061 = vand.u32 %v1611, 4294901760
  %2062 = vmatpush1.msra.mxu0 %v2061
  %2063 = vmatprep.subr.mxu0 0.0
  %v2064 = vand.u32 %v1612, 4294901760
  %2065 = vmatpush1.msra.mxu0 %v2064
  %2066 = vmatprep.subr.mxu0 0.0
  %v2067 = vand.u32 %v1613, 4294901760
  %2068 = vmatpush1.msra.mxu0 %v2067
  %2069 = vmatprep.subr.mxu0 0.0
  %v2070 = vand.u32 %v1614, 4294901760
  %2071 = vmatpush1.msra.mxu0 %v2070
  %2072 = vmatprep.subr.mxu0 0.0
  %v2073 = vand.u32 %v1615, 4294901760
  %2074 = vmatpush1.msra.mxu0 %v2073
  %2075 = vmatprep.subr.mxu0 0.0
  %v2076 = vand.u32 %v1616, 4294901760
  %2077 = vmatpush1.msra.mxu0 %v2076
  %2078 = vmatprep.subr.mxu0 0.0
  %v2079 = vand.u32 %v1617, 4294901760
  %2080 = vmatpush1.msra.mxu0 %v2079
  %2081 = vmatprep.subr.mxu0 0.0
  %2082 = vmatpush1.msra.mxu0 0.0
  %2083 = vmatprep.subr.mxu0 0.0
  %2084 = vmatpush1.msra.mxu0 0.0
  %2085 = vmatprep.subr.mxu0 0.0
  %2086 = vmatpush1.msra.mxu0 0.0
  %2087 = vmatprep.subr.mxu0 0.0
  %2088 = vmatpush1.msra.mxu0 0.0
  %2089 = vmatprep.subr.mxu0 0.0
  %2090 = vmatpush1.msra.mxu0 0.0
  %2091 = vmatprep.subr.mxu0 0.0
  %2092 = vmatpush1.msra.mxu0 0.0
  %2093 = vmatprep.subr.mxu0 0.0
  %2094 = vmatpush1.msra.mxu0 0.0
  %2095 = vmatprep.subr.mxu0 0.0
  %2096 = vmatpush1.msra.mxu0 0.0
  %2097 = vmatprep.subr.mxu0 0.0
  %2098 = vmatpush1.msra.mxu0 0.0
  %2099 = vmatprep.subr.mxu0 0.0
  %2100 = vmatpush1.msra.mxu0 0.0
  %2101 = vmatprep.subr.mxu0 0.0
  %2102 = vmatpush1.msra.mxu0 0.0
  %2103 = vmatprep.subr.mxu0 0.0
  %2104 = vmatpush1.msra.mxu0 0.0
  %2105 = vmatprep.subr.mxu0 0.0
  %2106 = vmatpush1.msra.mxu0 0.0
  %2107 = vmatprep.subr.mxu0 0.0
  %2108 = vmatpush1.msra.mxu0 0.0
  %2109 = vmatprep.subr.mxu0 0.0
  %2110 = vmatpush1.msra.mxu0 0.0
  %2111 = vmatprep.subr.mxu0 0.0
  %2112 = vmatpush1.msra.mxu0 0.0
  %2113 = vmatprep.mubr.f32.mxu0 0.0
  %v2114 = vand.u32 %v1597, 4294901760
  %v2115 = vsub.f32 %v1597, %v2114
  %v2116 = vand.u32 %v2115, 4294901760
  %2117 = vmatmul.mubr.f32.gmra.mrb[0].mxu0 %v2116
  %v2118 = vpop.f32.mrb[0].mxu0
  %v2119 = vadd.f32 %v2009, %v2118
  %v2120 = vpop.f32.mrb[0].mxu0
  %2121 = vmatprep.mubr.f32.mxu0 0.0
  %v2122 = vand.u32 %v1598, 4294901760
  %v2123 = vsub.f32 %v1598, %v2122
  %v2124 = vand.u32 %v2123, 4294901760
  %2125 = vmatmul.mubr.f32.gmra.mrb[0].mxu0 %v2124
  %v2126 = vpop.f32.mrb[0].mxu0
  %v2127 = vadd.f32 %v2016, %v2126
  %v2128 = vpop.f32.mrb[0].mxu0
  %2129 = vmatprep.mubr.f32.mxu0 0.0
  %v2130 = vand.u32 %v1599, 4294901760
  %v2131 = vsub.f32 %v1599, %v2130
  %v2132 = vand.u32 %v2131, 4294901760
  %2133 = vmatmul.mubr.f32.gmra.mrb[0].mxu0 %v2132
  %v2134 = vpop.f32.mrb[0].mxu0
  %v2135 = vadd.f32 %v2023, %v2134
  %v2136 = vpop.f32.mrb[0].mxu0
  %2137 = vmatprep.mubr.f32.mxu0 0.0
  %v2138 = vand.u32 %v1600, 4294901760
  %v2139 = vsub.f32 %v1600, %v2138
  %v2140 = vand.u32 %v2139, 4294901760
  %2141 = vmatmul.mubr.f32.gmra.mrb[0].mxu0 %v2140
  %v2142 = vpop.f32.mrb[0].mxu0
  %v2143 = vadd.f32 %v2030, %v2142
  %v2144 = vpop.f32.mrb[0].mxu0
  %2145 = vdwg.mxu0
  %2146 = vmatprep.subr.mxu0 0.0
  %v2147 = vand.u32 %v1602, 4294901760
  %v2148 = vsub.f32 %v1602, %v2147
  %v2149 = vand.u32 %v2148, 4294901760
  %2150 = vmatpush1.msra.mxu0 %v2149
  %2151 = vmatprep.subr.mxu0 0.0
  %v2152 = vand.u32 %v1603, 4294901760
  %v2153 = vsub.f32 %v1603, %v2152
  %v2154 = vand.u32 %v2153, 4294901760
  %2155 = vmatpush1.msra.mxu0 %v2154
  %2156 = vmatprep.subr.mxu0 0.0
  %v2157 = vand.u32 %v1604, 4294901760
  %v2158 = vsub.f32 %v1604, %v2157
  %v2159 = vand.u32 %v2158, 4294901760
  %2160 = vmatpush1.msra.mxu0 %v2159
  %2161 = vmatprep.subr.mxu0 0.0
  %v2162 = vand.u32 %v1605, 4294901760
  %v2163 = vsub.f32 %v1605, %v2162
  %v2164 = vand.u32 %v2163, 4294901760
  %2165 = vmatpush1.msra.mxu0 %v2164
  %2166 = vmatprep.subr.mxu0 0.0
  %v2167 = vand.u32 %v1606, 4294901760
  %v2168 = vsub.f32 %v1606, %v2167
  %v2169 = vand.u32 %v2168, 4294901760
  %2170 = vmatpush1.msra.mxu0 %v2169
  %2171 = vmatprep.subr.mxu0 0.0
  %v2172 = vand.u32 %v1607, 4294901760
  %v2173 = vsub.f32 %v1607, %v2172
  %v2174 = vand.u32 %v2173, 4294901760
  %2175 = vmatpush1.msra.mxu0 %v2174
  %2176 = vmatprep.subr.mxu0 0.0
  %v2177 = vand.u32 %v1608, 4294901760
  %v2178 = vsub.f32 %v1608, %v2177
  %v2179 = vand.u32 %v2178, 4294901760
  %2180 = vmatpush1.msra.mxu0 %v2179
  %2181 = vmatprep.subr.mxu0 0.0
  %v2182 = vand.u32 %v1609, 4294901760
  %v2183 = vsub.f32 %v1609, %v2182
  %v2184 = vand.u32 %v2183, 4294901760
  %2185 = vmatpush1.msra.mxu0 %v2184
  %2186 = vmatprep.subr.mxu0 0.0
  %v2187 = vand.u32 %v1610, 4294901760
  %v2188 = vsub.f32 %v1610, %v2187
  %v2189 = vand.u32 %v2188, 4294901760
  %2190 = vmatpush1.msra.mxu0 %v2189
  %2191 = vmatprep.subr.mxu0 0.0
  %v2192 = vand.u32 %v1611, 4294901760
  %v2193 = vsub.f32 %v1611, %v2192
  %v2194 = vand.u32 %v2193, 4294901760
  %2195 = vmatpush1.msra.mxu0 %v2194
  %2196 = vmatprep.subr.mxu0 0.0
  %v2197 = vand.u32 %v1612, 4294901760
  %v2198 = vsub.f32 %v1612, %v2197
  %v2199 = vand.u32 %v2198, 4294901760
  %2200 = vmatpush1.msra.mxu0 %v2199
  %2201 = vmatprep.subr.mxu0 0.0
  %v2202 = vand.u32 %v1613, 4294901760
  %v2203 = vsub.f32 %v1613, %v2202
  %v2204 = vand.u32 %v2203, 4294901760
  %2205 = vmatpush1.msra.mxu0 %v2204
  %2206 = vmatprep.subr.mxu0 0.0
  %v2207 = vand.u32 %v1614, 4294901760
  %v2208 = vsub.f32 %v1614, %v2207
  %v2209 = vand.u32 %v2208, 4294901760
  %2210 = vmatpush1.msra.mxu0 %v2209
  %2211 = vmatprep.subr.mxu0 0.0
  %v2212 = vand.u32 %v1615, 4294901760
  %v2213 = vsub.f32 %v1615, %v2212
  %v2214 = vand.u32 %v2213, 4294901760
  %2215 = vmatpush1.msra.mxu0 %v2214
  %2216 = vmatprep.subr.mxu0 0.0
  %v2217 = vand.u32 %v1616, 4294901760
  %v2218 = vsub.f32 %v1616, %v2217
  %v2219 = vand.u32 %v2218, 4294901760
  %2220 = vmatpush1.msra.mxu0 %v2219
  %2221 = vmatprep.subr.mxu0 0.0
  %v2222 = vand.u32 %v1617, 4294901760
  %v2223 = vsub.f32 %v1617, %v2222
  %v2224 = vand.u32 %v2223, 4294901760
  %2225 = vmatpush1.msra.mxu0 %v2224
  %2226 = vmatprep.subr.mxu0 0.0
  %2227 = vmatpush1.msra.mxu0 0.0
  %2228 = vmatprep.subr.mxu0 0.0
  %2229 = vmatpush1.msra.mxu0 0.0
  %2230 = vmatprep.subr.mxu0 0.0
  %2231 = vmatpush1.msra.mxu0 0.0
  %2232 = vmatprep.subr.mxu0 0.0
  %2233 = vmatpush1.msra.mxu0 0.0
  %2234 = vmatprep.subr.mxu0 0.0
  %2235 = vmatpush1.msra.mxu0 0.0
  %2236 = vmatprep.subr.mxu0 0.0
  %2237 = vmatpush1.msra.mxu0 0.0
  %2238 = vmatprep.subr.mxu0 0.0
  %2239 = vmatpush1.msra.mxu0 0.0
  %2240 = vmatprep.subr.mxu0 0.0
  %2241 = vmatpush1.msra.mxu0 0.0
  %2242 = vmatprep.subr.mxu0 0.0
  %2243 = vmatpush1.msra.mxu0 0.0
  %2244 = vmatprep.subr.mxu0 0.0
  %2245 = vmatpush1.msra.mxu0 0.0
  %2246 = vmatprep.subr.mxu0 0.0
  %2247 = vmatpush1.msra.mxu0 0.0
  %2248 = vmatprep.subr.mxu0 0.0
  %2249 = vmatpush1.msra.mxu0 0.0
  %2250 = vmatprep.subr.mxu0 0.0
  %2251 = vmatpush1.msra.mxu0 0.0
  %2252 = vmatprep.subr.mxu0 0.0
  %2253 = vmatpush1.msra.mxu0 0.0
  %2254 = vmatprep.subr.mxu0 0.0
  %2255 = vmatpush1.msra.mxu0 0.0
  %2256 = vmatprep.subr.mxu0 0.0
  %2257 = vmatpush1.msra.mxu0 0.0
  %2258 = vmatprep.mubr.f32.mxu0 0.0
  %v2259 = vand.u32 %v1597, 4294901760
  %2260 = vmatmul.mubr.f32.gmra.mrb[0].mxu0 %v2259
  %v2261 = vpop.f32.mrb[0].mxu0
  %v2262 = vadd.f32 %v2119, %v2261
  %v2263 = vpop.f32.mrb[0].mxu0
  %2264 = vmatprep.mubr.f32.mxu0 0.0
  %v2265 = vand.u32 %v1598, 4294901760
  %2266 = vmatmul.mubr.f32.gmra.mrb[0].mxu0 %v2265
  %v2267 = vpop.f32.mrb[0].mxu0
  %v2268 = vadd.f32 %v2127, %v2267
  %v2269 = vpop.f32.mrb[0].mxu0
  %2270 = vmatprep.mubr.f32.mxu0 0.0
  %v2271 = vand.u32 %v1599, 4294901760
  %2272 = vmatmul.mubr.f32.gmra.mrb[0].mxu0 %v2271
  %v2273 = vpop.f32.mrb[0].mxu0
  %v2274 = vadd.f32 %v2135, %v2273
  %v2275 = vpop.f32.mrb[0].mxu0
  %2276 = vmatprep.mubr.f32.mxu0 0.0
  %v2277 = vand.u32 %v1600, 4294901760
  %2278 = vmatmul.mubr.f32.gmra.mrb[0].mxu0 %v2277
  %v2279 = vpop.f32.mrb[0].mxu0
  %v2280 = vadd.f32 %v2143, %v2279
  %v2281 = vpop.f32.mrb[0].mxu0
  %2282 = vdwg.mxu0
  %2283 = vmatprep.subr.mxu0 0.0
  %v2284 = vand.u32 %v1602, 4294901760
  %2285 = vmatpush1.msra.mxu0 %v2284
  %2286 = vmatprep.subr.mxu0 0.0
  %v2287 = vand.u32 %v1603, 4294901760
  %2288 = vmatpush1.msra.mxu0 %v2287
  %2289 = vmatprep.subr.mxu0 0.0
  %v2290 = vand.u32 %v1604, 4294901760
  %2291 = vmatpush1.msra.mxu0 %v2290
  %2292 = vmatprep.subr.mxu0 0.0
  %v2293 = vand.u32 %v1605, 4294901760
  %2294 = vmatpush1.msra.mxu0 %v2293
  %2295 = vmatprep.subr.mxu0 0.0
  %v2296 = vand.u32 %v1606, 4294901760
  %2297 = vmatpush1.msra.mxu0 %v2296
  %2298 = vmatprep.subr.mxu0 0.0
  %v2299 = vand.u32 %v1607, 4294901760
  %2300 = vmatpush1.msra.mxu0 %v2299
  %2301 = vmatprep.subr.mxu0 0.0
  %v2302 = vand.u32 %v1608, 4294901760
  %2303 = vmatpush1.msra.mxu0 %v2302
  %2304 = vmatprep.subr.mxu0 0.0
  %v2305 = vand.u32 %v1609, 4294901760
  %2306 = vmatpush1.msra.mxu0 %v2305
  %2307 = vmatprep.subr.mxu0 0.0
  %v2308 = vand.u32 %v1610, 4294901760
  %2309 = vmatpush1.msra.mxu0 %v2308
  %2310 = vmatprep.subr.mxu0 0.0
  %v2311 = vand.u32 %v1611, 4294901760
  %2312 = vmatpush1.msra.mxu0 %v2311
  %2313 = vmatprep.subr.mxu0 0.0
  %v2314 = vand.u32 %v1612, 4294901760
  %2315 = vmatpush1.msra.mxu0 %v2314
  %2316 = vmatprep.subr.mxu0 0.0
  %v2317 = vand.u32 %v1613, 4294901760
  %2318 = vmatpush1.msra.mxu0 %v2317
  %2319 = vmatprep.subr.mxu0 0.0
  %v2320 = vand.u32 %v1614, 4294901760
  %2321 = vmatpush1.msra.mxu0 %v2320
  %2322 = vmatprep.subr.mxu0 0.0
  %v2323 = vand.u32 %v1615, 4294901760
  %2324 = vmatpush1.msra.mxu0 %v2323
  %2325 = vmatprep.subr.mxu0 0.0
  %v2326 = vand.u32 %v1616, 4294901760
  %2327 = vmatpush1.msra.mxu0 %v2326
  %2328 = vmatprep.subr.mxu0 0.0
  %v2329 = vand.u32 %v1617, 4294901760
  %2330 = vmatpush1.msra.mxu0 %v2329
  %2331 = vmatprep.subr.mxu0 0.0
  %2332 = vmatpush1.msra.mxu0 0.0
  %2333 = vmatprep.subr.mxu0 0.0
  %2334 = vmatpush1.msra.mxu0 0.0
  %2335 = vmatprep.subr.mxu0 0.0
  %2336 = vmatpush1.msra.mxu0 0.0
  %2337 = vmatprep.subr.mxu0 0.0
  %2338 = vmatpush1.msra.mxu0 0.0
  %2339 = vmatprep.subr.mxu0 0.0
  %2340 = vmatpush1.msra.mxu0 0.0
  %2341 = vmatprep.subr.mxu0 0.0
  %2342 = vmatpush1.msra.mxu0 0.0
  %2343 = vmatprep.subr.mxu0 0.0
  %2344 = vmatpush1.msra.mxu0 0.0
  %2345 = vmatprep.subr.mxu0 0.0
  %2346 = vmatpush1.msra.mxu0 0.0
  %2347 = vmatprep.subr.mxu0 0.0
  %2348 = vmatpush1.msra.mxu0 0.0
  %2349 = vmatprep.subr.mxu0 0.0
  %2350 = vmatpush1.msra.mxu0 0.0
  %2351 = vmatprep.subr.mxu0 0.0
  %2352 = vmatpush1.msra.mxu0 0.0
  %2353 = vmatprep.subr.mxu0 0.0
  %2354 = vmatpush1.msra.mxu0 0.0
  %2355 = vmatprep.subr.mxu0 0.0
  %2356 = vmatpush1.msra.mxu0 0.0
  %2357 = vmatprep.subr.mxu0 0.0
  %2358 = vmatpush1.msra.mxu0 0.0
  %2359 = vmatprep.subr.mxu0 0.0
  %2360 = vmatpush1.msra.mxu0 0.0
  %2361 = vmatprep.subr.mxu0 0.0
  %2362 = vmatpush1.msra.mxu0 0.0
  %2363 = vmatprep.mubr.f32.mxu0 0.0
  %v2364 = vand.u32 %v1597, 4294901760
  %2365 = vmatmul.mubr.f32.gmra.mrb[0].mxu0 %v2364
  %v2366 = vpop.f32.mrb[0].mxu0
  %v2367 = vadd.f32 %v2262, %v2366
  %v2368 = vpop.f32.mrb[0].mxu0
  %2369 = vmatprep.mubr.f32.mxu0 0.0
  %v2370 = vand.u32 %v1598, 4294901760
  %2371 = vmatmul.mubr.f32.gmra.mrb[0].mxu0 %v2370
  %v2372 = vpop.f32.mrb[0].mxu0
  %v2373 = vadd.f32 %v2268, %v2372
  %v2374 = vpop.f32.mrb[0].mxu0
  %2375 = vmatprep.mubr.f32.mxu0 0.0
  %v2376 = vand.u32 %v1599, 4294901760
  %2377 = vmatmul.mubr.f32.gmra.mrb[0].mxu0 %v2376
  %v2378 = vpop.f32.mrb[0].mxu0
  %v2379 = vadd.f32 %v2274, %v2378
  %v2380 = vpop.f32.mrb[0].mxu0
  %2381 = vmatprep.mubr.f32.mxu0 0.0
  %v2382 = vand.u32 %v1600, 4294901760
  %2383 = vmatmul.mubr.f32.gmra.mrb[0].mxu0 %v2382
  %v2384 = vpop.f32.mrb[0].mxu0
  %v2385 = vadd.f32 %v2280, %v2384
  %v2386 = vpop.f32.mrb[0].mxu0
  %2387 = vdwg.mxu0
  %v2388 = vadd.f32 %v1576, %v2367
  %v2389 = vadd.f32 %v1582, %v2373
  %v2390 = vadd.f32 %v1588, %v2379
  %v2391 = vadd.f32 %v1594, %v2385
  %v2392 = vld [vmem:[%s0 + $0x4] sm:$0xff]
  %v2393 = vld [vmem:[%s0 + $0xc] sm:$0xff]
  %v2394 = vld [vmem:[%s0 + $0x1c] sm:$0xff]
  %v2395 = vld [vmem:[%s0 + $0x24] sm:$0xff]
  %s2396 = scalar_lea.vmem %s1, 384
  %v2397 = vld [vmem:[%s2396] sm:$0xff]
  %v2398 = vld [vmem:[%s2396 + $0x8] sm:$0xff]
  %v2399 = vld [vmem:[%s2396 + $0x10] sm:$0xff]
  %v2400 = vld [vmem:[%s2396 + $0x18] sm:$0xff]
  %v2401 = vld [vmem:[%s2396 + $0x20] sm:$0xff]
  %v2402 = vld [vmem:[%s2396 + $0x28] sm:$0xff]
  %v2403 = vld [vmem:[%s2396 + $0x30] sm:$0xff]
  %v2404 = vld [vmem:[%s2396 + $0x38] sm:$0xff]
  %v2405 = vld [vmem:[%s2396 + $0x40] sm:$0xff]
  %v2406 = vld [vmem:[%s2396 + $0x48] sm:$0xff]
  %v2407 = vld [vmem:[%s2396 + $0x50] sm:$0xff]
  %v2408 = vld [vmem:[%s2396 + $0x58] sm:$0xff]
  %v2409 = vld [vmem:[%s2396 + $0x60] sm:$0xff]
  %v2410 = vld [vmem:[%s2396 + $0x68] sm:$0xff]
  %v2411 = vld [vmem:[%s2396 + $0x70] sm:$0xff]
  %v2412 = vld [vmem:[%s2396 + $0x78] sm:$0xff]
  %2413 = vmatprep.subr.mxu0 0.0
  %v2414 = vand.u32 %v2397, 4294901760
  %2415 = vmatpush1.msra.mxu0 %v2414
  %2416 = vmatprep.subr.mxu0 0.0
  %v2417 = vand.u32 %v2398, 4294901760
  %2418 = vmatpush1.msra.mxu0 %v2417
  %2419 = vmatprep.subr.mxu0 0.0
  %v2420 = vand.u32 %v2399, 4294901760
  %2421 = vmatpush1.msra.mxu0 %v2420
  %2422 = vmatprep.subr.mxu0 0.0
  %v2423 = vand.u32 %v2400, 4294901760
  %2424 = vmatpush1.msra.mxu0 %v2423
  %2425 = vmatprep.subr.mxu0 0.0
  %v2426 = vand.u32 %v2401, 4294901760
  %2427 = vmatpush1.msra.mxu0 %v2426
  %2428 = vmatprep.subr.mxu0 0.0
  %v2429 = vand.u32 %v2402, 4294901760
  %2430 = vmatpush1.msra.mxu0 %v2429
  %2431 = vmatprep.subr.mxu0 0.0
  %v2432 = vand.u32 %v2403, 4294901760
  %2433 = vmatpush1.msra.mxu0 %v2432
  %2434 = vmatprep.subr.mxu0 0.0
  %v2435 = vand.u32 %v2404, 4294901760
  %2436 = vmatpush1.msra.mxu0 %v2435
  %2437 = vmatprep.subr.mxu0 0.0
  %v2438 = vand.u32 %v2405, 4294901760
  %2439 = vmatpush1.msra.mxu0 %v2438
  %2440 = vmatprep.subr.mxu0 0.0
  %v2441 = vand.u32 %v2406, 4294901760
  %2442 = vmatpush1.msra.mxu0 %v2441
  %2443 = vmatprep.subr.mxu0 0.0
  %v2444 = vand.u32 %v2407, 4294901760
  %2445 = vmatpush1.msra.mxu0 %v2444
  %2446 = vmatprep.subr.mxu0 0.0
  %v2447 = vand.u32 %v2408, 4294901760
  %2448 = vmatpush1.msra.mxu0 %v2447
  %2449 = vmatprep.subr.mxu0 0.0
  %v2450 = vand.u32 %v2409, 4294901760
  %2451 = vmatpush1.msra.mxu0 %v2450
  %2452 = vmatprep.subr.mxu0 0.0
  %v2453 = vand.u32 %v2410, 4294901760
  %2454 = vmatpush1.msra.mxu0 %v2453
  %2455 = vmatprep.subr.mxu0 0.0
  %v2456 = vand.u32 %v2411, 4294901760
  %2457 = vmatpush1.msra.mxu0 %v2456
  %2458 = vmatprep.subr.mxu0 0.0
  %v2459 = vand.u32 %v2412, 4294901760
  %2460 = vmatpush1.msra.mxu0 %v2459
  %2461 = vmatprep.subr.mxu0 0.0
  %2462 = vmatpush1.msra.mxu0 0.0
  %2463 = vmatprep.subr.mxu0 0.0
  %2464 = vmatpush1.msra.mxu0 0.0
  %2465 = vmatprep.subr.mxu0 0.0
  %2466 = vmatpush1.msra.mxu0 0.0
  %2467 = vmatprep.subr.mxu0 0.0
  %2468 = vmatpush1.msra.mxu0 0.0
  %2469 = vmatprep.subr.mxu0 0.0
  %2470 = vmatpush1.msra.mxu0 0.0
  %2471 = vmatprep.subr.mxu0 0.0
  %2472 = vmatpush1.msra.mxu0 0.0
  %2473 = vmatprep.subr.mxu0 0.0
  %2474 = vmatpush1.msra.mxu0 0.0
  %2475 = vmatprep.subr.mxu0 0.0
  %2476 = vmatpush1.msra.mxu0 0.0
  %2477 = vmatprep.subr.mxu0 0.0
  %2478 = vmatpush1.msra.mxu0 0.0
  %2479 = vmatprep.subr.mxu0 0.0
  %2480 = vmatpush1.msra.mxu0 0.0
  %2481 = vmatprep.subr.mxu0 0.0
  %2482 = vmatpush1.msra.mxu0 0.0
  %2483 = vmatprep.subr.mxu0 0.0
  %2484 = vmatpush1.msra.mxu0 0.0
  %2485 = vmatprep.subr.mxu0 0.0
  %2486 = vmatpush1.msra.mxu0 0.0
  %2487 = vmatprep.subr.mxu0 0.0
  %2488 = vmatpush1.msra.mxu0 0.0
  %2489 = vmatprep.subr.mxu0 0.0
  %2490 = vmatpush1.msra.mxu0 0.0
  %2491 = vmatprep.subr.mxu0 0.0
  %2492 = vmatpush1.msra.mxu0 0.0
  %2493 = vmatprep.mubr.f32.mxu0 0.0
  %v2494 = vand.u32 %v2392, 4294901760
  %v2495 = vsub.f32 %v2392, %v2494
  %v2496 = vand.u32 %v2495, 4294901760
  %v2497 = vsub.f32 %v2495, %v2496
  %v2498 = vand.u32 %v2497, 4294901760
  %2499 = vmatmul.mubr.f32.gmra.mrb[0].mxu0 %v2498
  %v2500 = vpop.f32.mrb[0].mxu0
  %v2501 = vadd.f32 0.0, %v2500
  %v2502 = vpop.f32.mrb[0].mxu0
  %2503 = vmatprep.mubr.f32.mxu0 0.0
  %v2504 = vand.u32 %v2393, 4294901760
  %v2505 = vsub.f32 %v2393, %v2504
  %v2506 = vand.u32 %v2505, 4294901760
  %v2507 = vsub.f32 %v2505, %v2506
  %v2508 = vand.u32 %v2507, 4294901760
  %2509 = vmatmul.mubr.f32.gmra.mrb[0].mxu0 %v2508
  %v2510 = vpop.f32.mrb[0].mxu0
  %v2511 = vadd.f32 0.0, %v2510
  %v2512 = vpop.f32.mrb[0].mxu0
  %2513 = vmatprep.mubr.f32.mxu0 0.0
  %v2514 = vand.u32 %v2394, 4294901760
  %v2515 = vsub.f32 %v2394, %v2514
  %v2516 = vand.u32 %v2515, 4294901760
  %v2517 = vsub.f32 %v2515, %v2516
  %v2518 = vand.u32 %v2517, 4294901760
  %2519 = vmatmul.mubr.f32.gmra.mrb[0].mxu0 %v2518
  %v2520 = vpop.f32.mrb[0].mxu0
  %v2521 = vadd.f32 0.0, %v2520
  %v2522 = vpop.f32.mrb[0].mxu0
  %2523 = vmatprep.mubr.f32.mxu0 0.0
  %v2524 = vand.u32 %v2395, 4294901760
  %v2525 = vsub.f32 %v2395, %v2524
  %v2526 = vand.u32 %v2525, 4294901760
  %v2527 = vsub.f32 %v2525, %v2526
  %v2528 = vand.u32 %v2527, 4294901760
  %2529 = vmatmul.mubr.f32.gmra.mrb[0].mxu0 %v2528
  %v2530 = vpop.f32.mrb[0].mxu0
  %v2531 = vadd.f32 0.0, %v2530
  %v2532 = vpop.f32.mrb[0].mxu0
  %2533 = vdwg.mxu0
  %2534 = vmatprep.subr.mxu0 0.0
  %v2535 = vand.u32 %v2397, 4294901760
  %v2536 = vsub.f32 %v2397, %v2535
  %v2537 = vand.u32 %v2536, 4294901760
  %v2538 = vsub.f32 %v2536, %v2537
  %v2539 = vand.u32 %v2538, 4294901760
  %2540 = vmatpush1.msra.mxu0 %v2539
  %2541 = vmatprep.subr.mxu0 0.0
  %v2542 = vand.u32 %v2398, 4294901760
  %v2543 = vsub.f32 %v2398, %v2542
  %v2544 = vand.u32 %v2543, 4294901760
  %v2545 = vsub.f32 %v2543, %v2544
  %v2546 = vand.u32 %v2545, 4294901760
  %2547 = vmatpush1.msra.mxu0 %v2546
  %2548 = vmatprep.subr.mxu0 0.0
  %v2549 = vand.u32 %v2399, 4294901760
  %v2550 = vsub.f32 %v2399, %v2549
  %v2551 = vand.u32 %v2550, 4294901760
  %v2552 = vsub.f32 %v2550, %v2551
  %v2553 = vand.u32 %v2552, 4294901760
  %2554 = vmatpush1.msra.mxu0 %v2553
  %2555 = vmatprep.subr.mxu0 0.0
  %v2556 = vand.u32 %v2400, 4294901760
  %v2557 = vsub.f32 %v2400, %v2556
  %v2558 = vand.u32 %v2557, 4294901760
  %v2559 = vsub.f32 %v2557, %v2558
  %v2560 = vand.u32 %v2559, 4294901760
  %2561 = vmatpush1.msra.mxu0 %v2560
  %2562 = vmatprep.subr.mxu0 0.0
  %v2563 = vand.u32 %v2401, 4294901760
  %v2564 = vsub.f32 %v2401, %v2563
  %v2565 = vand.u32 %v2564, 4294901760
  %v2566 = vsub.f32 %v2564, %v2565
  %v2567 = vand.u32 %v2566, 4294901760
  %2568 = vmatpush1.msra.mxu0 %v2567
  %2569 = vmatprep.subr.mxu0 0.0
  %v2570 = vand.u32 %v2402, 4294901760
  %v2571 = vsub.f32 %v2402, %v2570
  %v2572 = vand.u32 %v2571, 4294901760
  %v2573 = vsub.f32 %v2571, %v2572
  %v2574 = vand.u32 %v2573, 4294901760
  %2575 = vmatpush1.msra.mxu0 %v2574
  %2576 = vmatprep.subr.mxu0 0.0
  %v2577 = vand.u32 %v2403, 4294901760
  %v2578 = vsub.f32 %v2403, %v2577
  %v2579 = vand.u32 %v2578, 4294901760
  %v2580 = vsub.f32 %v2578, %v2579
  %v2581 = vand.u32 %v2580, 4294901760
  %2582 = vmatpush1.msra.mxu0 %v2581
  %2583 = vmatprep.subr.mxu0 0.0
  %v2584 = vand.u32 %v2404, 4294901760
  %v2585 = vsub.f32 %v2404, %v2584
  %v2586 = vand.u32 %v2585, 4294901760
  %v2587 = vsub.f32 %v2585, %v2586
  %v2588 = vand.u32 %v2587, 4294901760
  %2589 = vmatpush1.msra.mxu0 %v2588
  %2590 = vmatprep.subr.mxu0 0.0
  %v2591 = vand.u32 %v2405, 4294901760
  %v2592 = vsub.f32 %v2405, %v2591
  %v2593 = vand.u32 %v2592, 4294901760
  %v2594 = vsub.f32 %v2592, %v2593
  %v2595 = vand.u32 %v2594, 4294901760
  %2596 = vmatpush1.msra.mxu0 %v2595
  %2597 = vmatprep.subr.mxu0 0.0
  %v2598 = vand.u32 %v2406, 4294901760
  %v2599 = vsub.f32 %v2406, %v2598
  %v2600 = vand.u32 %v2599, 4294901760
  %v2601 = vsub.f32 %v2599, %v2600
  %v2602 = vand.u32 %v2601, 4294901760
  %2603 = vmatpush1.msra.mxu0 %v2602
  %2604 = vmatprep.subr.mxu0 0.0
  %v2605 = vand.u32 %v2407, 4294901760
  %v2606 = vsub.f32 %v2407, %v2605
  %v2607 = vand.u32 %v2606, 4294901760
  %v2608 = vsub.f32 %v2606, %v2607
  %v2609 = vand.u32 %v2608, 4294901760
  %2610 = vmatpush1.msra.mxu0 %v2609
  %2611 = vmatprep.subr.mxu0 0.0
  %v2612 = vand.u32 %v2408, 4294901760
  %v2613 = vsub.f32 %v2408, %v2612
  %v2614 = vand.u32 %v2613, 4294901760
  %v2615 = vsub.f32 %v2613, %v2614
  %v2616 = vand.u32 %v2615, 4294901760
  %2617 = vmatpush1.msra.mxu0 %v2616
  %2618 = vmatprep.subr.mxu0 0.0
  %v2619 = vand.u32 %v2409, 4294901760
  %v2620 = vsub.f32 %v2409, %v2619
  %v2621 = vand.u32 %v2620, 4294901760
  %v2622 = vsub.f32 %v2620, %v2621
  %v2623 = vand.u32 %v2622, 4294901760
  %2624 = vmatpush1.msra.mxu0 %v2623
  %2625 = vmatprep.subr.mxu0 0.0
  %v2626 = vand.u32 %v2410, 4294901760
  %v2627 = vsub.f32 %v2410, %v2626
  %v2628 = vand.u32 %v2627, 4294901760
  %v2629 = vsub.f32 %v2627, %v2628
  %v2630 = vand.u32 %v2629, 4294901760
  %2631 = vmatpush1.msra.mxu0 %v2630
  %2632 = vmatprep.subr.mxu0 0.0
  %v2633 = vand.u32 %v2411, 4294901760
  %v2634 = vsub.f32 %v2411, %v2633
  %v2635 = vand.u32 %v2634, 4294901760
  %v2636 = vsub.f32 %v2634, %v2635
  %v2637 = vand.u32 %v2636, 4294901760
  %2638 = vmatpush1.msra.mxu0 %v2637
  %2639 = vmatprep.subr.mxu0 0.0
  %v2640 = vand.u32 %v2412, 4294901760
  %v2641 = vsub.f32 %v2412, %v2640
  %v2642 = vand.u32 %v2641, 4294901760
  %v2643 = vsub.f32 %v2641, %v2642
  %v2644 = vand.u32 %v2643, 4294901760
  %2645 = vmatpush1.msra.mxu0 %v2644
  %2646 = vmatprep.subr.mxu0 0.0
  %2647 = vmatpush1.msra.mxu0 0.0
  %2648 = vmatprep.subr.mxu0 0.0
  %2649 = vmatpush1.msra.mxu0 0.0
  %2650 = vmatprep.subr.mxu0 0.0
  %2651 = vmatpush1.msra.mxu0 0.0
  %2652 = vmatprep.subr.mxu0 0.0
  %2653 = vmatpush1.msra.mxu0 0.0
  %2654 = vmatprep.subr.mxu0 0.0
  %2655 = vmatpush1.msra.mxu0 0.0
  %2656 = vmatprep.subr.mxu0 0.0
  %2657 = vmatpush1.msra.mxu0 0.0
  %2658 = vmatprep.subr.mxu0 0.0
  %2659 = vmatpush1.msra.mxu0 0.0
  %2660 = vmatprep.subr.mxu0 0.0
  %2661 = vmatpush1.msra.mxu0 0.0
  %2662 = vmatprep.subr.mxu0 0.0
  %2663 = vmatpush1.msra.mxu0 0.0
  %2664 = vmatprep.subr.mxu0 0.0
  %2665 = vmatpush1.msra.mxu0 0.0
  %2666 = vmatprep.subr.mxu0 0.0
  %2667 = vmatpush1.msra.mxu0 0.0
  %2668 = vmatprep.subr.mxu0 0.0
  %2669 = vmatpush1.msra.mxu0 0.0
  %2670 = vmatprep.subr.mxu0 0.0
  %2671 = vmatpush1.msra.mxu0 0.0
  %2672 = vmatprep.subr.mxu0 0.0
  %2673 = vmatpush1.msra.mxu0 0.0
  %2674 = vmatprep.subr.mxu0 0.0
  %2675 = vmatpush1.msra.mxu0 0.0
  %2676 = vmatprep.subr.mxu0 0.0
  %2677 = vmatpush1.msra.mxu0 0.0
  %2678 = vmatprep.mubr.f32.mxu0 0.0
  %v2679 = vand.u32 %v2392, 4294901760
  %2680 = vmatmul.mubr.f32.gmra.mrb[0].mxu0 %v2679
  %v2681 = vpop.f32.mrb[0].mxu0
  %v2682 = vadd.f32 %v2501, %v2681
  %v2683 = vpop.f32.mrb[0].mxu0
  %2684 = vmatprep.mubr.f32.mxu0 0.0
  %v2685 = vand.u32 %v2393, 4294901760
  %2686 = vmatmul.mubr.f32.gmra.mrb[0].mxu0 %v2685
  %v2687 = vpop.f32.mrb[0].mxu0
  %v2688 = vadd.f32 %v2511, %v2687
  %v2689 = vpop.f32.mrb[0].mxu0
  %2690 = vmatprep.mubr.f32.mxu0 0.0
  %v2691 = vand.u32 %v2394, 4294901760
  %2692 = vmatmul.mubr.f32.gmra.mrb[0].mxu0 %v2691
  %v2693 = vpop.f32.mrb[0].mxu0
  %v2694 = vadd.f32 %v2521, %v2693
  %v2695 = vpop.f32.mrb[0].mxu0
  %2696 = vmatprep.mubr.f32.mxu0 0.0
  %v2697 = vand.u32 %v2395, 4294901760
  %2698 = vmatmul.mubr.f32.gmra.mrb[0].mxu0 %v2697
  %v2699 = vpop.f32.mrb[0].mxu0
  %v2700 = vadd.f32 %v2531, %v2699
  %v2701 = vpop.f32.mrb[0].mxu0
  %2702 = vdwg.mxu0
  %2703 = vmatprep.subr.mxu0 0.0
  %v2704 = vand.u32 %v2397, 4294901760
  %v2705 = vsub.f32 %v2397, %v2704
  %2706 = vmatpush1.msra.mxu0 %v2705
  %2707 = vmatprep.subr.mxu0 0.0
  %v2708 = vand.u32 %v2398, 4294901760
  %v2709 = vsub.f32 %v2398, %v2708
  %2710 = vmatpush1.msra.mxu0 %v2709
  %2711 = vmatprep.subr.mxu0 0.0
  %v2712 = vand.u32 %v2399, 4294901760
  %v2713 = vsub.f32 %v2399, %v2712
  %2714 = vmatpush1.msra.mxu0 %v2713
  %2715 = vmatprep.subr.mxu0 0.0
  %v2716 = vand.u32 %v2400, 4294901760
  %v2717 = vsub.f32 %v2400, %v2716
  %2718 = vmatpush1.msra.mxu0 %v2717
  %2719 = vmatprep.subr.mxu0 0.0
  %v2720 = vand.u32 %v2401, 4294901760
  %v2721 = vsub.f32 %v2401, %v2720
  %2722 = vmatpush1.msra.mxu0 %v2721
  %2723 = vmatprep.subr.mxu0 0.0
  %v2724 = vand.u32 %v2402, 4294901760
  %v2725 = vsub.f32 %v2402, %v2724
  %2726 = vmatpush1.msra.mxu0 %v2725
  %2727 = vmatprep.subr.mxu0 0.0
  %v2728 = vand.u32 %v2403, 4294901760
  %v2729 = vsub.f32 %v2403, %v2728
  %2730 = vmatpush1.msra.mxu0 %v2729
  %2731 = vmatprep.subr.mxu0 0.0
  %v2732 = vand.u32 %v2404, 4294901760
  %v2733 = vsub.f32 %v2404, %v2732
  %2734 = vmatpush1.msra.mxu0 %v2733
  %2735 = vmatprep.subr.mxu0 0.0
  %v2736 = vand.u32 %v2405, 4294901760
  %v2737 = vsub.f32 %v2405, %v2736
  %2738 = vmatpush1.msra.mxu0 %v2737
  %2739 = vmatprep.subr.mxu0 0.0
  %v2740 = vand.u32 %v2406, 4294901760
  %v2741 = vsub.f32 %v2406, %v2740
  %2742 = vmatpush1.msra.mxu0 %v2741
  %2743 = vmatprep.subr.mxu0 0.0
  %v2744 = vand.u32 %v2407, 4294901760
  %v2745 = vsub.f32 %v2407, %v2744
  %2746 = vmatpush1.msra.mxu0 %v2745
  %2747 = vmatprep.subr.mxu0 0.0
  %v2748 = vand.u32 %v2408, 4294901760
  %v2749 = vsub.f32 %v2408, %v2748
  %2750 = vmatpush1.msra.mxu0 %v2749
  %2751 = vmatprep.subr.mxu0 0.0
  %v2752 = vand.u32 %v2409, 4294901760
  %v2753 = vsub.f32 %v2409, %v2752
  %2754 = vmatpush1.msra.mxu0 %v2753
  %2755 = vmatprep.subr.mxu0 0.0
  %v2756 = vand.u32 %v2410, 4294901760
  %v2757 = vsub.f32 %v2410, %v2756
  %2758 = vmatpush1.msra.mxu0 %v2757
  %2759 = vmatprep.subr.mxu0 0.0
  %v2760 = vand.u32 %v2411, 4294901760
  %v2761 = vsub.f32 %v2411, %v2760
  %2762 = vmatpush1.msra.mxu0 %v2761
  %2763 = vmatprep.subr.mxu0 0.0
  %v2764 = vand.u32 %v2412, 4294901760
  %v2765 = vsub.f32 %v2412, %v2764
  %2766 = vmatpush1.msra.mxu0 %v2765
  %2767 = vmatprep.subr.mxu0 0.0
  %2768 = vmatpush1.msra.mxu0 0.0
  %2769 = vmatprep.subr.mxu0 0.0
  %2770 = vmatpush1.msra.mxu0 0.0
  %2771 = vmatprep.subr.mxu0 0.0
  %2772 = vmatpush1.msra.mxu0 0.0
  %2773 = vmatprep.subr.mxu0 0.0
  %2774 = vmatpush1.msra.mxu0 0.0
  %2775 = vmatprep.subr.mxu0 0.0
  %2776 = vmatpush1.msra.mxu0 0.0
  %2777 = vmatprep.subr.mxu0 0.0
  %2778 = vmatpush1.msra.mxu0 0.0
  %2779 = vmatprep.subr.mxu0 0.0
  %2780 = vmatpush1.msra.mxu0 0.0
  %2781 = vmatprep.subr.mxu0 0.0
  %2782 = vmatpush1.msra.mxu0 0.0
  %2783 = vmatprep.subr.mxu0 0.0
  %2784 = vmatpush1.msra.mxu0 0.0
  %2785 = vmatprep.subr.mxu0 0.0
  %2786 = vmatpush1.msra.mxu0 0.0
  %2787 = vmatprep.subr.mxu0 0.0
  %2788 = vmatpush1.msra.mxu0 0.0
  %2789 = vmatprep.subr.mxu0 0.0
  %2790 = vmatpush1.msra.mxu0 0.0
  %2791 = vmatprep.subr.mxu0 0.0
  %2792 = vmatpush1.msra.mxu0 0.0
  %2793 = vmatprep.subr.mxu0 0.0
  %2794 = vmatpush1.msra.mxu0 0.0
  %2795 = vmatprep.subr.mxu0 0.0
  %2796 = vmatpush1.msra.mxu0 0.0
  %2797 = vmatprep.subr.mxu0 0.0
  %2798 = vmatpush1.msra.mxu0 0.0
  %2799 = vmatprep.mubr.f32.mxu0 0.0
  %v2800 = vand.u32 %v2392, 4294901760
  %v2801 = vsub.f32 %v2392, %v2800
  %2802 = vmatmul.mubr.f32.gmra.mrb[0].mxu0 %v2801
  %v2803 = vpop.f32.mrb[0].mxu0
  %v2804 = vadd.f32 %v2682, %v2803
  %v2805 = vpop.f32.mrb[0].mxu0
  %2806 = vmatprep.mubr.f32.mxu0 0.0
  %v2807 = vand.u32 %v2393, 4294901760
  %v2808 = vsub.f32 %v2393, %v2807
  %2809 = vmatmul.mubr.f32.gmra.mrb[0].mxu0 %v2808
  %v2810 = vpop.f32.mrb[0].mxu0
  %v2811 = vadd.f32 %v2688, %v2810
  %v2812 = vpop.f32.mrb[0].mxu0
  %2813 = vmatprep.mubr.f32.mxu0 0.0
  %v2814 = vand.u32 %v2394, 4294901760
  %v2815 = vsub.f32 %v2394, %v2814
  %2816 = vmatmul.mubr.f32.gmra.mrb[0].mxu0 %v2815
  %v2817 = vpop.f32.mrb[0].mxu0
  %v2818 = vadd.f32 %v2694, %v2817
  %v2819 = vpop.f32.mrb[0].mxu0
  %2820 = vmatprep.mubr.f32.mxu0 0.0
  %v2821 = vand.u32 %v2395, 4294901760
  %v2822 = vsub.f32 %v2395, %v2821
  %2823 = vmatmul.mubr.f32.gmra.mrb[0].mxu0 %v2822
  %v2824 = vpop.f32.mrb[0].mxu0
  %v2825 = vadd.f32 %v2700, %v2824
  %v2826 = vpop.f32.mrb[0].mxu0
  %2827 = vdwg.mxu0
  %2828 = vmatprep.subr.mxu0 0.0
  %v2829 = vand.u32 %v2397, 4294901760
  %2830 = vmatpush1.msra.mxu0 %v2829
  %2831 = vmatprep.subr.mxu0 0.0
  %v2832 = vand.u32 %v2398, 4294901760
  %2833 = vmatpush1.msra.mxu0 %v2832
  %2834 = vmatprep.subr.mxu0 0.0
  %v2835 = vand.u32 %v2399, 4294901760
  %2836 = vmatpush1.msra.mxu0 %v2835
  %2837 = vmatprep.subr.mxu0 0.0
  %v2838 = vand.u32 %v2400, 4294901760
  %2839 = vmatpush1.msra.mxu0 %v2838
  %2840 = vmatprep.subr.mxu0 0.0
  %v2841 = vand.u32 %v2401, 4294901760
  %2842 = vmatpush1.msra.mxu0 %v2841
  %2843 = vmatprep.subr.mxu0 0.0
  %v2844 = vand.u32 %v2402, 4294901760
  %2845 = vmatpush1.msra.mxu0 %v2844
  %2846 = vmatprep.subr.mxu0 0.0
  %v2847 = vand.u32 %v2403, 4294901760
  %2848 = vmatpush1.msra.mxu0 %v2847
  %2849 = vmatprep.subr.mxu0 0.0
  %v2850 = vand.u32 %v2404, 4294901760
  %2851 = vmatpush1.msra.mxu0 %v2850
  %2852 = vmatprep.subr.mxu0 0.0
  %v2853 = vand.u32 %v2405, 4294901760
  %2854 = vmatpush1.msra.mxu0 %v2853
  %2855 = vmatprep.subr.mxu0 0.0
  %v2856 = vand.u32 %v2406, 4294901760
  %2857 = vmatpush1.msra.mxu0 %v2856
  %2858 = vmatprep.subr.mxu0 0.0
  %v2859 = vand.u32 %v2407, 4294901760
  %2860 = vmatpush1.msra.mxu0 %v2859
  %2861 = vmatprep.subr.mxu0 0.0
  %v2862 = vand.u32 %v2408, 4294901760
  %2863 = vmatpush1.msra.mxu0 %v2862
  %2864 = vmatprep.subr.mxu0 0.0
  %v2865 = vand.u32 %v2409, 4294901760
  %2866 = vmatpush1.msra.mxu0 %v2865
  %2867 = vmatprep.subr.mxu0 0.0
  %v2868 = vand.u32 %v2410, 4294901760
  %2869 = vmatpush1.msra.mxu0 %v2868
  %2870 = vmatprep.subr.mxu0 0.0
  %v2871 = vand.u32 %v2411, 4294901760
  %2872 = vmatpush1.msra.mxu0 %v2871
  %2873 = vmatprep.subr.mxu0 0.0
  %v2874 = vand.u32 %v2412, 4294901760
  %2875 = vmatpush1.msra.mxu0 %v2874
  %2876 = vmatprep.subr.mxu0 0.0
  %2877 = vmatpush1.msra.mxu0 0.0
  %2878 = vmatprep.subr.mxu0 0.0
  %2879 = vmatpush1.msra.mxu0 0.0
  %2880 = vmatprep.subr.mxu0 0.0
  %2881 = vmatpush1.msra.mxu0 0.0
  %2882 = vmatprep.subr.mxu0 0.0
  %2883 = vmatpush1.msra.mxu0 0.0
  %2884 = vmatprep.subr.mxu0 0.0
  %2885 = vmatpush1.msra.mxu0 0.0
  %2886 = vmatprep.subr.mxu0 0.0
  %2887 = vmatpush1.msra.mxu0 0.0
  %2888 = vmatprep.subr.mxu0 0.0
  %2889 = vmatpush1.msra.mxu0 0.0
  %2890 = vmatprep.subr.mxu0 0.0
  %2891 = vmatpush1.msra.mxu0 0.0
  %2892 = vmatprep.subr.mxu0 0.0
  %2893 = vmatpush1.msra.mxu0 0.0
  %2894 = vmatprep.subr.mxu0 0.0
  %2895 = vmatpush1.msra.mxu0 0.0
  %2896 = vmatprep.subr.mxu0 0.0
  %2897 = vmatpush1.msra.mxu0 0.0
  %2898 = vmatprep.subr.mxu0 0.0
  %2899 = vmatpush1.msra.mxu0 0.0
  %2900 = vmatprep.subr.mxu0 0.0
  %2901 = vmatpush1.msra.mxu0 0.0
  %2902 = vmatprep.subr.mxu0 0.0
  %2903 = vmatpush1.msra.mxu0 0.0
  %2904 = vmatprep.subr.mxu0 0.0
  %2905 = vmatpush1.msra.mxu0 0.0
  %2906 = vmatprep.subr.mxu0 0.0
  %2907 = vmatpush1.msra.mxu0 0.0
  %2908 = vmatprep.mubr.f32.mxu0 0.0
  %v2909 = vand.u32 %v2392, 4294901760
  %v2910 = vsub.f32 %v2392, %v2909
  %v2911 = vand.u32 %v2910, 4294901760
  %2912 = vmatmul.mubr.f32.gmra.mrb[0].mxu0 %v2911
  %v2913 = vpop.f32.mrb[0].mxu0
  %v2914 = vadd.f32 %v2804, %v2913
  %v2915 = vpop.f32.mrb[0].mxu0
  %2916 = vmatprep.mubr.f32.mxu0 0.0
  %v2917 = vand.u32 %v2393, 4294901760
  %v2918 = vsub.f32 %v2393, %v2917
  %v2919 = vand.u32 %v2918, 4294901760
  %2920 = vmatmul.mubr.f32.gmra.mrb[0].mxu0 %v2919
  %v2921 = vpop.f32.mrb[0].mxu0
  %v2922 = vadd.f32 %v2811, %v2921
  %v2923 = vpop.f32.mrb[0].mxu0
  %2924 = vmatprep.mubr.f32.mxu0 0.0
  %v2925 = vand.u32 %v2394, 4294901760
  %v2926 = vsub.f32 %v2394, %v2925
  %v2927 = vand.u32 %v2926, 4294901760
  %2928 = vmatmul.mubr.f32.gmra.mrb[0].mxu0 %v2927
  %v2929 = vpop.f32.mrb[0].mxu0
  %v2930 = vadd.f32 %v2818, %v2929
  %v2931 = vpop.f32.mrb[0].mxu0
  %2932 = vmatprep.mubr.f32.mxu0 0.0
  %v2933 = vand.u32 %v2395, 4294901760
  %v2934 = vsub.f32 %v2395, %v2933
  %v2935 = vand.u32 %v2934, 4294901760
  %2936 = vmatmul.mubr.f32.gmra.mrb[0].mxu0 %v2935
  %v2937 = vpop.f32.mrb[0].mxu0
  %v2938 = vadd.f32 %v2825, %v2937
  %v2939 = vpop.f32.mrb[0].mxu0
  %2940 = vdwg.mxu0
  %2941 = vmatprep.subr.mxu0 0.0
  %v2942 = vand.u32 %v2397, 4294901760
  %v2943 = vsub.f32 %v2397, %v2942
  %v2944 = vand.u32 %v2943, 4294901760
  %2945 = vmatpush1.msra.mxu0 %v2944
  %2946 = vmatprep.subr.mxu0 0.0
  %v2947 = vand.u32 %v2398, 4294901760
  %v2948 = vsub.f32 %v2398, %v2947
  %v2949 = vand.u32 %v2948, 4294901760
  %2950 = vmatpush1.msra.mxu0 %v2949
  %2951 = vmatprep.subr.mxu0 0.0
  %v2952 = vand.u32 %v2399, 4294901760
  %v2953 = vsub.f32 %v2399, %v2952
  %v2954 = vand.u32 %v2953, 4294901760
  %2955 = vmatpush1.msra.mxu0 %v2954
  %2956 = vmatprep.subr.mxu0 0.0
  %v2957 = vand.u32 %v2400, 4294901760
  %v2958 = vsub.f32 %v2400, %v2957
  %v2959 = vand.u32 %v2958, 4294901760
  %2960 = vmatpush1.msra.mxu0 %v2959
  %2961 = vmatprep.subr.mxu0 0.0
  %v2962 = vand.u32 %v2401, 4294901760
  %v2963 = vsub.f32 %v2401, %v2962
  %v2964 = vand.u32 %v2963, 4294901760
  %2965 = vmatpush1.msra.mxu0 %v2964
  %2966 = vmatprep.subr.mxu0 0.0
  %v2967 = vand.u32 %v2402, 4294901760
  %v2968 = vsub.f32 %v2402, %v2967
  %v2969 = vand.u32 %v2968, 4294901760
  %2970 = vmatpush1.msra.mxu0 %v2969
  %2971 = vmatprep.subr.mxu0 0.0
  %v2972 = vand.u32 %v2403, 4294901760
  %v2973 = vsub.f32 %v2403, %v2972
  %v2974 = vand.u32 %v2973, 4294901760
  %2975 = vmatpush1.msra.mxu0 %v2974
  %2976 = vmatprep.subr.mxu0 0.0
  %v2977 = vand.u32 %v2404, 4294901760
  %v2978 = vsub.f32 %v2404, %v2977
  %v2979 = vand.u32 %v2978, 4294901760
  %2980 = vmatpush1.msra.mxu0 %v2979
  %2981 = vmatprep.subr.mxu0 0.0
  %v2982 = vand.u32 %v2405, 4294901760
  %v2983 = vsub.f32 %v2405, %v2982
  %v2984 = vand.u32 %v2983, 4294901760
  %2985 = vmatpush1.msra.mxu0 %v2984
  %2986 = vmatprep.subr.mxu0 0.0
  %v2987 = vand.u32 %v2406, 4294901760
  %v2988 = vsub.f32 %v2406, %v2987
  %v2989 = vand.u32 %v2988, 4294901760
  %2990 = vmatpush1.msra.mxu0 %v2989
  %2991 = vmatprep.subr.mxu0 0.0
  %v2992 = vand.u32 %v2407, 4294901760
  %v2993 = vsub.f32 %v2407, %v2992
  %v2994 = vand.u32 %v2993, 4294901760
  %2995 = vmatpush1.msra.mxu0 %v2994
  %2996 = vmatprep.subr.mxu0 0.0
  %v2997 = vand.u32 %v2408, 4294901760
  %v2998 = vsub.f32 %v2408, %v2997
  %v2999 = vand.u32 %v2998, 4294901760
  %3000 = vmatpush1.msra.mxu0 %v2999
  %3001 = vmatprep.subr.mxu0 0.0
  %v3002 = vand.u32 %v2409, 4294901760
  %v3003 = vsub.f32 %v2409, %v3002
  %v3004 = vand.u32 %v3003, 4294901760
  %3005 = vmatpush1.msra.mxu0 %v3004
  %3006 = vmatprep.subr.mxu0 0.0
  %v3007 = vand.u32 %v2410, 4294901760
  %v3008 = vsub.f32 %v2410, %v3007
  %v3009 = vand.u32 %v3008, 4294901760
  %3010 = vmatpush1.msra.mxu0 %v3009
  %3011 = vmatprep.subr.mxu0 0.0
  %v3012 = vand.u32 %v2411, 4294901760
  %v3013 = vsub.f32 %v2411, %v3012
  %v3014 = vand.u32 %v3013, 4294901760
  %3015 = vmatpush1.msra.mxu0 %v3014
  %3016 = vmatprep.subr.mxu0 0.0
  %v3017 = vand.u32 %v2412, 4294901760
  %v3018 = vsub.f32 %v2412, %v3017
  %v3019 = vand.u32 %v3018, 4294901760
  %3020 = vmatpush1.msra.mxu0 %v3019
  %3021 = vmatprep.subr.mxu0 0.0
  %3022 = vmatpush1.msra.mxu0 0.0
  %3023 = vmatprep.subr.mxu0 0.0
  %3024 = vmatpush1.msra.mxu0 0.0
  %3025 = vmatprep.subr.mxu0 0.0
  %3026 = vmatpush1.msra.mxu0 0.0
  %3027 = vmatprep.subr.mxu0 0.0
  %3028 = vmatpush1.msra.mxu0 0.0
  %3029 = vmatprep.subr.mxu0 0.0
  %3030 = vmatpush1.msra.mxu0 0.0
  %3031 = vmatprep.subr.mxu0 0.0
  %3032 = vmatpush1.msra.mxu0 0.0
  %3033 = vmatprep.subr.mxu0 0.0
  %3034 = vmatpush1.msra.mxu0 0.0
  %3035 = vmatprep.subr.mxu0 0.0
  %3036 = vmatpush1.msra.mxu0 0.0
  %3037 = vmatprep.subr.mxu0 0.0
  %3038 = vmatpush1.msra.mxu0 0.0
  %3039 = vmatprep.subr.mxu0 0.0
  %3040 = vmatpush1.msra.mxu0 0.0
  %3041 = vmatprep.subr.mxu0 0.0
  %3042 = vmatpush1.msra.mxu0 0.0
  %3043 = vmatprep.subr.mxu0 0.0
  %3044 = vmatpush1.msra.mxu0 0.0
  %3045 = vmatprep.subr.mxu0 0.0
  %3046 = vmatpush1.msra.mxu0 0.0
  %3047 = vmatprep.subr.mxu0 0.0
  %3048 = vmatpush1.msra.mxu0 0.0
  %3049 = vmatprep.subr.mxu0 0.0
  %3050 = vmatpush1.msra.mxu0 0.0
  %3051 = vmatprep.subr.mxu0 0.0
  %3052 = vmatpush1.msra.mxu0 0.0
  %3053 = vmatprep.mubr.f32.mxu0 0.0
  %v3054 = vand.u32 %v2392, 4294901760
  %3055 = vmatmul.mubr.f32.gmra.mrb[0].mxu0 %v3054
  %v3056 = vpop.f32.mrb[0].mxu0
  %v3057 = vadd.f32 %v2914, %v3056
  %v3058 = vpop.f32.mrb[0].mxu0
  %3059 = vmatprep.mubr.f32.mxu0 0.0
  %v3060 = vand.u32 %v2393, 4294901760
  %3061 = vmatmul.mubr.f32.gmra.mrb[0].mxu0 %v3060
  %v3062 = vpop.f32.mrb[0].mxu0
  %v3063 = vadd.f32 %v2922, %v3062
  %v3064 = vpop.f32.mrb[0].mxu0
  %3065 = vmatprep.mubr.f32.mxu0 0.0
  %v3066 = vand.u32 %v2394, 4294901760
  %3067 = vmatmul.mubr.f32.gmra.mrb[0].mxu0 %v3066
  %v3068 = vpop.f32.mrb[0].mxu0
  %v3069 = vadd.f32 %v2930, %v3068
  %v3070 = vpop.f32.mrb[0].mxu0
  %3071 = vmatprep.mubr.f32.mxu0 0.0
  %v3072 = vand.u32 %v2395, 4294901760
  %3073 = vmatmul.mubr.f32.gmra.mrb[0].mxu0 %v3072
  %v3074 = vpop.f32.mrb[0].mxu0
  %v3075 = vadd.f32 %v2938, %v3074
  %v3076 = vpop.f32.mrb[0].mxu0
  %3077 = vdwg.mxu0
  %3078 = vmatprep.subr.mxu0 0.0
  %v3079 = vand.u32 %v2397, 4294901760
  %3080 = vmatpush1.msra.mxu0 %v3079
  %3081 = vmatprep.subr.mxu0 0.0
  %v3082 = vand.u32 %v2398, 4294901760
  %3083 = vmatpush1.msra.mxu0 %v3082
  %3084 = vmatprep.subr.mxu0 0.0
  %v3085 = vand.u32 %v2399, 4294901760
  %3086 = vmatpush1.msra.mxu0 %v3085
  %3087 = vmatprep.subr.mxu0 0.0
  %v3088 = vand.u32 %v2400, 4294901760
  %3089 = vmatpush1.msra.mxu0 %v3088
  %3090 = vmatprep.subr.mxu0 0.0
  %v3091 = vand.u32 %v2401, 4294901760
  %3092 = vmatpush1.msra.mxu0 %v3091
  %3093 = vmatprep.subr.mxu0 0.0
  %v3094 = vand.u32 %v2402, 4294901760
  %3095 = vmatpush1.msra.mxu0 %v3094
  %3096 = vmatprep.subr.mxu0 0.0
  %v3097 = vand.u32 %v2403, 4294901760
  %3098 = vmatpush1.msra.mxu0 %v3097
  %3099 = vmatprep.subr.mxu0 0.0
  %v3100 = vand.u32 %v2404, 4294901760
  %3101 = vmatpush1.msra.mxu0 %v3100
  %3102 = vmatprep.subr.mxu0 0.0
  %v3103 = vand.u32 %v2405, 4294901760
  %3104 = vmatpush1.msra.mxu0 %v3103
  %3105 = vmatprep.subr.mxu0 0.0
  %v3106 = vand.u32 %v2406, 4294901760
  %3107 = vmatpush1.msra.mxu0 %v3106
  %3108 = vmatprep.subr.mxu0 0.0
  %v3109 = vand.u32 %v2407, 4294901760
  %3110 = vmatpush1.msra.mxu0 %v3109
  %3111 = vmatprep.subr.mxu0 0.0
  %v3112 = vand.u32 %v2408, 4294901760
  %3113 = vmatpush1.msra.mxu0 %v3112
  %3114 = vmatprep.subr.mxu0 0.0
  %v3115 = vand.u32 %v2409, 4294901760
  %3116 = vmatpush1.msra.mxu0 %v3115
  %3117 = vmatprep.subr.mxu0 0.0
  %v3118 = vand.u32 %v2410, 4294901760
  %3119 = vmatpush1.msra.mxu0 %v3118
  %3120 = vmatprep.subr.mxu0 0.0
  %v3121 = vand.u32 %v2411, 4294901760
  %3122 = vmatpush1.msra.mxu0 %v3121
  %3123 = vmatprep.subr.mxu0 0.0
  %v3124 = vand.u32 %v2412, 4294901760
  %3125 = vmatpush1.msra.mxu0 %v3124
  %3126 = vmatprep.subr.mxu0 0.0
  %3127 = vmatpush1.msra.mxu0 0.0
  %3128 = vmatprep.subr.mxu0 0.0
  %3129 = vmatpush1.msra.mxu0 0.0
  %3130 = vmatprep.subr.mxu0 0.0
  %3131 = vmatpush1.msra.mxu0 0.0
  %3132 = vmatprep.subr.mxu0 0.0
  %3133 = vmatpush1.msra.mxu0 0.0
  %3134 = vmatprep.subr.mxu0 0.0
  %3135 = vmatpush1.msra.mxu0 0.0
  %3136 = vmatprep.subr.mxu0 0.0
  %3137 = vmatpush1.msra.mxu0 0.0
  %3138 = vmatprep.subr.mxu0 0.0
  %3139 = vmatpush1.msra.mxu0 0.0
  %3140 = vmatprep.subr.mxu0 0.0
  %3141 = vmatpush1.msra.mxu0 0.0
  %3142 = vmatprep.subr.mxu0 0.0
  %3143 = vmatpush1.msra.mxu0 0.0
  %3144 = vmatprep.subr.mxu0 0.0
  %3145 = vmatpush1.msra.mxu0 0.0
  %3146 = vmatprep.subr.mxu0 0.0
  %3147 = vmatpush1.msra.mxu0 0.0
  %3148 = vmatprep.subr.mxu0 0.0
  %3149 = vmatpush1.msra.mxu0 0.0
  %3150 = vmatprep.subr.mxu0 0.0
  %3151 = vmatpush1.msra.mxu0 0.0
  %3152 = vmatprep.subr.mxu0 0.0
  %3153 = vmatpush1.msra.mxu0 0.0
  %3154 = vmatprep.subr.mxu0 0.0
  %3155 = vmatpush1.msra.mxu0 0.0
  %3156 = vmatprep.subr.mxu0 0.0
  %3157 = vmatpush1.msra.mxu0 0.0
  %3158 = vmatprep.mubr.f32.mxu0 0.0
  %v3159 = vand.u32 %v2392, 4294901760
  %3160 = vmatmul.mubr.f32.gmra.mrb[0].mxu0 %v3159
  %v3161 = vpop.f32.mrb[0].mxu0
  %v3162 = vadd.f32 %v3057, %v3161
  %v3163 = vpop.f32.mrb[0].mxu0
  %3164 = vmatprep.mubr.f32.mxu0 0.0
  %v3165 = vand.u32 %v2393, 4294901760
  %3166 = vmatmul.mubr.f32.gmra.mrb[0].mxu0 %v3165
  %v3167 = vpop.f32.mrb[0].mxu0
  %v3168 = vadd.f32 %v3063, %v3167
  %v3169 = vpop.f32.mrb[0].mxu0
  %3170 = vmatprep.mubr.f32.mxu0 0.0
  %v3171 = vand.u32 %v2394, 4294901760
  %3172 = vmatmul.mubr.f32.gmra.mrb[0].mxu0 %v3171
  %v3173 = vpop.f32.mrb[0].mxu0
  %v3174 = vadd.f32 %v3069, %v3173
  %v3175 = vpop.f32.mrb[0].mxu0
  %3176 = vmatprep.mubr.f32.mxu0 0.0
  %v3177 = vand.u32 %v2395, 4294901760
  %3178 = vmatmul.mubr.f32.gmra.mrb[0].mxu0 %v3177
  %v3179 = vpop.f32.mrb[0].mxu0
  %v3180 = vadd.f32 %v3075, %v3179
  %v3181 = vpop.f32.mrb[0].mxu0
  %3182 = vdwg.mxu0
  %v3183 = vadd.f32 %v2388, %v3162
  %v3184 = vadd.f32 %v2389, %v3168
  %v3185 = vadd.f32 %v2390, %v3174
  %v3186 = vadd.f32 %v2391, %v3180
  %v3187 = vld [vmem:[%s0 + $0x5] sm:$0xff]
  %v3188 = vld [vmem:[%s0 + $0xd] sm:$0xff]
  %v3189 = vld [vmem:[%s0 + $0x1d] sm:$0xff]
  %v3190 = vld [vmem:[%s0 + $0x25] sm:$0xff]
  %s3191 = scalar_lea.vmem %s1, 512
  %v3192 = vld [vmem:[%s3191] sm:$0xff]
  %v3193 = vld [vmem:[%s3191 + $0x8] sm:$0xff]
  %v3194 = vld [vmem:[%s3191 + $0x10] sm:$0xff]
  %v3195 = vld [vmem:[%s3191 + $0x18] sm:$0xff]
  %v3196 = vld [vmem:[%s3191 + $0x20] sm:$0xff]
  %v3197 = vld [vmem:[%s3191 + $0x28] sm:$0xff]
  %v3198 = vld [vmem:[%s3191 + $0x30] sm:$0xff]
  %v3199 = vld [vmem:[%s3191 + $0x38] sm:$0xff]
  %v3200 = vld [vmem:[%s3191 + $0x40] sm:$0xff]
  %v3201 = vld [vmem:[%s3191 + $0x48] sm:$0xff]
  %v3202 = vld [vmem:[%s3191 + $0x50] sm:$0xff]
  %v3203 = vld [vmem:[%s3191 + $0x58] sm:$0xff]
  %v3204 = vld [vmem:[%s3191 + $0x60] sm:$0xff]
  %v3205 = vld [vmem:[%s3191 + $0x68] sm:$0xff]
  %v3206 = vld [vmem:[%s3191 + $0x70] sm:$0xff]
  %v3207 = vld [vmem:[%s3191 + $0x78] sm:$0xff]
  %3208 = vmatprep.subr.mxu0 0.0
  %v3209 = vand.u32 %v3192, 4294901760
  %3210 = vmatpush1.msra.mxu0 %v3209
  %3211 = vmatprep.subr.mxu0 0.0
  %v3212 = vand.u32 %v3193, 4294901760
  %3213 = vmatpush1.msra.mxu0 %v3212
  %3214 = vmatprep.subr.mxu0 0.0
  %v3215 = vand.u32 %v3194, 4294901760
  %3216 = vmatpush1.msra.mxu0 %v3215
  %3217 = vmatprep.subr.mxu0 0.0
  %v3218 = vand.u32 %v3195, 4294901760
  %3219 = vmatpush1.msra.mxu0 %v3218
  %3220 = vmatprep.subr.mxu0 0.0
  %v3221 = vand.u32 %v3196, 4294901760
  %3222 = vmatpush1.msra.mxu0 %v3221
  %3223 = vmatprep.subr.mxu0 0.0
  %v3224 = vand.u32 %v3197, 4294901760
  %3225 = vmatpush1.msra.mxu0 %v3224
  %3226 = vmatprep.subr.mxu0 0.0
  %v3227 = vand.u32 %v3198, 4294901760
  %3228 = vmatpush1.msra.mxu0 %v3227
  %3229 = vmatprep.subr.mxu0 0.0
  %v3230 = vand.u32 %v3199, 4294901760
  %3231 = vmatpush1.msra.mxu0 %v3230
  %3232 = vmatprep.subr.mxu0 0.0
  %v3233 = vand.u32 %v3200, 4294901760
  %3234 = vmatpush1.msra.mxu0 %v3233
  %3235 = vmatprep.subr.mxu0 0.0
  %v3236 = vand.u32 %v3201, 4294901760
  %3237 = vmatpush1.msra.mxu0 %v3236
  %3238 = vmatprep.subr.mxu0 0.0
  %v3239 = vand.u32 %v3202, 4294901760
  %3240 = vmatpush1.msra.mxu0 %v3239
  %3241 = vmatprep.subr.mxu0 0.0
  %v3242 = vand.u32 %v3203, 4294901760
  %3243 = vmatpush1.msra.mxu0 %v3242
  %3244 = vmatprep.subr.mxu0 0.0
  %v3245 = vand.u32 %v3204, 4294901760
  %3246 = vmatpush1.msra.mxu0 %v3245
  %3247 = vmatprep.subr.mxu0 0.0
  %v3248 = vand.u32 %v3205, 4294901760
  %3249 = vmatpush1.msra.mxu0 %v3248
  %3250 = vmatprep.subr.mxu0 0.0
  %v3251 = vand.u32 %v3206, 4294901760
  %3252 = vmatpush1.msra.mxu0 %v3251
  %3253 = vmatprep.subr.mxu0 0.0
  %v3254 = vand.u32 %v3207, 4294901760
  %3255 = vmatpush1.msra.mxu0 %v3254
  %3256 = vmatprep.subr.mxu0 0.0
  %3257 = vmatpush1.msra.mxu0 0.0
  %3258 = vmatprep.subr.mxu0 0.0
  %3259 = vmatpush1.msra.mxu0 0.0
  %3260 = vmatprep.subr.mxu0 0.0
  %3261 = vmatpush1.msra.mxu0 0.0
  %3262 = vmatprep.subr.mxu0 0.0
  %3263 = vmatpush1.msra.mxu0 0.0
  %3264 = vmatprep.subr.mxu0 0.0
  %3265 = vmatpush1.msra.mxu0 0.0
  %3266 = vmatprep.subr.mxu0 0.0
  %3267 = vmatpush1.msra.mxu0 0.0
  %3268 = vmatprep.subr.mxu0 0.0
  %3269 = vmatpush1.msra.mxu0 0.0
  %3270 = vmatprep.subr.mxu0 0.0
  %3271 = vmatpush1.msra.mxu0 0.0
  %3272 = vmatprep.subr.mxu0 0.0
  %3273 = vmatpush1.msra.mxu0 0.0
  %3274 = vmatprep.subr.mxu0 0.0
  %3275 = vmatpush1.msra.mxu0 0.0
  %3276 = vmatprep.subr.mxu0 0.0
  %3277 = vmatpush1.msra.mxu0 0.0
  %3278 = vmatprep.subr.mxu0 0.0
  %3279 = vmatpush1.msra.mxu0 0.0
  %3280 = vmatprep.subr.mxu0 0.0
  %3281 = vmatpush1.msra.mxu0 0.0
  %3282 = vmatprep.subr.mxu0 0.0
  %3283 = vmatpush1.msra.mxu0 0.0
  %3284 = vmatprep.subr.mxu0 0.0
  %3285 = vmatpush1.msra.mxu0 0.0
  %3286 = vmatprep.subr.mxu0 0.0
  %3287 = vmatpush1.msra.mxu0 0.0
  %3288 = vmatprep.mubr.f32.mxu0 0.0
  %v3289 = vand.u32 %v3187, 4294901760
  %v3290 = vsub.f32 %v3187, %v3289
  %v3291 = vand.u32 %v3290, 4294901760
  %v3292 = vsub.f32 %v3290, %v3291
  %v3293 = vand.u32 %v3292, 4294901760
  %3294 = vmatmul.mubr.f32.gmra.mrb[0].mxu0 %v3293
  %v3295 = vpop.f32.mrb[0].mxu0
  %v3296 = vadd.f32 0.0, %v3295
  %v3297 = vpop.f32.mrb[0].mxu0
  %3298 = vmatprep.mubr.f32.mxu0 0.0
  %v3299 = vand.u32 %v3188, 4294901760
  %v3300 = vsub.f32 %v3188, %v3299
  %v3301 = vand.u32 %v3300, 4294901760
  %v3302 = vsub.f32 %v3300, %v3301
  %v3303 = vand.u32 %v3302, 4294901760
  %3304 = vmatmul.mubr.f32.gmra.mrb[0].mxu0 %v3303
  %v3305 = vpop.f32.mrb[0].mxu0
  %v3306 = vadd.f32 0.0, %v3305
  %v3307 = vpop.f32.mrb[0].mxu0
  %3308 = vmatprep.mubr.f32.mxu0 0.0
  %v3309 = vand.u32 %v3189, 4294901760
  %v3310 = vsub.f32 %v3189, %v3309
  %v3311 = vand.u32 %v3310, 4294901760
  %v3312 = vsub.f32 %v3310, %v3311
  %v3313 = vand.u32 %v3312, 4294901760
  %3314 = vmatmul.mubr.f32.gmra.mrb[0].mxu0 %v3313
  %v3315 = vpop.f32.mrb[0].mxu0
  %v3316 = vadd.f32 0.0, %v3315
  %v3317 = vpop.f32.mrb[0].mxu0
  %3318 = vmatprep.mubr.f32.mxu0 0.0
  %v3319 = vand.u32 %v3190, 4294901760
  %v3320 = vsub.f32 %v3190, %v3319
  %v3321 = vand.u32 %v3320, 4294901760
  %v3322 = vsub.f32 %v3320, %v3321
  %v3323 = vand.u32 %v3322, 4294901760
  %3324 = vmatmul.mubr.f32.gmra.mrb[0].mxu0 %v3323
  %v3325 = vpop.f32.mrb[0].mxu0
  %v3326 = vadd.f32 0.0, %v3325
  %v3327 = vpop.f32.mrb[0].mxu0
  %3328 = vdwg.mxu0
  %3329 = vmatprep.subr.mxu0 0.0
  %v3330 = vand.u32 %v3192, 4294901760
  %v3331 = vsub.f32 %v3192, %v3330
  %v3332 = vand.u32 %v3331, 4294901760
  %v3333 = vsub.f32 %v3331, %v3332
  %v3334 = vand.u32 %v3333, 4294901760
  %3335 = vmatpush1.msra.mxu0 %v3334
  %3336 = vmatprep.subr.mxu0 0.0
  %v3337 = vand.u32 %v3193, 4294901760
  %v3338 = vsub.f32 %v3193, %v3337
  %v3339 = vand.u32 %v3338, 4294901760
  %v3340 = vsub.f32 %v3338, %v3339
  %v3341 = vand.u32 %v3340, 4294901760
  %3342 = vmatpush1.msra.mxu0 %v3341
  %3343 = vmatprep.subr.mxu0 0.0
  %v3344 = vand.u32 %v3194, 4294901760
  %v3345 = vsub.f32 %v3194, %v3344
  %v3346 = vand.u32 %v3345, 4294901760
  %v3347 = vsub.f32 %v3345, %v3346
  %v3348 = vand.u32 %v3347, 4294901760
  %3349 = vmatpush1.msra.mxu0 %v3348
  %3350 = vmatprep.subr.mxu0 0.0
  %v3351 = vand.u32 %v3195, 4294901760
  %v3352 = vsub.f32 %v3195, %v3351
  %v3353 = vand.u32 %v3352, 4294901760
  %v3354 = vsub.f32 %v3352, %v3353
  %v3355 = vand.u32 %v3354, 4294901760
  %3356 = vmatpush1.msra.mxu0 %v3355
  %3357 = vmatprep.subr.mxu0 0.0
  %v3358 = vand.u32 %v3196, 4294901760
  %v3359 = vsub.f32 %v3196, %v3358
  %v3360 = vand.u32 %v3359, 4294901760
  %v3361 = vsub.f32 %v3359, %v3360
  %v3362 = vand.u32 %v3361, 4294901760
  %3363 = vmatpush1.msra.mxu0 %v3362
  %3364 = vmatprep.subr.mxu0 0.0
  %v3365 = vand.u32 %v3197, 4294901760
  %v3366 = vsub.f32 %v3197, %v3365
  %v3367 = vand.u32 %v3366, 4294901760
  %v3368 = vsub.f32 %v3366, %v3367
  %v3369 = vand.u32 %v3368, 4294901760
  %3370 = vmatpush1.msra.mxu0 %v3369
  %3371 = vmatprep.subr.mxu0 0.0
  %v3372 = vand.u32 %v3198, 4294901760
  %v3373 = vsub.f32 %v3198, %v3372
  %v3374 = vand.u32 %v3373, 4294901760
  %v3375 = vsub.f32 %v3373, %v3374
  %v3376 = vand.u32 %v3375, 4294901760
  %3377 = vmatpush1.msra.mxu0 %v3376
  %3378 = vmatprep.subr.mxu0 0.0
  %v3379 = vand.u32 %v3199, 4294901760
  %v3380 = vsub.f32 %v3199, %v3379
  %v3381 = vand.u32 %v3380, 4294901760
  %v3382 = vsub.f32 %v3380, %v3381
  %v3383 = vand.u32 %v3382, 4294901760
  %3384 = vmatpush1.msra.mxu0 %v3383
  %3385 = vmatprep.subr.mxu0 0.0
  %v3386 = vand.u32 %v3200, 4294901760
  %v3387 = vsub.f32 %v3200, %v3386
  %v3388 = vand.u32 %v3387, 4294901760
  %v3389 = vsub.f32 %v3387, %v3388
  %v3390 = vand.u32 %v3389, 4294901760
  %3391 = vmatpush1.msra.mxu0 %v3390
  %3392 = vmatprep.subr.mxu0 0.0
  %v3393 = vand.u32 %v3201, 4294901760
  %v3394 = vsub.f32 %v3201, %v3393
  %v3395 = vand.u32 %v3394, 4294901760
  %v3396 = vsub.f32 %v3394, %v3395
  %v3397 = vand.u32 %v3396, 4294901760
  %3398 = vmatpush1.msra.mxu0 %v3397
  %3399 = vmatprep.subr.mxu0 0.0
  %v3400 = vand.u32 %v3202, 4294901760
  %v3401 = vsub.f32 %v3202, %v3400
  %v3402 = vand.u32 %v3401, 4294901760
  %v3403 = vsub.f32 %v3401, %v3402
  %v3404 = vand.u32 %v3403, 4294901760
  %3405 = vmatpush1.msra.mxu0 %v3404
  %3406 = vmatprep.subr.mxu0 0.0
  %v3407 = vand.u32 %v3203, 4294901760
  %v3408 = vsub.f32 %v3203, %v3407
  %v3409 = vand.u32 %v3408, 4294901760
  %v3410 = vsub.f32 %v3408, %v3409
  %v3411 = vand.u32 %v3410, 4294901760
  %3412 = vmatpush1.msra.mxu0 %v3411
  %3413 = vmatprep.subr.mxu0 0.0
  %v3414 = vand.u32 %v3204, 4294901760
  %v3415 = vsub.f32 %v3204, %v3414
  %v3416 = vand.u32 %v3415, 4294901760
  %v3417 = vsub.f32 %v3415, %v3416
  %v3418 = vand.u32 %v3417, 4294901760
  %3419 = vmatpush1.msra.mxu0 %v3418
  %3420 = vmatprep.subr.mxu0 0.0
  %v3421 = vand.u32 %v3205, 4294901760
  %v3422 = vsub.f32 %v3205, %v3421
  %v3423 = vand.u32 %v3422, 4294901760
  %v3424 = vsub.f32 %v3422, %v3423
  %v3425 = vand.u32 %v3424, 4294901760
  %3426 = vmatpush1.msra.mxu0 %v3425
  %3427 = vmatprep.subr.mxu0 0.0
  %v3428 = vand.u32 %v3206, 4294901760
  %v3429 = vsub.f32 %v3206, %v3428
  %v3430 = vand.u32 %v3429, 4294901760
  %v3431 = vsub.f32 %v3429, %v3430
  %v3432 = vand.u32 %v3431, 4294901760
  %3433 = vmatpush1.msra.mxu0 %v3432
  %3434 = vmatprep.subr.mxu0 0.0
  %v3435 = vand.u32 %v3207, 4294901760
  %v3436 = vsub.f32 %v3207, %v3435
  %v3437 = vand.u32 %v3436, 4294901760
  %v3438 = vsub.f32 %v3436, %v3437
  %v3439 = vand.u32 %v3438, 4294901760
  %3440 = vmatpush1.msra.mxu0 %v3439
  %3441 = vmatprep.subr.mxu0 0.0
  %3442 = vmatpush1.msra.mxu0 0.0
  %3443 = vmatprep.subr.mxu0 0.0
  %3444 = vmatpush1.msra.mxu0 0.0
  %3445 = vmatprep.subr.mxu0 0.0
  %3446 = vmatpush1.msra.mxu0 0.0
  %3447 = vmatprep.subr.mxu0 0.0
  %3448 = vmatpush1.msra.mxu0 0.0
  %3449 = vmatprep.subr.mxu0 0.0
  %3450 = vmatpush1.msra.mxu0 0.0
  %3451 = vmatprep.subr.mxu0 0.0
  %3452 = vmatpush1.msra.mxu0 0.0
  %3453 = vmatprep.subr.mxu0 0.0
  %3454 = vmatpush1.msra.mxu0 0.0
  %3455 = vmatprep.subr.mxu0 0.0
  %3456 = vmatpush1.msra.mxu0 0.0
  %3457 = vmatprep.subr.mxu0 0.0
  %3458 = vmatpush1.msra.mxu0 0.0
  %3459 = vmatprep.subr.mxu0 0.0
  %3460 = vmatpush1.msra.mxu0 0.0
  %3461 = vmatprep.subr.mxu0 0.0
  %3462 = vmatpush1.msra.mxu0 0.0
  %3463 = vmatprep.subr.mxu0 0.0
  %3464 = vmatpush1.msra.mxu0 0.0
  %3465 = vmatprep.subr.mxu0 0.0
  %3466 = vmatpush1.msra.mxu0 0.0
  %3467 = vmatprep.subr.mxu0 0.0
  %3468 = vmatpush1.msra.mxu0 0.0
  %3469 = vmatprep.subr.mxu0 0.0
  %3470 = vmatpush1.msra.mxu0 0.0
  %3471 = vmatprep.subr.mxu0 0.0
  %3472 = vmatpush1.msra.mxu0 0.0
  %3473 = vmatprep.mubr.f32.mxu0 0.0
  %v3474 = vand.u32 %v3187, 4294901760
  %3475 = vmatmul.mubr.f32.gmra.mrb[0].mxu0 %v3474
  %v3476 = vpop.f32.mrb[0].mxu0
  %v3477 = vadd.f32 %v3296, %v3476
  %v3478 = vpop.f32.mrb[0].mxu0
  %3479 = vmatprep.mubr.f32.mxu0 0.0
  %v3480 = vand.u32 %v3188, 4294901760
  %3481 = vmatmul.mubr.f32.gmra.mrb[0].mxu0 %v3480
  %v3482 = vpop.f32.mrb[0].mxu0
  %v3483 = vadd.f32 %v3306, %v3482
  %v3484 = vpop.f32.mrb[0].mxu0
  %3485 = vmatprep.mubr.f32.mxu0 0.0
  %v3486 = vand.u32 %v3189, 4294901760
  %3487 = vmatmul.mubr.f32.gmra.mrb[0].mxu0 %v3486
  %v3488 = vpop.f32.mrb[0].mxu0
  %v3489 = vadd.f32 %v3316, %v3488
  %v3490 = vpop.f32.mrb[0].mxu0
  %3491 = vmatprep.mubr.f32.mxu0 0.0
  %v3492 = vand.u32 %v3190, 4294901760
  %3493 = vmatmul.mubr.f32.gmra.mrb[0].mxu0 %v3492
  %v3494 = vpop.f32.mrb[0].mxu0
  %v3495 = vadd.f32 %v3326, %v3494
  %v3496 = vpop.f32.mrb[0].mxu0
  %3497 = vdwg.mxu0
  %3498 = vmatprep.subr.mxu0 0.0
  %v3499 = vand.u32 %v3192, 4294901760
  %v3500 = vsub.f32 %v3192, %v3499
  %3501 = vmatpush1.msra.mxu0 %v3500
  %3502 = vmatprep.subr.mxu0 0.0
  %v3503 = vand.u32 %v3193, 4294901760
  %v3504 = vsub.f32 %v3193, %v3503
  %3505 = vmatpush1.msra.mxu0 %v3504
  %3506 = vmatprep.subr.mxu0 0.0
  %v3507 = vand.u32 %v3194, 4294901760
  %v3508 = vsub.f32 %v3194, %v3507
  %3509 = vmatpush1.msra.mxu0 %v3508
  %3510 = vmatprep.subr.mxu0 0.0
  %v3511 = vand.u32 %v3195, 4294901760
  %v3512 = vsub.f32 %v3195, %v3511
  %3513 = vmatpush1.msra.mxu0 %v3512
  %3514 = vmatprep.subr.mxu0 0.0
  %v3515 = vand.u32 %v3196, 4294901760
  %v3516 = vsub.f32 %v3196, %v3515
  %3517 = vmatpush1.msra.mxu0 %v3516
  %3518 = vmatprep.subr.mxu0 0.0
  %v3519 = vand.u32 %v3197, 4294901760
  %v3520 = vsub.f32 %v3197, %v3519
  %3521 = vmatpush1.msra.mxu0 %v3520
  %3522 = vmatprep.subr.mxu0 0.0
  %v3523 = vand.u32 %v3198, 4294901760
  %v3524 = vsub.f32 %v3198, %v3523
  %3525 = vmatpush1.msra.mxu0 %v3524
  %3526 = vmatprep.subr.mxu0 0.0
  %v3527 = vand.u32 %v3199, 4294901760
  %v3528 = vsub.f32 %v3199, %v3527
  %3529 = vmatpush1.msra.mxu0 %v3528
  %3530 = vmatprep.subr.mxu0 0.0
  %v3531 = vand.u32 %v3200, 4294901760
  %v3532 = vsub.f32 %v3200, %v3531
  %3533 = vmatpush1.msra.mxu0 %v3532
  %3534 = vmatprep.subr.mxu0 0.0
  %v3535 = vand.u32 %v3201, 4294901760
  %v3536 = vsub.f32 %v3201, %v3535
  %3537 = vmatpush1.msra.mxu0 %v3536
  %3538 = vmatprep.subr.mxu0 0.0
  %v3539 = vand.u32 %v3202, 4294901760
  %v3540 = vsub.f32 %v3202, %v3539
  %3541 = vmatpush1.msra.mxu0 %v3540
  %3542 = vmatprep.subr.mxu0 0.0
  %v3543 = vand.u32 %v3203, 4294901760
  %v3544 = vsub.f32 %v3203, %v3543
  %3545 = vmatpush1.msra.mxu0 %v3544
  %3546 = vmatprep.subr.mxu0 0.0
  %v3547 = vand.u32 %v3204, 4294901760
  %v3548 = vsub.f32 %v3204, %v3547
  %3549 = vmatpush1.msra.mxu0 %v3548
  %3550 = vmatprep.subr.mxu0 0.0
  %v3551 = vand.u32 %v3205, 4294901760
  %v3552 = vsub.f32 %v3205, %v3551
  %3553 = vmatpush1.msra.mxu0 %v3552
  %3554 = vmatprep.subr.mxu0 0.0
  %v3555 = vand.u32 %v3206, 4294901760
  %v3556 = vsub.f32 %v3206, %v3555
  %3557 = vmatpush1.msra.mxu0 %v3556
  %3558 = vmatprep.subr.mxu0 0.0
  %v3559 = vand.u32 %v3207, 4294901760
  %v3560 = vsub.f32 %v3207, %v3559
  %3561 = vmatpush1.msra.mxu0 %v3560
  %3562 = vmatprep.subr.mxu0 0.0
  %3563 = vmatpush1.msra.mxu0 0.0
  %3564 = vmatprep.subr.mxu0 0.0
  %3565 = vmatpush1.msra.mxu0 0.0
  %3566 = vmatprep.subr.mxu0 0.0
  %3567 = vmatpush1.msra.mxu0 0.0
  %3568 = vmatprep.subr.mxu0 0.0
  %3569 = vmatpush1.msra.mxu0 0.0
  %3570 = vmatprep.subr.mxu0 0.0
  %3571 = vmatpush1.msra.mxu0 0.0
  %3572 = vmatprep.subr.mxu0 0.0
  %3573 = vmatpush1.msra.mxu0 0.0
  %3574 = vmatprep.subr.mxu0 0.0
  %3575 = vmatpush1.msra.mxu0 0.0
  %3576 = vmatprep.subr.mxu0 0.0
  %3577 = vmatpush1.msra.mxu0 0.0
  %3578 = vmatprep.subr.mxu0 0.0
  %3579 = vmatpush1.msra.mxu0 0.0
  %3580 = vmatprep.subr.mxu0 0.0
  %3581 = vmatpush1.msra.mxu0 0.0
  %3582 = vmatprep.subr.mxu0 0.0
  %3583 = vmatpush1.msra.mxu0 0.0
  %3584 = vmatprep.subr.mxu0 0.0
  %3585 = vmatpush1.msra.mxu0 0.0
  %3586 = vmatprep.subr.mxu0 0.0
  %3587 = vmatpush1.msra.mxu0 0.0
  %3588 = vmatprep.subr.mxu0 0.0
  %3589 = vmatpush1.msra.mxu0 0.0
  %3590 = vmatprep.subr.mxu0 0.0
  %3591 = vmatpush1.msra.mxu0 0.0
  %3592 = vmatprep.subr.mxu0 0.0
  %3593 = vmatpush1.msra.mxu0 0.0
  %3594 = vmatprep.mubr.f32.mxu0 0.0
  %v3595 = vand.u32 %v3187, 4294901760
  %v3596 = vsub.f32 %v3187, %v3595
  %3597 = vmatmul.mubr.f32.gmra.mrb[0].mxu0 %v3596
  %v3598 = vpop.f32.mrb[0].mxu0
  %v3599 = vadd.f32 %v3477, %v3598
  %v3600 = vpop.f32.mrb[0].mxu0
  %3601 = vmatprep.mubr.f32.mxu0 0.0
  %v3602 = vand.u32 %v3188, 4294901760
  %v3603 = vsub.f32 %v3188, %v3602
  %3604 = vmatmul.mubr.f32.gmra.mrb[0].mxu0 %v3603
  %v3605 = vpop.f32.mrb[0].mxu0
  %v3606 = vadd.f32 %v3483, %v3605
  %v3607 = vpop.f32.mrb[0].mxu0
  %3608 = vmatprep.mubr.f32.mxu0 0.0
  %v3609 = vand.u32 %v3189, 4294901760
  %v3610 = vsub.f32 %v3189, %v3609
  %3611 = vmatmul.mubr.f32.gmra.mrb[0].mxu0 %v3610
  %v3612 = vpop.f32.mrb[0].mxu0
  %v3613 = vadd.f32 %v3489, %v3612
  %v3614 = vpop.f32.mrb[0].mxu0
  %3615 = vmatprep.mubr.f32.mxu0 0.0
  %v3616 = vand.u32 %v3190, 4294901760
  %v3617 = vsub.f32 %v3190, %v3616
  %3618 = vmatmul.mubr.f32.gmra.mrb[0].mxu0 %v3617
  %v3619 = vpop.f32.mrb[0].mxu0
  %v3620 = vadd.f32 %v3495, %v3619
  %v3621 = vpop.f32.mrb[0].mxu0
  %3622 = vdwg.mxu0
  %3623 = vmatprep.subr.mxu0 0.0
  %v3624 = vand.u32 %v3192, 4294901760
  %3625 = vmatpush1.msra.mxu0 %v3624
  %3626 = vmatprep.subr.mxu0 0.0
  %v3627 = vand.u32 %v3193, 4294901760
  %3628 = vmatpush1.msra.mxu0 %v3627
  %3629 = vmatprep.subr.mxu0 0.0
  %v3630 = vand.u32 %v3194, 4294901760
  %3631 = vmatpush1.msra.mxu0 %v3630
  %3632 = vmatprep.subr.mxu0 0.0
  %v3633 = vand.u32 %v3195, 4294901760
  %3634 = vmatpush1.msra.mxu0 %v3633
  %3635 = vmatprep.subr.mxu0 0.0
  %v3636 = vand.u32 %v3196, 4294901760
  %3637 = vmatpush1.msra.mxu0 %v3636
  %3638 = vmatprep.subr.mxu0 0.0
  %v3639 = vand.u32 %v3197, 4294901760
  %3640 = vmatpush1.msra.mxu0 %v3639
  %3641 = vmatprep.subr.mxu0 0.0
  %v3642 = vand.u32 %v3198, 4294901760
  %3643 = vmatpush1.msra.mxu0 %v3642
  %3644 = vmatprep.subr.mxu0 0.0
  %v3645 = vand.u32 %v3199, 4294901760
  %3646 = vmatpush1.msra.mxu0 %v3645
  %3647 = vmatprep.subr.mxu0 0.0
  %v3648 = vand.u32 %v3200, 4294901760
  %3649 = vmatpush1.msra.mxu0 %v3648
  %3650 = vmatprep.subr.mxu0 0.0
  %v3651 = vand.u32 %v3201, 4294901760
  %3652 = vmatpush1.msra.mxu0 %v3651
  %3653 = vmatprep.subr.mxu0 0.0
  %v3654 = vand.u32 %v3202, 4294901760
  %3655 = vmatpush1.msra.mxu0 %v3654
  %3656 = vmatprep.subr.mxu0 0.0
  %v3657 = vand.u32 %v3203, 4294901760
  %3658 = vmatpush1.msra.mxu0 %v3657
  %3659 = vmatprep.subr.mxu0 0.0
  %v3660 = vand.u32 %v3204, 4294901760
  %3661 = vmatpush1.msra.mxu0 %v3660
  %3662 = vmatprep.subr.mxu0 0.0
  %v3663 = vand.u32 %v3205, 4294901760
  %3664 = vmatpush1.msra.mxu0 %v3663
  %3665 = vmatprep.subr.mxu0 0.0
  %v3666 = vand.u32 %v3206, 4294901760
  %3667 = vmatpush1.msra.mxu0 %v3666
  %3668 = vmatprep.subr.mxu0 0.0
  %v3669 = vand.u32 %v3207, 4294901760
  %3670 = vmatpush1.msra.mxu0 %v3669
  %3671 = vmatprep.subr.mxu0 0.0
  %3672 = vmatpush1.msra.mxu0 0.0
  %3673 = vmatprep.subr.mxu0 0.0
  %3674 = vmatpush1.msra.mxu0 0.0
  %3675 = vmatprep.subr.mxu0 0.0
  %3676 = vmatpush1.msra.mxu0 0.0
  %3677 = vmatprep.subr.mxu0 0.0
  %3678 = vmatpush1.msra.mxu0 0.0
  %3679 = vmatprep.subr.mxu0 0.0
  %3680 = vmatpush1.msra.mxu0 0.0
  %3681 = vmatprep.subr.mxu0 0.0
  %3682 = vmatpush1.msra.mxu0 0.0
  %3683 = vmatprep.subr.mxu0 0.0
  %3684 = vmatpush1.msra.mxu0 0.0
  %3685 = vmatprep.subr.mxu0 0.0
  %3686 = vmatpush1.msra.mxu0 0.0
  %3687 = vmatprep.subr.mxu0 0.0
  %3688 = vmatpush1.msra.mxu0 0.0
  %3689 = vmatprep.subr.mxu0 0.0
  %3690 = vmatpush1.msra.mxu0 0.0
  %3691 = vmatprep.subr.mxu0 0.0
  %3692 = vmatpush1.msra.mxu0 0.0
  %3693 = vmatprep.subr.mxu0 0.0
  %3694 = vmatpush1.msra.mxu0 0.0
  %3695 = vmatprep.subr.mxu0 0.0
  %3696 = vmatpush1.msra.mxu0 0.0
  %3697 = vmatprep.subr.mxu0 0.0
  %3698 = vmatpush1.msra.mxu0 0.0
  %3699 = vmatprep.subr.mxu0 0.0
  %3700 = vmatpush1.msra.mxu0 0.0
  %3701 = vmatprep.subr.mxu0 0.0
  %3702 = vmatpush1.msra.mxu0 0.0
  %3703 = vmatprep.mubr.f32.mxu0 0.0
  %v3704 = vand.u32 %v3187, 4294901760
  %v3705 = vsub.f32 %v3187, %v3704
  %v3706 = vand.u32 %v3705, 4294901760
  %3707 = vmatmul.mubr.f32.gmra.mrb[0].mxu0 %v3706
  %v3708 = vpop.f32.mrb[0].mxu0
  %v3709 = vadd.f32 %v3599, %v3708
  %v3710 = vpop.f32.mrb[0].mxu0
  %3711 = vmatprep.mubr.f32.mxu0 0.0
  %v3712 = vand.u32 %v3188, 4294901760
  %v3713 = vsub.f32 %v3188, %v3712
  %v3714 = vand.u32 %v3713, 4294901760
  %3715 = vmatmul.mubr.f32.gmra.mrb[0].mxu0 %v3714
  %v3716 = vpop.f32.mrb[0].mxu0
  %v3717 = vadd.f32 %v3606, %v3716
  %v3718 = vpop.f32.mrb[0].mxu0
  %3719 = vmatprep.mubr.f32.mxu0 0.0
  %v3720 = vand.u32 %v3189, 4294901760
  %v3721 = vsub.f32 %v3189, %v3720
  %v3722 = vand.u32 %v3721, 4294901760
  %3723 = vmatmul.mubr.f32.gmra.mrb[0].mxu0 %v3722
  %v3724 = vpop.f32.mrb[0].mxu0
  %v3725 = vadd.f32 %v3613, %v3724
  %v3726 = vpop.f32.mrb[0].mxu0
  %3727 = vmatprep.mubr.f32.mxu0 0.0
  %v3728 = vand.u32 %v3190, 4294901760
  %v3729 = vsub.f32 %v3190, %v3728
  %v3730 = vand.u32 %v3729, 4294901760
  %3731 = vmatmul.mubr.f32.gmra.mrb[0].mxu0 %v3730
  %v3732 = vpop.f32.mrb[0].mxu0
  %v3733 = vadd.f32 %v3620, %v3732
  %v3734 = vpop.f32.mrb[0].mxu0
  %3735 = vdwg.mxu0
  %3736 = vmatprep.subr.mxu0 0.0
  %v3737 = vand.u32 %v3192, 4294901760
  %v3738 = vsub.f32 %v3192, %v3737
  %v3739 = vand.u32 %v3738, 4294901760
  %3740 = vmatpush1.msra.mxu0 %v3739
  %3741 = vmatprep.subr.mxu0 0.0
  %v3742 = vand.u32 %v3193, 4294901760
  %v3743 = vsub.f32 %v3193, %v3742
  %v3744 = vand.u32 %v3743, 4294901760
  %3745 = vmatpush1.msra.mxu0 %v3744
  %3746 = vmatprep.subr.mxu0 0.0
  %v3747 = vand.u32 %v3194, 4294901760
  %v3748 = vsub.f32 %v3194, %v3747
  %v3749 = vand.u32 %v3748, 4294901760
  %3750 = vmatpush1.msra.mxu0 %v3749
  %3751 = vmatprep.subr.mxu0 0.0
  %v3752 = vand.u32 %v3195, 4294901760
  %v3753 = vsub.f32 %v3195, %v3752
  %v3754 = vand.u32 %v3753, 4294901760
  %3755 = vmatpush1.msra.mxu0 %v3754
  %3756 = vmatprep.subr.mxu0 0.0
  %v3757 = vand.u32 %v3196, 4294901760
  %v3758 = vsub.f32 %v3196, %v3757
  %v3759 = vand.u32 %v3758, 4294901760
  %3760 = vmatpush1.msra.mxu0 %v3759
  %3761 = vmatprep.subr.mxu0 0.0
  %v3762 = vand.u32 %v3197, 4294901760
  %v3763 = vsub.f32 %v3197, %v3762
  %v3764 = vand.u32 %v3763, 4294901760
  %3765 = vmatpush1.msra.mxu0 %v3764
  %3766 = vmatprep.subr.mxu0 0.0
  %v3767 = vand.u32 %v3198, 4294901760
  %v3768 = vsub.f32 %v3198, %v3767
  %v3769 = vand.u32 %v3768, 4294901760
  %3770 = vmatpush1.msra.mxu0 %v3769
  %3771 = vmatprep.subr.mxu0 0.0
  %v3772 = vand.u32 %v3199, 4294901760
  %v3773 = vsub.f32 %v3199, %v3772
  %v3774 = vand.u32 %v3773, 4294901760
  %3775 = vmatpush1.msra.mxu0 %v3774
  %3776 = vmatprep.subr.mxu0 0.0
  %v3777 = vand.u32 %v3200, 4294901760
  %v3778 = vsub.f32 %v3200, %v3777
  %v3779 = vand.u32 %v3778, 4294901760
  %3780 = vmatpush1.msra.mxu0 %v3779
  %3781 = vmatprep.subr.mxu0 0.0
  %v3782 = vand.u32 %v3201, 4294901760
  %v3783 = vsub.f32 %v3201, %v3782
  %v3784 = vand.u32 %v3783, 4294901760
  %3785 = vmatpush1.msra.mxu0 %v3784
  %3786 = vmatprep.subr.mxu0 0.0
  %v3787 = vand.u32 %v3202, 4294901760
  %v3788 = vsub.f32 %v3202, %v3787
  %v3789 = vand.u32 %v3788, 4294901760
  %3790 = vmatpush1.msra.mxu0 %v3789
  %3791 = vmatprep.subr.mxu0 0.0
  %v3792 = vand.u32 %v3203, 4294901760
  %v3793 = vsub.f32 %v3203, %v3792
  %v3794 = vand.u32 %v3793, 4294901760
  %3795 = vmatpush1.msra.mxu0 %v3794
  %3796 = vmatprep.subr.mxu0 0.0
  %v3797 = vand.u32 %v3204, 4294901760
  %v3798 = vsub.f32 %v3204, %v3797
  %v3799 = vand.u32 %v3798, 4294901760
  %3800 = vmatpush1.msra.mxu0 %v3799
  %3801 = vmatprep.subr.mxu0 0.0
  %v3802 = vand.u32 %v3205, 4294901760
  %v3803 = vsub.f32 %v3205, %v3802
  %v3804 = vand.u32 %v3803, 4294901760
  %3805 = vmatpush1.msra.mxu0 %v3804
  %3806 = vmatprep.subr.mxu0 0.0
  %v3807 = vand.u32 %v3206, 4294901760
  %v3808 = vsub.f32 %v3206, %v3807
  %v3809 = vand.u32 %v3808, 4294901760
  %3810 = vmatpush1.msra.mxu0 %v3809
  %3811 = vmatprep.subr.mxu0 0.0
  %v3812 = vand.u32 %v3207, 4294901760
  %v3813 = vsub.f32 %v3207, %v3812
  %v3814 = vand.u32 %v3813, 4294901760
  %3815 = vmatpush1.msra.mxu0 %v3814
  %3816 = vmatprep.subr.mxu0 0.0
  %3817 = vmatpush1.msra.mxu0 0.0
  %3818 = vmatprep.subr.mxu0 0.0
  %3819 = vmatpush1.msra.mxu0 0.0
  %3820 = vmatprep.subr.mxu0 0.0
  %3821 = vmatpush1.msra.mxu0 0.0
  %3822 = vmatprep.subr.mxu0 0.0
  %3823 = vmatpush1.msra.mxu0 0.0
  %3824 = vmatprep.subr.mxu0 0.0
  %3825 = vmatpush1.msra.mxu0 0.0
  %3826 = vmatprep.subr.mxu0 0.0
  %3827 = vmatpush1.msra.mxu0 0.0
  %3828 = vmatprep.subr.mxu0 0.0
  %3829 = vmatpush1.msra.mxu0 0.0
  %3830 = vmatprep.subr.mxu0 0.0
  %3831 = vmatpush1.msra.mxu0 0.0
  %3832 = vmatprep.subr.mxu0 0.0
  %3833 = vmatpush1.msra.mxu0 0.0
  %3834 = vmatprep.subr.mxu0 0.0
  %3835 = vmatpush1.msra.mxu0 0.0
  %3836 = vmatprep.subr.mxu0 0.0
  %3837 = vmatpush1.msra.mxu0 0.0
  %3838 = vmatprep.subr.mxu0 0.0
  %3839 = vmatpush1.msra.mxu0 0.0
  %3840 = vmatprep.subr.mxu0 0.0
  %3841 = vmatpush1.msra.mxu0 0.0
  %3842 = vmatprep.subr.mxu0 0.0
  %3843 = vmatpush1.msra.mxu0 0.0
  %3844 = vmatprep.subr.mxu0 0.0
  %3845 = vmatpush1.msra.mxu0 0.0
  %3846 = vmatprep.subr.mxu0 0.0
  %3847 = vmatpush1.msra.mxu0 0.0
  %3848 = vmatprep.mubr.f32.mxu0 0.0
  %v3849 = vand.u32 %v3187, 4294901760
  %3850 = vmatmul.mubr.f32.gmra.mrb[0].mxu0 %v3849
  %v3851 = vpop.f32.mrb[0].mxu0
  %v3852 = vadd.f32 %v3709, %v3851
  %v3853 = vpop.f32.mrb[0].mxu0
  %3854 = vmatprep.mubr.f32.mxu0 0.0
  %v3855 = vand.u32 %v3188, 4294901760
  %3856 = vmatmul.mubr.f32.gmra.mrb[0].mxu0 %v3855
  %v3857 = vpop.f32.mrb[0].mxu0
  %v3858 = vadd.f32 %v3717, %v3857
  %v3859 = vpop.f32.mrb[0].mxu0
  %3860 = vmatprep.mubr.f32.mxu0 0.0
  %v3861 = vand.u32 %v3189, 4294901760
  %3862 = vmatmul.mubr.f32.gmra.mrb[0].mxu0 %v3861
  %v3863 = vpop.f32.mrb[0].mxu0
  %v3864 = vadd.f32 %v3725, %v3863
  %v3865 = vpop.f32.mrb[0].mxu0
  %3866 = vmatprep.mubr.f32.mxu0 0.0
  %v3867 = vand.u32 %v3190, 4294901760
  %3868 = vmatmul.mubr.f32.gmra.mrb[0].mxu0 %v3867
  %v3869 = vpop.f32.mrb[0].mxu0
  %v3870 = vadd.f32 %v3733, %v3869
  %v3871 = vpop.f32.mrb[0].mxu0
  %3872 = vdwg.mxu0
  %3873 = vmatprep.subr.mxu0 0.0
  %v3874 = vand.u32 %v3192, 4294901760
  %3875 = vmatpush1.msra.mxu0 %v3874
  %3876 = vmatprep.subr.mxu0 0.0
  %v3877 = vand.u32 %v3193, 4294901760
  %3878 = vmatpush1.msra.mxu0 %v3877
  %3879 = vmatprep.subr.mxu0 0.0
  %v3880 = vand.u32 %v3194, 4294901760
  %3881 = vmatpush1.msra.mxu0 %v3880
  %3882 = vmatprep.subr.mxu0 0.0
  %v3883 = vand.u32 %v3195, 4294901760
  %3884 = vmatpush1.msra.mxu0 %v3883
  %3885 = vmatprep.subr.mxu0 0.0
  %v3886 = vand.u32 %v3196, 4294901760
  %3887 = vmatpush1.msra.mxu0 %v3886
  %3888 = vmatprep.subr.mxu0 0.0
  %v3889 = vand.u32 %v3197, 4294901760
  %3890 = vmatpush1.msra.mxu0 %v3889
  %3891 = vmatprep.subr.mxu0 0.0
  %v3892 = vand.u32 %v3198, 4294901760
  %3893 = vmatpush1.msra.mxu0 %v3892
  %3894 = vmatprep.subr.mxu0 0.0
  %v3895 = vand.u32 %v3199, 4294901760
  %3896 = vmatpush1.msra.mxu0 %v3895
  %3897 = vmatprep.subr.mxu0 0.0
  %v3898 = vand.u32 %v3200, 4294901760
  %3899 = vmatpush1.msra.mxu0 %v3898
  %3900 = vmatprep.subr.mxu0 0.0
  %v3901 = vand.u32 %v3201, 4294901760
  %3902 = vmatpush1.msra.mxu0 %v3901
  %3903 = vmatprep.subr.mxu0 0.0
  %v3904 = vand.u32 %v3202, 4294901760
  %3905 = vmatpush1.msra.mxu0 %v3904
  %3906 = vmatprep.subr.mxu0 0.0
  %v3907 = vand.u32 %v3203, 4294901760
  %3908 = vmatpush1.msra.mxu0 %v3907
  %3909 = vmatprep.subr.mxu0 0.0
  %v3910 = vand.u32 %v3204, 4294901760
  %3911 = vmatpush1.msra.mxu0 %v3910
  %3912 = vmatprep.subr.mxu0 0.0
  %v3913 = vand.u32 %v3205, 4294901760
  %3914 = vmatpush1.msra.mxu0 %v3913
  %3915 = vmatprep.subr.mxu0 0.0
  %v3916 = vand.u32 %v3206, 4294901760
  %3917 = vmatpush1.msra.mxu0 %v3916
  %3918 = vmatprep.subr.mxu0 0.0
  %v3919 = vand.u32 %v3207, 4294901760
  %3920 = vmatpush1.msra.mxu0 %v3919
  %3921 = vmatprep.subr.mxu0 0.0
  %3922 = vmatpush1.msra.mxu0 0.0
  %3923 = vmatprep.subr.mxu0 0.0
  %3924 = vmatpush1.msra.mxu0 0.0
  %3925 = vmatprep.subr.mxu0 0.0
  %3926 = vmatpush1.msra.mxu0 0.0
  %3927 = vmatprep.subr.mxu0 0.0
  %3928 = vmatpush1.msra.mxu0 0.0
  %3929 = vmatprep.subr.mxu0 0.0
  %3930 = vmatpush1.msra.mxu0 0.0
  %3931 = vmatprep.subr.mxu0 0.0
  %3932 = vmatpush1.msra.mxu0 0.0
  %3933 = vmatprep.subr.mxu0 0.0
  %3934 = vmatpush1.msra.mxu0 0.0
  %3935 = vmatprep.subr.mxu0 0.0
  %3936 = vmatpush1.msra.mxu0 0.0
  %3937 = vmatprep.subr.mxu0 0.0
  %3938 = vmatpush1.msra.mxu0 0.0
  %3939 = vmatprep.subr.mxu0 0.0
  %3940 = vmatpush1.msra.mxu0 0.0
  %3941 = vmatprep.subr.mxu0 0.0
  %3942 = vmatpush1.msra.mxu0 0.0
  %3943 = vmatprep.subr.mxu0 0.0
  %3944 = vmatpush1.msra.mxu0 0.0
  %3945 = vmatprep.subr.mxu0 0.0
  %3946 = vmatpush1.msra.mxu0 0.0
  %3947 = vmatprep.subr.mxu0 0.0
  %3948 = vmatpush1.msra.mxu0 0.0
  %3949 = vmatprep.subr.mxu0 0.0
  %3950 = vmatpush1.msra.mxu0 0.0
  %3951 = vmatprep.subr.mxu0 0.0
  %3952 = vmatpush1.msra.mxu0 0.0
  %3953 = vmatprep.mubr.f32.mxu0 0.0
  %v3954 = vand.u32 %v3187, 4294901760
  %3955 = vmatmul.mubr.f32.gmra.mrb[0].mxu0 %v3954
  %v3956 = vpop.f32.mrb[0].mxu0
  %v3957 = vadd.f32 %v3852, %v3956
  %v3958 = vpop.f32.mrb[0].mxu0
  %3959 = vmatprep.mubr.f32.mxu0 0.0
  %v3960 = vand.u32 %v3188, 4294901760
  %3961 = vmatmul.mubr.f32.gmra.mrb[0].mxu0 %v3960
  %v3962 = vpop.f32.mrb[0].mxu0
  %v3963 = vadd.f32 %v3858, %v3962
  %v3964 = vpop.f32.mrb[0].mxu0
  %3965 = vmatprep.mubr.f32.mxu0 0.0
  %v3966 = vand.u32 %v3189, 4294901760
  %3967 = vmatmul.mubr.f32.gmra.mrb[0].mxu0 %v3966
  %v3968 = vpop.f32.mrb[0].mxu0
  %v3969 = vadd.f32 %v3864, %v3968
  %v3970 = vpop.f32.mrb[0].mxu0
  %3971 = vmatprep.mubr.f32.mxu0 0.0
  %v3972 = vand.u32 %v3190, 4294901760
  %3973 = vmatmul.mubr.f32.gmra.mrb[0].mxu0 %v3972
  %v3974 = vpop.f32.mrb[0].mxu0
  %v3975 = vadd.f32 %v3870, %v3974
  %v3976 = vpop.f32.mrb[0].mxu0
  %3977 = vdwg.mxu0
  %v3978 = vadd.f32 %v3183, %v3957
  %v3979 = vadd.f32 %v3184, %v3963
  %v3980 = vadd.f32 %v3185, %v3969
  %v3981 = vadd.f32 %v3186, %v3975
  %v3982 = vld [vmem:[%s0 + $0x6] sm:$0xff]
  %v3983 = vld [vmem:[%s0 + $0xe] sm:$0xff]
  %v3984 = vld [vmem:[%s0 + $0x1e] sm:$0xff]
  %v3985 = vld [vmem:[%s0 + $0x26] sm:$0xff]
  %s3986 = scalar_lea.vmem %s1, 640
  %v3987 = vld [vmem:[%s3986] sm:$0xff]
  %v3988 = vld [vmem:[%s3986 + $0x8] sm:$0xff]
  %v3989 = vld [vmem:[%s3986 + $0x10] sm:$0xff]
  %v3990 = vld [vmem:[%s3986 + $0x18] sm:$0xff]
  %v3991 = vld [vmem:[%s3986 + $0x20] sm:$0xff]
  %v3992 = vld [vmem:[%s3986 + $0x28] sm:$0xff]
  %v3993 = vld [vmem:[%s3986 + $0x30] sm:$0xff]
  %v3994 = vld [vmem:[%s3986 + $0x38] sm:$0xff]
  %v3995 = vld [vmem:[%s3986 + $0x40] sm:$0xff]
  %v3996 = vld [vmem:[%s3986 + $0x48] sm:$0xff]
  %v3997 = vld [vmem:[%s3986 + $0x50] sm:$0xff]
  %v3998 = vld [vmem:[%s3986 + $0x58] sm:$0xff]
  %v3999 = vld [vmem:[%s3986 + $0x60] sm:$0xff]
  %v4000 = vld [vmem:[%s3986 + $0x68] sm:$0xff]
  %v4001 = vld [vmem:[%s3986 + $0x70] sm:$0xff]
  %v4002 = vld [vmem:[%s3986 + $0x78] sm:$0xff]
  %4003 = vmatprep.subr.mxu0 0.0
  %v4004 = vand.u32 %v3987, 4294901760
  %4005 = vmatpush1.msra.mxu0 %v4004
  %4006 = vmatprep.subr.mxu0 0.0
  %v4007 = vand.u32 %v3988, 4294901760
  %4008 = vmatpush1.msra.mxu0 %v4007
  %4009 = vmatprep.subr.mxu0 0.0
  %v4010 = vand.u32 %v3989, 4294901760
  %4011 = vmatpush1.msra.mxu0 %v4010
  %4012 = vmatprep.subr.mxu0 0.0
  %v4013 = vand.u32 %v3990, 4294901760
  %4014 = vmatpush1.msra.mxu0 %v4013
  %4015 = vmatprep.subr.mxu0 0.0
  %v4016 = vand.u32 %v3991, 4294901760
  %4017 = vmatpush1.msra.mxu0 %v4016
  %4018 = vmatprep.subr.mxu0 0.0
  %v4019 = vand.u32 %v3992, 4294901760
  %4020 = vmatpush1.msra.mxu0 %v4019
  %4021 = vmatprep.subr.mxu0 0.0
  %v4022 = vand.u32 %v3993, 4294901760
  %4023 = vmatpush1.msra.mxu0 %v4022
  %4024 = vmatprep.subr.mxu0 0.0
  %v4025 = vand.u32 %v3994, 4294901760
  %4026 = vmatpush1.msra.mxu0 %v4025
  %4027 = vmatprep.subr.mxu0 0.0
  %v4028 = vand.u32 %v3995, 4294901760
  %4029 = vmatpush1.msra.mxu0 %v4028
  %4030 = vmatprep.subr.mxu0 0.0
  %v4031 = vand.u32 %v3996, 4294901760
  %4032 = vmatpush1.msra.mxu0 %v4031
  %4033 = vmatprep.subr.mxu0 0.0
  %v4034 = vand.u32 %v3997, 4294901760
  %4035 = vmatpush1.msra.mxu0 %v4034
  %4036 = vmatprep.subr.mxu0 0.0
  %v4037 = vand.u32 %v3998, 4294901760
  %4038 = vmatpush1.msra.mxu0 %v4037
  %4039 = vmatprep.subr.mxu0 0.0
  %v4040 = vand.u32 %v3999, 4294901760
  %4041 = vmatpush1.msra.mxu0 %v4040
  %4042 = vmatprep.subr.mxu0 0.0
  %v4043 = vand.u32 %v4000, 4294901760
  %4044 = vmatpush1.msra.mxu0 %v4043
  %4045 = vmatprep.subr.mxu0 0.0
  %v4046 = vand.u32 %v4001, 4294901760
  %4047 = vmatpush1.msra.mxu0 %v4046
  %4048 = vmatprep.subr.mxu0 0.0
  %v4049 = vand.u32 %v4002, 4294901760
  %4050 = vmatpush1.msra.mxu0 %v4049
  %4051 = vmatprep.subr.mxu0 0.0
  %4052 = vmatpush1.msra.mxu0 0.0
  %4053 = vmatprep.subr.mxu0 0.0
  %4054 = vmatpush1.msra.mxu0 0.0
  %4055 = vmatprep.subr.mxu0 0.0
  %4056 = vmatpush1.msra.mxu0 0.0
  %4057 = vmatprep.subr.mxu0 0.0
  %4058 = vmatpush1.msra.mxu0 0.0
  %4059 = vmatprep.subr.mxu0 0.0
  %4060 = vmatpush1.msra.mxu0 0.0
  %4061 = vmatprep.subr.mxu0 0.0
  %4062 = vmatpush1.msra.mxu0 0.0
  %4063 = vmatprep.subr.mxu0 0.0
  %4064 = vmatpush1.msra.mxu0 0.0
  %4065 = vmatprep.subr.mxu0 0.0
  %4066 = vmatpush1.msra.mxu0 0.0
  %4067 = vmatprep.subr.mxu0 0.0
  %4068 = vmatpush1.msra.mxu0 0.0
  %4069 = vmatprep.subr.mxu0 0.0
  %4070 = vmatpush1.msra.mxu0 0.0
  %4071 = vmatprep.subr.mxu0 0.0
  %4072 = vmatpush1.msra.mxu0 0.0
  %4073 = vmatprep.subr.mxu0 0.0
  %4074 = vmatpush1.msra.mxu0 0.0
  %4075 = vmatprep.subr.mxu0 0.0
  %4076 = vmatpush1.msra.mxu0 0.0
  %4077 = vmatprep.subr.mxu0 0.0
  %4078 = vmatpush1.msra.mxu0 0.0
  %4079 = vmatprep.subr.mxu0 0.0
  %4080 = vmatpush1.msra.mxu0 0.0
  %4081 = vmatprep.subr.mxu0 0.0
  %4082 = vmatpush1.msra.mxu0 0.0
  %4083 = vmatprep.mubr.f32.mxu0 0.0
  %v4084 = vand.u32 %v3982, 4294901760
  %v4085 = vsub.f32 %v3982, %v4084
  %v4086 = vand.u32 %v4085, 4294901760
  %v4087 = vsub.f32 %v4085, %v4086
  %v4088 = vand.u32 %v4087, 4294901760
  %4089 = vmatmul.mubr.f32.gmra.mrb[0].mxu0 %v4088
  %v4090 = vpop.f32.mrb[0].mxu0
  %v4091 = vadd.f32 0.0, %v4090
  %v4092 = vpop.f32.mrb[0].mxu0
  %4093 = vmatprep.mubr.f32.mxu0 0.0
  %v4094 = vand.u32 %v3983, 4294901760
  %v4095 = vsub.f32 %v3983, %v4094
  %v4096 = vand.u32 %v4095, 4294901760
  %v4097 = vsub.f32 %v4095, %v4096
  %v4098 = vand.u32 %v4097, 4294901760
  %4099 = vmatmul.mubr.f32.gmra.mrb[0].mxu0 %v4098
  %v4100 = vpop.f32.mrb[0].mxu0
  %v4101 = vadd.f32 0.0, %v4100
  %v4102 = vpop.f32.mrb[0].mxu0
  %4103 = vmatprep.mubr.f32.mxu0 0.0
  %v4104 = vand.u32 %v3984, 4294901760
  %v4105 = vsub.f32 %v3984, %v4104
  %v4106 = vand.u32 %v4105, 4294901760
  %v4107 = vsub.f32 %v4105, %v4106
  %v4108 = vand.u32 %v4107, 4294901760
  %4109 = vmatmul.mubr.f32.gmra.mrb[0].mxu0 %v4108
  %v4110 = vpop.f32.mrb[0].mxu0
  %v4111 = vadd.f32 0.0, %v4110
  %v4112 = vpop.f32.mrb[0].mxu0
  %4113 = vmatprep.mubr.f32.mxu0 0.0
  %v4114 = vand.u32 %v3985, 4294901760
  %v4115 = vsub.f32 %v3985, %v4114
  %v4116 = vand.u32 %v4115, 4294901760
  %v4117 = vsub.f32 %v4115, %v4116
  %v4118 = vand.u32 %v4117, 4294901760
  %4119 = vmatmul.mubr.f32.gmra.mrb[0].mxu0 %v4118
  %v4120 = vpop.f32.mrb[0].mxu0
  %v4121 = vadd.f32 0.0, %v4120
  %v4122 = vpop.f32.mrb[0].mxu0
  %4123 = vdwg.mxu0
  %4124 = vmatprep.subr.mxu0 0.0
  %v4125 = vand.u32 %v3987, 4294901760
  %v4126 = vsub.f32 %v3987, %v4125
  %v4127 = vand.u32 %v4126, 4294901760
  %v4128 = vsub.f32 %v4126, %v4127
  %v4129 = vand.u32 %v4128, 4294901760
  %4130 = vmatpush1.msra.mxu0 %v4129
  %4131 = vmatprep.subr.mxu0 0.0
  %v4132 = vand.u32 %v3988, 4294901760
  %v4133 = vsub.f32 %v3988, %v4132
  %v4134 = vand.u32 %v4133, 4294901760
  %v4135 = vsub.f32 %v4133, %v4134
  %v4136 = vand.u32 %v4135, 4294901760
  %4137 = vmatpush1.msra.mxu0 %v4136
  %4138 = vmatprep.subr.mxu0 0.0
  %v4139 = vand.u32 %v3989, 4294901760
  %v4140 = vsub.f32 %v3989, %v4139
  %v4141 = vand.u32 %v4140, 4294901760
  %v4142 = vsub.f32 %v4140, %v4141
  %v4143 = vand.u32 %v4142, 4294901760
  %4144 = vmatpush1.msra.mxu0 %v4143
  %4145 = vmatprep.subr.mxu0 0.0
  %v4146 = vand.u32 %v3990, 4294901760
  %v4147 = vsub.f32 %v3990, %v4146
  %v4148 = vand.u32 %v4147, 4294901760
  %v4149 = vsub.f32 %v4147, %v4148
  %v4150 = vand.u32 %v4149, 4294901760
  %4151 = vmatpush1.msra.mxu0 %v4150
  %4152 = vmatprep.subr.mxu0 0.0
  %v4153 = vand.u32 %v3991, 4294901760
  %v4154 = vsub.f32 %v3991, %v4153
  %v4155 = vand.u32 %v4154, 4294901760
  %v4156 = vsub.f32 %v4154, %v4155
  %v4157 = vand.u32 %v4156, 4294901760
  %4158 = vmatpush1.msra.mxu0 %v4157
  %4159 = vmatprep.subr.mxu0 0.0
  %v4160 = vand.u32 %v3992, 4294901760
  %v4161 = vsub.f32 %v3992, %v4160
  %v4162 = vand.u32 %v4161, 4294901760
  %v4163 = vsub.f32 %v4161, %v4162
  %v4164 = vand.u32 %v4163, 4294901760
  %4165 = vmatpush1.msra.mxu0 %v4164
  %4166 = vmatprep.subr.mxu0 0.0
  %v4167 = vand.u32 %v3993, 4294901760
  %v4168 = vsub.f32 %v3993, %v4167
  %v4169 = vand.u32 %v4168, 4294901760
  %v4170 = vsub.f32 %v4168, %v4169
  %v4171 = vand.u32 %v4170, 4294901760
  %4172 = vmatpush1.msra.mxu0 %v4171
  %4173 = vmatprep.subr.mxu0 0.0
  %v4174 = vand.u32 %v3994, 4294901760
  %v4175 = vsub.f32 %v3994, %v4174
  %v4176 = vand.u32 %v4175, 4294901760
  %v4177 = vsub.f32 %v4175, %v4176
  %v4178 = vand.u32 %v4177, 4294901760
  %4179 = vmatpush1.msra.mxu0 %v4178
  %4180 = vmatprep.subr.mxu0 0.0
  %v4181 = vand.u32 %v3995, 4294901760
  %v4182 = vsub.f32 %v3995, %v4181
  %v4183 = vand.u32 %v4182, 4294901760
  %v4184 = vsub.f32 %v4182, %v4183
  %v4185 = vand.u32 %v4184, 4294901760
  %4186 = vmatpush1.msra.mxu0 %v4185
  %4187 = vmatprep.subr.mxu0 0.0
  %v4188 = vand.u32 %v3996, 4294901760
  %v4189 = vsub.f32 %v3996, %v4188
  %v4190 = vand.u32 %v4189, 4294901760
  %v4191 = vsub.f32 %v4189, %v4190
  %v4192 = vand.u32 %v4191, 4294901760
  %4193 = vmatpush1.msra.mxu0 %v4192
  %4194 = vmatprep.subr.mxu0 0.0
  %v4195 = vand.u32 %v3997, 4294901760
  %v4196 = vsub.f32 %v3997, %v4195
  %v4197 = vand.u32 %v4196, 4294901760
  %v4198 = vsub.f32 %v4196, %v4197
  %v4199 = vand.u32 %v4198, 4294901760
  %4200 = vmatpush1.msra.mxu0 %v4199
  %4201 = vmatprep.subr.mxu0 0.0
  %v4202 = vand.u32 %v3998, 4294901760
  %v4203 = vsub.f32 %v3998, %v4202
  %v4204 = vand.u32 %v4203, 4294901760
  %v4205 = vsub.f32 %v4203, %v4204
  %v4206 = vand.u32 %v4205, 4294901760
  %4207 = vmatpush1.msra.mxu0 %v4206
  %4208 = vmatprep.subr.mxu0 0.0
  %v4209 = vand.u32 %v3999, 4294901760
  %v4210 = vsub.f32 %v3999, %v4209
  %v4211 = vand.u32 %v4210, 4294901760
  %v4212 = vsub.f32 %v4210, %v4211
  %v4213 = vand.u32 %v4212, 4294901760
  %4214 = vmatpush1.msra.mxu0 %v4213
  %4215 = vmatprep.subr.mxu0 0.0
  %v4216 = vand.u32 %v4000, 4294901760
  %v4217 = vsub.f32 %v4000, %v4216
  %v4218 = vand.u32 %v4217, 4294901760
  %v4219 = vsub.f32 %v4217, %v4218
  %v4220 = vand.u32 %v4219, 4294901760
  %4221 = vmatpush1.msra.mxu0 %v4220
  %4222 = vmatprep.subr.mxu0 0.0
  %v4223 = vand.u32 %v4001, 4294901760
  %v4224 = vsub.f32 %v4001, %v4223
  %v4225 = vand.u32 %v4224, 4294901760
  %v4226 = vsub.f32 %v4224, %v4225
  %v4227 = vand.u32 %v4226, 4294901760
  %4228 = vmatpush1.msra.mxu0 %v4227
  %4229 = vmatprep.subr.mxu0 0.0
  %v4230 = vand.u32 %v4002, 4294901760
  %v4231 = vsub.f32 %v4002, %v4230
  %v4232 = vand.u32 %v4231, 4294901760
  %v4233 = vsub.f32 %v4231, %v4232
  %v4234 = vand.u32 %v4233, 4294901760
  %4235 = vmatpush1.msra.mxu0 %v4234
  %4236 = vmatprep.subr.mxu0 0.0
  %4237 = vmatpush1.msra.mxu0 0.0
  %4238 = vmatprep.subr.mxu0 0.0
  %4239 = vmatpush1.msra.mxu0 0.0
  %4240 = vmatprep.subr.mxu0 0.0
  %4241 = vmatpush1.msra.mxu0 0.0
  %4242 = vmatprep.subr.mxu0 0.0
  %4243 = vmatpush1.msra.mxu0 0.0
  %4244 = vmatprep.subr.mxu0 0.0
  %4245 = vmatpush1.msra.mxu0 0.0
  %4246 = vmatprep.subr.mxu0 0.0
  %4247 = vmatpush1.msra.mxu0 0.0
  %4248 = vmatprep.subr.mxu0 0.0
  %4249 = vmatpush1.msra.mxu0 0.0
  %4250 = vmatprep.subr.mxu0 0.0
  %4251 = vmatpush1.msra.mxu0 0.0
  %4252 = vmatprep.subr.mxu0 0.0
  %4253 = vmatpush1.msra.mxu0 0.0
  %4254 = vmatprep.subr.mxu0 0.0
  %4255 = vmatpush1.msra.mxu0 0.0
  %4256 = vmatprep.subr.mxu0 0.0
  %4257 = vmatpush1.msra.mxu0 0.0
  %4258 = vmatprep.subr.mxu0 0.0
  %4259 = vmatpush1.msra.mxu0 0.0
  %4260 = vmatprep.subr.mxu0 0.0
  %4261 = vmatpush1.msra.mxu0 0.0
  %4262 = vmatprep.subr.mxu0 0.0
  %4263 = vmatpush1.msra.mxu0 0.0
  %4264 = vmatprep.subr.mxu0 0.0
  %4265 = vmatpush1.msra.mxu0 0.0
  %4266 = vmatprep.subr.mxu0 0.0
  %4267 = vmatpush1.msra.mxu0 0.0
  %4268 = vmatprep.mubr.f32.mxu0 0.0
  %v4269 = vand.u32 %v3982, 4294901760
  %4270 = vmatmul.mubr.f32.gmra.mrb[0].mxu0 %v4269
  %v4271 = vpop.f32.mrb[0].mxu0
  %v4272 = vadd.f32 %v4091, %v4271
  %v4273 = vpop.f32.mrb[0].mxu0
  %4274 = vmatprep.mubr.f32.mxu0 0.0
  %v4275 = vand.u32 %v3983, 4294901760
  %4276 = vmatmul.mubr.f32.gmra.mrb[0].mxu0 %v4275
  %v4277 = vpop.f32.mrb[0].mxu0
  %v4278 = vadd.f32 %v4101, %v4277
  %v4279 = vpop.f32.mrb[0].mxu0
  %4280 = vmatprep.mubr.f32.mxu0 0.0
  %v4281 = vand.u32 %v3984, 4294901760
  %4282 = vmatmul.mubr.f32.gmra.mrb[0].mxu0 %v4281
  %v4283 = vpop.f32.mrb[0].mxu0
  %v4284 = vadd.f32 %v4111, %v4283
  %v4285 = vpop.f32.mrb[0].mxu0
  %4286 = vmatprep.mubr.f32.mxu0 0.0
  %v4287 = vand.u32 %v3985, 4294901760
  %4288 = vmatmul.mubr.f32.gmra.mrb[0].mxu0 %v4287
  %v4289 = vpop.f32.mrb[0].mxu0
  %v4290 = vadd.f32 %v4121, %v4289
  %v4291 = vpop.f32.mrb[0].mxu0
  %4292 = vdwg.mxu0
  %4293 = vmatprep.subr.mxu0 0.0
  %v4294 = vand.u32 %v3987, 4294901760
  %v4295 = vsub.f32 %v3987, %v4294
  %4296 = vmatpush1.msra.mxu0 %v4295
  %4297 = vmatprep.subr.mxu0 0.0
  %v4298 = vand.u32 %v3988, 4294901760
  %v4299 = vsub.f32 %v3988, %v4298
  %4300 = vmatpush1.msra.mxu0 %v4299
  %4301 = vmatprep.subr.mxu0 0.0
  %v4302 = vand.u32 %v3989, 4294901760
  %v4303 = vsub.f32 %v3989, %v4302
  %4304 = vmatpush1.msra.mxu0 %v4303
  %4305 = vmatprep.subr.mxu0 0.0
  %v4306 = vand.u32 %v3990, 4294901760
  %v4307 = vsub.f32 %v3990, %v4306
  %4308 = vmatpush1.msra.mxu0 %v4307
  %4309 = vmatprep.subr.mxu0 0.0
  %v4310 = vand.u32 %v3991, 4294901760
  %v4311 = vsub.f32 %v3991, %v4310
  %4312 = vmatpush1.msra.mxu0 %v4311
  %4313 = vmatprep.subr.mxu0 0.0
  %v4314 = vand.u32 %v3992, 4294901760
  %v4315 = vsub.f32 %v3992, %v4314
  %4316 = vmatpush1.msra.mxu0 %v4315
  %4317 = vmatprep.subr.mxu0 0.0
  %v4318 = vand.u32 %v3993, 4294901760
  %v4319 = vsub.f32 %v3993, %v4318
  %4320 = vmatpush1.msra.mxu0 %v4319
  %4321 = vmatprep.subr.mxu0 0.0
  %v4322 = vand.u32 %v3994, 4294901760
  %v4323 = vsub.f32 %v3994, %v4322
  %4324 = vmatpush1.msra.mxu0 %v4323
  %4325 = vmatprep.subr.mxu0 0.0
  %v4326 = vand.u32 %v3995, 4294901760
  %v4327 = vsub.f32 %v3995, %v4326
  %4328 = vmatpush1.msra.mxu0 %v4327
  %4329 = vmatprep.subr.mxu0 0.0
  %v4330 = vand.u32 %v3996, 4294901760
  %v4331 = vsub.f32 %v3996, %v4330
  %4332 = vmatpush1.msra.mxu0 %v4331
  %4333 = vmatprep.subr.mxu0 0.0
  %v4334 = vand.u32 %v3997, 4294901760
  %v4335 = vsub.f32 %v3997, %v4334
  %4336 = vmatpush1.msra.mxu0 %v4335
  %4337 = vmatprep.subr.mxu0 0.0
  %v4338 = vand.u32 %v3998, 4294901760
  %v4339 = vsub.f32 %v3998, %v4338
  %4340 = vmatpush1.msra.mxu0 %v4339
  %4341 = vmatprep.subr.mxu0 0.0
  %v4342 = vand.u32 %v3999, 4294901760
  %v4343 = vsub.f32 %v3999, %v4342
  %4344 = vmatpush1.msra.mxu0 %v4343
  %4345 = vmatprep.subr.mxu0 0.0
  %v4346 = vand.u32 %v4000, 4294901760
  %v4347 = vsub.f32 %v4000, %v4346
  %4348 = vmatpush1.msra.mxu0 %v4347
  %4349 = vmatprep.subr.mxu0 0.0
  %v4350 = vand.u32 %v4001, 4294901760
  %v4351 = vsub.f32 %v4001, %v4350
  %4352 = vmatpush1.msra.mxu0 %v4351
  %4353 = vmatprep.subr.mxu0 0.0
  %v4354 = vand.u32 %v4002, 4294901760
  %v4355 = vsub.f32 %v4002, %v4354
  %4356 = vmatpush1.msra.mxu0 %v4355
  %4357 = vmatprep.subr.mxu0 0.0
  %4358 = vmatpush1.msra.mxu0 0.0
  %4359 = vmatprep.subr.mxu0 0.0
  %4360 = vmatpush1.msra.mxu0 0.0
  %4361 = vmatprep.subr.mxu0 0.0
  %4362 = vmatpush1.msra.mxu0 0.0
  %4363 = vmatprep.subr.mxu0 0.0
  %4364 = vmatpush1.msra.mxu0 0.0
  %4365 = vmatprep.subr.mxu0 0.0
  %4366 = vmatpush1.msra.mxu0 0.0
  %4367 = vmatprep.subr.mxu0 0.0
  %4368 = vmatpush1.msra.mxu0 0.0
  %4369 = vmatprep.subr.mxu0 0.0
  %4370 = vmatpush1.msra.mxu0 0.0
  %4371 = vmatprep.subr.mxu0 0.0
  %4372 = vmatpush1.msra.mxu0 0.0
  %4373 = vmatprep.subr.mxu0 0.0
  %4374 = vmatpush1.msra.mxu0 0.0
  %4375 = vmatprep.subr.mxu0 0.0
  %4376 = vmatpush1.msra.mxu0 0.0
  %4377 = vmatprep.subr.mxu0 0.0
  %4378 = vmatpush1.msra.mxu0 0.0
  %4379 = vmatprep.subr.mxu0 0.0
  %4380 = vmatpush1.msra.mxu0 0.0
  %4381 = vmatprep.subr.mxu0 0.0
  %4382 = vmatpush1.msra.mxu0 0.0
  %4383 = vmatprep.subr.mxu0 0.0
  %4384 = vmatpush1.msra.mxu0 0.0
  %4385 = vmatprep.subr.mxu0 0.0
  %4386 = vmatpush1.msra.mxu0 0.0
  %4387 = vmatprep.subr.mxu0 0.0
  %4388 = vmatpush1.msra.mxu0 0.0
  %4389 = vmatprep.mubr.f32.mxu0 0.0
  %v4390 = vand.u32 %v3982, 4294901760
  %v4391 = vsub.f32 %v3982, %v4390
  %4392 = vmatmul.mubr.f32.gmra.mrb[0].mxu0 %v4391
  %v4393 = vpop.f32.mrb[0].mxu0
  %v4394 = vadd.f32 %v4272, %v4393
  %v4395 = vpop.f32.mrb[0].mxu0
  %4396 = vmatprep.mubr.f32.mxu0 0.0
  %v4397 = vand.u32 %v3983, 4294901760
  %v4398 = vsub.f32 %v3983, %v4397
  %4399 = vmatmul.mubr.f32.gmra.mrb[0].mxu0 %v4398
  %v4400 = vpop.f32.mrb[0].mxu0
  %v4401 = vadd.f32 %v4278, %v4400
  %v4402 = vpop.f32.mrb[0].mxu0
  %4403 = vmatprep.mubr.f32.mxu0 0.0
  %v4404 = vand.u32 %v3984, 4294901760
  %v4405 = vsub.f32 %v3984, %v4404
  %4406 = vmatmul.mubr.f32.gmra.mrb[0].mxu0 %v4405
  %v4407 = vpop.f32.mrb[0].mxu0
  %v4408 = vadd.f32 %v4284, %v4407
  %v4409 = vpop.f32.mrb[0].mxu0
  %4410 = vmatprep.mubr.f32.mxu0 0.0
  %v4411 = vand.u32 %v3985, 4294901760
  %v4412 = vsub.f32 %v3985, %v4411
  %4413 = vmatmul.mubr.f32.gmra.mrb[0].mxu0 %v4412
  %v4414 = vpop.f32.mrb[0].mxu0
  %v4415 = vadd.f32 %v4290, %v4414
  %v4416 = vpop.f32.mrb[0].mxu0
  %4417 = vdwg.mxu0
  %4418 = vmatprep.subr.mxu0 0.0
  %v4419 = vand.u32 %v3987, 4294901760
  %4420 = vmatpush1.msra.mxu0 %v4419
  %4421 = vmatprep.subr.mxu0 0.0
  %v4422 = vand.u32 %v3988, 4294901760
  %4423 = vmatpush1.msra.mxu0 %v4422
  %4424 = vmatprep.subr.mxu0 0.0
  %v4425 = vand.u32 %v3989, 4294901760
  %4426 = vmatpush1.msra.mxu0 %v4425
  %4427 = vmatprep.subr.mxu0 0.0
  %v4428 = vand.u32 %v3990, 4294901760
  %4429 = vmatpush1.msra.mxu0 %v4428
  %4430 = vmatprep.subr.mxu0 0.0
  %v4431 = vand.u32 %v3991, 4294901760
  %4432 = vmatpush1.msra.mxu0 %v4431
  %4433 = vmatprep.subr.mxu0 0.0
  %v4434 = vand.u32 %v3992, 4294901760
  %4435 = vmatpush1.msra.mxu0 %v4434
  %4436 = vmatprep.subr.mxu0 0.0
  %v4437 = vand.u32 %v3993, 4294901760
  %4438 = vmatpush1.msra.mxu0 %v4437
  %4439 = vmatprep.subr.mxu0 0.0
  %v4440 = vand.u32 %v3994, 4294901760
  %4441 = vmatpush1.msra.mxu0 %v4440
  %4442 = vmatprep.subr.mxu0 0.0
  %v4443 = vand.u32 %v3995, 4294901760
  %4444 = vmatpush1.msra.mxu0 %v4443
  %4445 = vmatprep.subr.mxu0 0.0
  %v4446 = vand.u32 %v3996, 4294901760
  %4447 = vmatpush1.msra.mxu0 %v4446
  %4448 = vmatprep.subr.mxu0 0.0
  %v4449 = vand.u32 %v3997, 4294901760
  %4450 = vmatpush1.msra.mxu0 %v4449
  %4451 = vmatprep.subr.mxu0 0.0
  %v4452 = vand.u32 %v3998, 4294901760
  %4453 = vmatpush1.msra.mxu0 %v4452
  %4454 = vmatprep.subr.mxu0 0.0
  %v4455 = vand.u32 %v3999, 4294901760
  %4456 = vmatpush1.msra.mxu0 %v4455
  %4457 = vmatprep.subr.mxu0 0.0
  %v4458 = vand.u32 %v4000, 4294901760
  %4459 = vmatpush1.msra.mxu0 %v4458
  %4460 = vmatprep.subr.mxu0 0.0
  %v4461 = vand.u32 %v4001, 4294901760
  %4462 = vmatpush1.msra.mxu0 %v4461
  %4463 = vmatprep.subr.mxu0 0.0
  %v4464 = vand.u32 %v4002, 4294901760
  %4465 = vmatpush1.msra.mxu0 %v4464
  %4466 = vmatprep.subr.mxu0 0.0
  %4467 = vmatpush1.msra.mxu0 0.0
  %4468 = vmatprep.subr.mxu0 0.0
  %4469 = vmatpush1.msra.mxu0 0.0
  %4470 = vmatprep.subr.mxu0 0.0
  %4471 = vmatpush1.msra.mxu0 0.0
  %4472 = vmatprep.subr.mxu0 0.0
  %4473 = vmatpush1.msra.mxu0 0.0
  %4474 = vmatprep.subr.mxu0 0.0
  %4475 = vmatpush1.msra.mxu0 0.0
  %4476 = vmatprep.subr.mxu0 0.0
  %4477 = vmatpush1.msra.mxu0 0.0
  %4478 = vmatprep.subr.mxu0 0.0
  %4479 = vmatpush1.msra.mxu0 0.0
  %4480 = vmatprep.subr.mxu0 0.0
  %4481 = vmatpush1.msra.mxu0 0.0
  %4482 = vmatprep.subr.mxu0 0.0
  %4483 = vmatpush1.msra.mxu0 0.0
  %4484 = vmatprep.subr.mxu0 0.0
  %4485 = vmatpush1.msra.mxu0 0.0
  %4486 = vmatprep.subr.mxu0 0.0
  %4487 = vmatpush1.msra.mxu0 0.0
  %4488 = vmatprep.subr.mxu0 0.0
  %4489 = vmatpush1.msra.mxu0 0.0
  %4490 = vmatprep.subr.mxu0 0.0
  %4491 = vmatpush1.msra.mxu0 0.0
  %4492 = vmatprep.subr.mxu0 0.0
  %4493 = vmatpush1.msra.mxu0 0.0
  %4494 = vmatprep.subr.mxu0 0.0
  %4495 = vmatpush1.msra.mxu0 0.0
  %4496 = vmatprep.subr.mxu0 0.0
  %4497 = vmatpush1.msra.mxu0 0.0
  %4498 = vmatprep.mubr.f32.mxu0 0.0
  %v4499 = vand.u32 %v3982, 4294901760
  %v4500 = vsub.f32 %v3982, %v4499
  %v4501 = vand.u32 %v4500, 4294901760
  %4502 = vmatmul.mubr.f32.gmra.mrb[0].mxu0 %v4501
  %v4503 = vpop.f32.mrb[0].mxu0
  %v4504 = vadd.f32 %v4394, %v4503
  %v4505 = vpop.f32.mrb[0].mxu0
  %4506 = vmatprep.mubr.f32.mxu0 0.0
  %v4507 = vand.u32 %v3983, 4294901760
  %v4508 = vsub.f32 %v3983, %v4507
  %v4509 = vand.u32 %v4508, 4294901760
  %4510 = vmatmul.mubr.f32.gmra.mrb[0].mxu0 %v4509
  %v4511 = vpop.f32.mrb[0].mxu0
  %v4512 = vadd.f32 %v4401, %v4511
  %v4513 = vpop.f32.mrb[0].mxu0
  %4514 = vmatprep.mubr.f32.mxu0 0.0
  %v4515 = vand.u32 %v3984, 4294901760
  %v4516 = vsub.f32 %v3984, %v4515
  %v4517 = vand.u32 %v4516, 4294901760
  %4518 = vmatmul.mubr.f32.gmra.mrb[0].mxu0 %v4517
  %v4519 = vpop.f32.mrb[0].mxu0
  %v4520 = vadd.f32 %v4408, %v4519
  %v4521 = vpop.f32.mrb[0].mxu0
  %4522 = vmatprep.mubr.f32.mxu0 0.0
  %v4523 = vand.u32 %v3985, 4294901760
  %v4524 = vsub.f32 %v3985, %v4523
  %v4525 = vand.u32 %v4524, 4294901760
  %4526 = vmatmul.mubr.f32.gmra.mrb[0].mxu0 %v4525
  %v4527 = vpop.f32.mrb[0].mxu0
  %v4528 = vadd.f32 %v4415, %v4527
  %v4529 = vpop.f32.mrb[0].mxu0
  %4530 = vdwg.mxu0
  %4531 = vmatprep.subr.mxu0 0.0
  %v4532 = vand.u32 %v3987, 4294901760
  %v4533 = vsub.f32 %v3987, %v4532
  %v4534 = vand.u32 %v4533, 4294901760
  %4535 = vmatpush1.msra.mxu0 %v4534
  %4536 = vmatprep.subr.mxu0 0.0
  %v4537 = vand.u32 %v3988, 4294901760
  %v4538 = vsub.f32 %v3988, %v4537
  %v4539 = vand.u32 %v4538, 4294901760
  %4540 = vmatpush1.msra.mxu0 %v4539
  %4541 = vmatprep.subr.mxu0 0.0
  %v4542 = vand.u32 %v3989, 4294901760
  %v4543 = vsub.f32 %v3989, %v4542
  %v4544 = vand.u32 %v4543, 4294901760
  %4545 = vmatpush1.msra.mxu0 %v4544
  %4546 = vmatprep.subr.mxu0 0.0
  %v4547 = vand.u32 %v3990, 4294901760
  %v4548 = vsub.f32 %v3990, %v4547
  %v4549 = vand.u32 %v4548, 4294901760
  %4550 = vmatpush1.msra.mxu0 %v4549
  %4551 = vmatprep.subr.mxu0 0.0
  %v4552 = vand.u32 %v3991, 4294901760
  %v4553 = vsub.f32 %v3991, %v4552
  %v4554 = vand.u32 %v4553, 4294901760
  %4555 = vmatpush1.msra.mxu0 %v4554
  %4556 = vmatprep.subr.mxu0 0.0
  %v4557 = vand.u32 %v3992, 4294901760
  %v4558 = vsub.f32 %v3992, %v4557
  %v4559 = vand.u32 %v4558, 4294901760
  %4560 = vmatpush1.msra.mxu0 %v4559
  %4561 = vmatprep.subr.mxu0 0.0
  %v4562 = vand.u32 %v3993, 4294901760
  %v4563 = vsub.f32 %v3993, %v4562
  %v4564 = vand.u32 %v4563, 4294901760
  %4565 = vmatpush1.msra.mxu0 %v4564
  %4566 = vmatprep.subr.mxu0 0.0
  %v4567 = vand.u32 %v3994, 4294901760
  %v4568 = vsub.f32 %v3994, %v4567
  %v4569 = vand.u32 %v4568, 4294901760
  %4570 = vmatpush1.msra.mxu0 %v4569
  %4571 = vmatprep.subr.mxu0 0.0
  %v4572 = vand.u32 %v3995, 4294901760
  %v4573 = vsub.f32 %v3995, %v4572
  %v4574 = vand.u32 %v4573, 4294901760
  %4575 = vmatpush1.msra.mxu0 %v4574
  %4576 = vmatprep.subr.mxu0 0.0
  %v4577 = vand.u32 %v3996, 4294901760
  %v4578 = vsub.f32 %v3996, %v4577
  %v4579 = vand.u32 %v4578, 4294901760
  %4580 = vmatpush1.msra.mxu0 %v4579
  %4581 = vmatprep.subr.mxu0 0.0
  %v4582 = vand.u32 %v3997, 4294901760
  %v4583 = vsub.f32 %v3997, %v4582
  %v4584 = vand.u32 %v4583, 4294901760
  %4585 = vmatpush1.msra.mxu0 %v4584
  %4586 = vmatprep.subr.mxu0 0.0
  %v4587 = vand.u32 %v3998, 4294901760
  %v4588 = vsub.f32 %v3998, %v4587
  %v4589 = vand.u32 %v4588, 4294901760
  %4590 = vmatpush1.msra.mxu0 %v4589
  %4591 = vmatprep.subr.mxu0 0.0
  %v4592 = vand.u32 %v3999, 4294901760
  %v4593 = vsub.f32 %v3999, %v4592
  %v4594 = vand.u32 %v4593, 4294901760
  %4595 = vmatpush1.msra.mxu0 %v4594
  %4596 = vmatprep.subr.mxu0 0.0
  %v4597 = vand.u32 %v4000, 4294901760
  %v4598 = vsub.f32 %v4000, %v4597
  %v4599 = vand.u32 %v4598, 4294901760
  %4600 = vmatpush1.msra.mxu0 %v4599
  %4601 = vmatprep.subr.mxu0 0.0
  %v4602 = vand.u32 %v4001, 4294901760
  %v4603 = vsub.f32 %v4001, %v4602
  %v4604 = vand.u32 %v4603, 4294901760
  %4605 = vmatpush1.msra.mxu0 %v4604
  %4606 = vmatprep.subr.mxu0 0.0
  %v4607 = vand.u32 %v4002, 4294901760
  %v4608 = vsub.f32 %v4002, %v4607
  %v4609 = vand.u32 %v4608, 4294901760
  %4610 = vmatpush1.msra.mxu0 %v4609
  %4611 = vmatprep.subr.mxu0 0.0
  %4612 = vmatpush1.msra.mxu0 0.0
  %4613 = vmatprep.subr.mxu0 0.0
  %4614 = vmatpush1.msra.mxu0 0.0
  %4615 = vmatprep.subr.mxu0 0.0
  %4616 = vmatpush1.msra.mxu0 0.0
  %4617 = vmatprep.subr.mxu0 0.0
  %4618 = vmatpush1.msra.mxu0 0.0
  %4619 = vmatprep.subr.mxu0 0.0
  %4620 = vmatpush1.msra.mxu0 0.0
  %4621 = vmatprep.subr.mxu0 0.0
  %4622 = vmatpush1.msra.mxu0 0.0
  %4623 = vmatprep.subr.mxu0 0.0
  %4624 = vmatpush1.msra.mxu0 0.0
  %4625 = vmatprep.subr.mxu0 0.0
  %4626 = vmatpush1.msra.mxu0 0.0
  %4627 = vmatprep.subr.mxu0 0.0
  %4628 = vmatpush1.msra.mxu0 0.0
  %4629 = vmatprep.subr.mxu0 0.0
  %4630 = vmatpush1.msra.mxu0 0.0
  %4631 = vmatprep.subr.mxu0 0.0
  %4632 = vmatpush1.msra.mxu0 0.0
  %4633 = vmatprep.subr.mxu0 0.0
  %4634 = vmatpush1.msra.mxu0 0.0
  %4635 = vmatprep.subr.mxu0 0.0
  %4636 = vmatpush1.msra.mxu0 0.0
  %4637 = vmatprep.subr.mxu0 0.0
  %4638 = vmatpush1.msra.mxu0 0.0
  %4639 = vmatprep.subr.mxu0 0.0
  %4640 = vmatpush1.msra.mxu0 0.0
  %4641 = vmatprep.subr.mxu0 0.0
  %4642 = vmatpush1.msra.mxu0 0.0
  %4643 = vmatprep.mubr.f32.mxu0 0.0
  %v4644 = vand.u32 %v3982, 4294901760
  %4645 = vmatmul.mubr.f32.gmra.mrb[0].mxu0 %v4644
  %v4646 = vpop.f32.mrb[0].mxu0
  %v4647 = vadd.f32 %v4504, %v4646
  %v4648 = vpop.f32.mrb[0].mxu0
  %4649 = vmatprep.mubr.f32.mxu0 0.0
  %v4650 = vand.u32 %v3983, 4294901760
  %4651 = vmatmul.mubr.f32.gmra.mrb[0].mxu0 %v4650
  %v4652 = vpop.f32.mrb[0].mxu0
  %v4653 = vadd.f32 %v4512, %v4652
  %v4654 = vpop.f32.mrb[0].mxu0
  %4655 = vmatprep.mubr.f32.mxu0 0.0
  %v4656 = vand.u32 %v3984, 4294901760
  %4657 = vmatmul.mubr.f32.gmra.mrb[0].mxu0 %v4656
  %v4658 = vpop.f32.mrb[0].mxu0
  %v4659 = vadd.f32 %v4520, %v4658
  %v4660 = vpop.f32.mrb[0].mxu0
  %4661 = vmatprep.mubr.f32.mxu0 0.0
  %v4662 = vand.u32 %v3985, 4294901760
  %4663 = vmatmul.mubr.f32.gmra.mrb[0].mxu0 %v4662
  %v4664 = vpop.f32.mrb[0].mxu0
  %v4665 = vadd.f32 %v4528, %v4664
  %v4666 = vpop.f32.mrb[0].mxu0
  %4667 = vdwg.mxu0
  %4668 = vmatprep.subr.mxu0 0.0
  %v4669 = vand.u32 %v3987, 4294901760
  %4670 = vmatpush1.msra.mxu0 %v4669
  %4671 = vmatprep.subr.mxu0 0.0
  %v4672 = vand.u32 %v3988, 4294901760
  %4673 = vmatpush1.msra.mxu0 %v4672
  %4674 = vmatprep.subr.mxu0 0.0
  %v4675 = vand.u32 %v3989, 4294901760
  %4676 = vmatpush1.msra.mxu0 %v4675
  %4677 = vmatprep.subr.mxu0 0.0
  %v4678 = vand.u32 %v3990, 4294901760
  %4679 = vmatpush1.msra.mxu0 %v4678
  %4680 = vmatprep.subr.mxu0 0.0
  %v4681 = vand.u32 %v3991, 4294901760
  %4682 = vmatpush1.msra.mxu0 %v4681
  %4683 = vmatprep.subr.mxu0 0.0
  %v4684 = vand.u32 %v3992, 4294901760
  %4685 = vmatpush1.msra.mxu0 %v4684
  %4686 = vmatprep.subr.mxu0 0.0
  %v4687 = vand.u32 %v3993, 4294901760
  %4688 = vmatpush1.msra.mxu0 %v4687
  %4689 = vmatprep.subr.mxu0 0.0
  %v4690 = vand.u32 %v3994, 4294901760
  %4691 = vmatpush1.msra.mxu0 %v4690
  %4692 = vmatprep.subr.mxu0 0.0
  %v4693 = vand.u32 %v3995, 4294901760
  %4694 = vmatpush1.msra.mxu0 %v4693
  %4695 = vmatprep.subr.mxu0 0.0
  %v4696 = vand.u32 %v3996, 4294901760
  %4697 = vmatpush1.msra.mxu0 %v4696
  %4698 = vmatprep.subr.mxu0 0.0
  %v4699 = vand.u32 %v3997, 4294901760
  %4700 = vmatpush1.msra.mxu0 %v4699
  %4701 = vmatprep.subr.mxu0 0.0
  %v4702 = vand.u32 %v3998, 4294901760
  %4703 = vmatpush1.msra.mxu0 %v4702
  %4704 = vmatprep.subr.mxu0 0.0
  %v4705 = vand.u32 %v3999, 4294901760
  %4706 = vmatpush1.msra.mxu0 %v4705
  %4707 = vmatprep.subr.mxu0 0.0
  %v4708 = vand.u32 %v4000, 4294901760
  %4709 = vmatpush1.msra.mxu0 %v4708
  %4710 = vmatprep.subr.mxu0 0.0
  %v4711 = vand.u32 %v4001, 4294901760
  %4712 = vmatpush1.msra.mxu0 %v4711
  %4713 = vmatprep.subr.mxu0 0.0
  %v4714 = vand.u32 %v4002, 4294901760
  %4715 = vmatpush1.msra.mxu0 %v4714
  %4716 = vmatprep.subr.mxu0 0.0
  %4717 = vmatpush1.msra.mxu0 0.0
  %4718 = vmatprep.subr.mxu0 0.0
  %4719 = vmatpush1.msra.mxu0 0.0
  %4720 = vmatprep.subr.mxu0 0.0
  %4721 = vmatpush1.msra.mxu0 0.0
  %4722 = vmatprep.subr.mxu0 0.0
  %4723 = vmatpush1.msra.mxu0 0.0
  %4724 = vmatprep.subr.mxu0 0.0
  %4725 = vmatpush1.msra.mxu0 0.0
  %4726 = vmatprep.subr.mxu0 0.0
  %4727 = vmatpush1.msra.mxu0 0.0
  %4728 = vmatprep.subr.mxu0 0.0
  %4729 = vmatpush1.msra.mxu0 0.0
  %4730 = vmatprep.subr.mxu0 0.0
  %4731 = vmatpush1.msra.mxu0 0.0
  %4732 = vmatprep.subr.mxu0 0.0
  %4733 = vmatpush1.msra.mxu0 0.0
  %4734 = vmatprep.subr.mxu0 0.0
  %4735 = vmatpush1.msra.mxu0 0.0
  %4736 = vmatprep.subr.mxu0 0.0
  %4737 = vmatpush1.msra.mxu0 0.0
  %4738 = vmatprep.subr.mxu0 0.0
  %4739 = vmatpush1.msra.mxu0 0.0
  %4740 = vmatprep.subr.mxu0 0.0
  %4741 = vmatpush1.msra.mxu0 0.0
  %4742 = vmatprep.subr.mxu0 0.0
  %4743 = vmatpush1.msra.mxu0 0.0
  %4744 = vmatprep.subr.mxu0 0.0
  %4745 = vmatpush1.msra.mxu0 0.0
  %4746 = vmatprep.subr.mxu0 0.0
  %4747 = vmatpush1.msra.mxu0 0.0
  %4748 = vmatprep.mubr.f32.mxu0 0.0
  %v4749 = vand.u32 %v3982, 4294901760
  %4750 = vmatmul.mubr.f32.gmra.mrb[0].mxu0 %v4749
  %v4751 = vpop.f32.mrb[0].mxu0
  %v4752 = vadd.f32 %v4647, %v4751
  %v4753 = vpop.f32.mrb[0].mxu0
  %4754 = vmatprep.mubr.f32.mxu0 0.0
  %v4755 = vand.u32 %v3983, 4294901760
  %4756 = vmatmul.mubr.f32.gmra.mrb[0].mxu0 %v4755
  %v4757 = vpop.f32.mrb[0].mxu0
  %v4758 = vadd.f32 %v4653, %v4757
  %v4759 = vpop.f32.mrb[0].mxu0
  %4760 = vmatprep.mubr.f32.mxu0 0.0
  %v4761 = vand.u32 %v3984, 4294901760
  %4762 = vmatmul.mubr.f32.gmra.mrb[0].mxu0 %v4761
  %v4763 = vpop.f32.mrb[0].mxu0
  %v4764 = vadd.f32 %v4659, %v4763
  %v4765 = vpop.f32.mrb[0].mxu0
  %4766 = vmatprep.mubr.f32.mxu0 0.0
  %v4767 = vand.u32 %v3985, 4294901760
  %4768 = vmatmul.mubr.f32.gmra.mrb[0].mxu0 %v4767
  %v4769 = vpop.f32.mrb[0].mxu0
  %v4770 = vadd.f32 %v4665, %v4769
  %v4771 = vpop.f32.mrb[0].mxu0
  %4772 = vdwg.mxu0
  %v4773 = vadd.f32 %v3978, %v4752
  %v4774 = vadd.f32 %v3979, %v4758
  %v4775 = vadd.f32 %v3980, %v4764
  %v4776 = vadd.f32 %v3981, %v4770
  %v4777 = vld [vmem:[%s0 + $0x8] sm:$0xff]
  %v4778 = vld [vmem:[%s0 + $0x10] sm:$0xff]
  %v4779 = vld [vmem:[%s0 + $0x20] sm:$0xff]
  %v4780 = vld [vmem:[%s0 + $0x28] sm:$0xff]
  %s4781 = scalar_lea.vmem %s1, 768
  %v4782 = vld [vmem:[%s4781] sm:$0xff]
  %v4783 = vld [vmem:[%s4781 + $0x8] sm:$0xff]
  %v4784 = vld [vmem:[%s4781 + $0x10] sm:$0xff]
  %v4785 = vld [vmem:[%s4781 + $0x18] sm:$0xff]
  %v4786 = vld [vmem:[%s4781 + $0x20] sm:$0xff]
  %v4787 = vld [vmem:[%s4781 + $0x28] sm:$0xff]
  %v4788 = vld [vmem:[%s4781 + $0x30] sm:$0xff]
  %v4789 = vld [vmem:[%s4781 + $0x38] sm:$0xff]
  %v4790 = vld [vmem:[%s4781 + $0x40] sm:$0xff]
  %v4791 = vld [vmem:[%s4781 + $0x48] sm:$0xff]
  %v4792 = vld [vmem:[%s4781 + $0x50] sm:$0xff]
  %v4793 = vld [vmem:[%s4781 + $0x58] sm:$0xff]
  %v4794 = vld [vmem:[%s4781 + $0x60] sm:$0xff]
  %v4795 = vld [vmem:[%s4781 + $0x68] sm:$0xff]
  %v4796 = vld [vmem:[%s4781 + $0x70] sm:$0xff]
  %v4797 = vld [vmem:[%s4781 + $0x78] sm:$0xff]
  %4798 = vmatprep.subr.mxu0 0.0
  %v4799 = vand.u32 %v4782, 4294901760
  %4800 = vmatpush1.msra.mxu0 %v4799
  %4801 = vmatprep.subr.mxu0 0.0
  %v4802 = vand.u32 %v4783, 4294901760
  %4803 = vmatpush1.msra.mxu0 %v4802
  %4804 = vmatprep.subr.mxu0 0.0
  %v4805 = vand.u32 %v4784, 4294901760
  %4806 = vmatpush1.msra.mxu0 %v4805
  %4807 = vmatprep.subr.mxu0 0.0
  %v4808 = vand.u32 %v4785, 4294901760
  %4809 = vmatpush1.msra.mxu0 %v4808
  %4810 = vmatprep.subr.mxu0 0.0
  %v4811 = vand.u32 %v4786, 4294901760
  %4812 = vmatpush1.msra.mxu0 %v4811
  %4813 = vmatprep.subr.mxu0 0.0
  %v4814 = vand.u32 %v4787, 4294901760
  %4815 = vmatpush1.msra.mxu0 %v4814
  %4816 = vmatprep.subr.mxu0 0.0
  %v4817 = vand.u32 %v4788, 4294901760
  %4818 = vmatpush1.msra.mxu0 %v4817
  %4819 = vmatprep.subr.mxu0 0.0
  %v4820 = vand.u32 %v4789, 4294901760
  %4821 = vmatpush1.msra.mxu0 %v4820
  %4822 = vmatprep.subr.mxu0 0.0
  %v4823 = vand.u32 %v4790, 4294901760
  %4824 = vmatpush1.msra.mxu0 %v4823
  %4825 = vmatprep.subr.mxu0 0.0
  %v4826 = vand.u32 %v4791, 4294901760
  %4827 = vmatpush1.msra.mxu0 %v4826
  %4828 = vmatprep.subr.mxu0 0.0
  %v4829 = vand.u32 %v4792, 4294901760
  %4830 = vmatpush1.msra.mxu0 %v4829
  %4831 = vmatprep.subr.mxu0 0.0
  %v4832 = vand.u32 %v4793, 4294901760
  %4833 = vmatpush1.msra.mxu0 %v4832
  %4834 = vmatprep.subr.mxu0 0.0
  %v4835 = vand.u32 %v4794, 4294901760
  %4836 = vmatpush1.msra.mxu0 %v4835
  %4837 = vmatprep.subr.mxu0 0.0
  %v4838 = vand.u32 %v4795, 4294901760
  %4839 = vmatpush1.msra.mxu0 %v4838
  %4840 = vmatprep.subr.mxu0 0.0
  %v4841 = vand.u32 %v4796, 4294901760
  %4842 = vmatpush1.msra.mxu0 %v4841
  %4843 = vmatprep.subr.mxu0 0.0
  %v4844 = vand.u32 %v4797, 4294901760
  %4845 = vmatpush1.msra.mxu0 %v4844
  %4846 = vmatprep.subr.mxu0 0.0
  %4847 = vmatpush1.msra.mxu0 0.0
  %4848 = vmatprep.subr.mxu0 0.0
  %4849 = vmatpush1.msra.mxu0 0.0
  %4850 = vmatprep.subr.mxu0 0.0
  %4851 = vmatpush1.msra.mxu0 0.0
  %4852 = vmatprep.subr.mxu0 0.0
  %4853 = vmatpush1.msra.mxu0 0.0
  %4854 = vmatprep.subr.mxu0 0.0
  %4855 = vmatpush1.msra.mxu0 0.0
  %4856 = vmatprep.subr.mxu0 0.0
  %4857 = vmatpush1.msra.mxu0 0.0
  %4858 = vmatprep.subr.mxu0 0.0
  %4859 = vmatpush1.msra.mxu0 0.0
  %4860 = vmatprep.subr.mxu0 0.0
  %4861 = vmatpush1.msra.mxu0 0.0
  %4862 = vmatprep.subr.mxu0 0.0
  %4863 = vmatpush1.msra.mxu0 0.0
  %4864 = vmatprep.subr.mxu0 0.0
  %4865 = vmatpush1.msra.mxu0 0.0
  %4866 = vmatprep.subr.mxu0 0.0
  %4867 = vmatpush1.msra.mxu0 0.0
  %4868 = vmatprep.subr.mxu0 0.0
  %4869 = vmatpush1.msra.mxu0 0.0
  %4870 = vmatprep.subr.mxu0 0.0
  %4871 = vmatpush1.msra.mxu0 0.0
  %4872 = vmatprep.subr.mxu0 0.0
  %4873 = vmatpush1.msra.mxu0 0.0
  %4874 = vmatprep.subr.mxu0 0.0
  %4875 = vmatpush1.msra.mxu0 0.0
  %4876 = vmatprep.subr.mxu0 0.0
  %4877 = vmatpush1.msra.mxu0 0.0
  %4878 = vmatprep.mubr.f32.mxu0 0.0
  %v4879 = vand.u32 %v4777, 4294901760
  %v4880 = vsub.f32 %v4777, %v4879
  %v4881 = vand.u32 %v4880, 4294901760
  %v4882 = vsub.f32 %v4880, %v4881
  %v4883 = vand.u32 %v4882, 4294901760
  %4884 = vmatmul.mubr.f32.gmra.mrb[0].mxu0 %v4883
  %v4885 = vpop.f32.mrb[0].mxu0
  %v4886 = vadd.f32 0.0, %v4885
  %v4887 = vpop.f32.mrb[0].mxu0
  %4888 = vmatprep.mubr.f32.mxu0 0.0
  %v4889 = vand.u32 %v4778, 4294901760
  %v4890 = vsub.f32 %v4778, %v4889
  %v4891 = vand.u32 %v4890, 4294901760
  %v4892 = vsub.f32 %v4890, %v4891
  %v4893 = vand.u32 %v4892, 4294901760
  %4894 = vmatmul.mubr.f32.gmra.mrb[0].mxu0 %v4893
  %v4895 = vpop.f32.mrb[0].mxu0
  %v4896 = vadd.f32 0.0, %v4895
  %v4897 = vpop.f32.mrb[0].mxu0
  %4898 = vmatprep.mubr.f32.mxu0 0.0
  %v4899 = vand.u32 %v4779, 4294901760
  %v4900 = vsub.f32 %v4779, %v4899
  %v4901 = vand.u32 %v4900, 4294901760
  %v4902 = vsub.f32 %v4900, %v4901
  %v4903 = vand.u32 %v4902, 4294901760
  %4904 = vmatmul.mubr.f32.gmra.mrb[0].mxu0 %v4903
  %v4905 = vpop.f32.mrb[0].mxu0
  %v4906 = vadd.f32 0.0, %v4905
  %v4907 = vpop.f32.mrb[0].mxu0
  %4908 = vmatprep.mubr.f32.mxu0 0.0
  %v4909 = vand.u32 %v4780, 4294901760
  %v4910 = vsub.f32 %v4780, %v4909
  %v4911 = vand.u32 %v4910, 4294901760
  %v4912 = vsub.f32 %v4910, %v4911
  %v4913 = vand.u32 %v4912, 4294901760
  %4914 = vmatmul.mubr.f32.gmra.mrb[0].mxu0 %v4913
  %v4915 = vpop.f32.mrb[0].mxu0
  %v4916 = vadd.f32 0.0, %v4915
  %v4917 = vpop.f32.mrb[0].mxu0
  %4918 = vdwg.mxu0
  %4919 = vmatprep.subr.mxu0 0.0
  %v4920 = vand.u32 %v4782, 4294901760
  %v4921 = vsub.f32 %v4782, %v4920
  %v4922 = vand.u32 %v4921, 4294901760
  %v4923 = vsub.f32 %v4921, %v4922
  %v4924 = vand.u32 %v4923, 4294901760
  %4925 = vmatpush1.msra.mxu0 %v4924
  %4926 = vmatprep.subr.mxu0 0.0
  %v4927 = vand.u32 %v4783, 4294901760
  %v4928 = vsub.f32 %v4783, %v4927
  %v4929 = vand.u32 %v4928, 4294901760
  %v4930 = vsub.f32 %v4928, %v4929
  %v4931 = vand.u32 %v4930, 4294901760
  %4932 = vmatpush1.msra.mxu0 %v4931
  %4933 = vmatprep.subr.mxu0 0.0
  %v4934 = vand.u32 %v4784, 4294901760
  %v4935 = vsub.f32 %v4784, %v4934
  %v4936 = vand.u32 %v4935, 4294901760
  %v4937 = vsub.f32 %v4935, %v4936
  %v4938 = vand.u32 %v4937, 4294901760
  %4939 = vmatpush1.msra.mxu0 %v4938
  %4940 = vmatprep.subr.mxu0 0.0
  %v4941 = vand.u32 %v4785, 4294901760
  %v4942 = vsub.f32 %v4785, %v4941
  %v4943 = vand.u32 %v4942, 4294901760
  %v4944 = vsub.f32 %v4942, %v4943
  %v4945 = vand.u32 %v4944, 4294901760
  %4946 = vmatpush1.msra.mxu0 %v4945
  %4947 = vmatprep.subr.mxu0 0.0
  %v4948 = vand.u32 %v4786, 4294901760
  %v4949 = vsub.f32 %v4786, %v4948
  %v4950 = vand.u32 %v4949, 4294901760
  %v4951 = vsub.f32 %v4949, %v4950
  %v4952 = vand.u32 %v4951, 4294901760
  %4953 = vmatpush1.msra.mxu0 %v4952
  %4954 = vmatprep.subr.mxu0 0.0
  %v4955 = vand.u32 %v4787, 4294901760
  %v4956 = vsub.f32 %v4787, %v4955
  %v4957 = vand.u32 %v4956, 4294901760
  %v4958 = vsub.f32 %v4956, %v4957
  %v4959 = vand.u32 %v4958, 4294901760
  %4960 = vmatpush1.msra.mxu0 %v4959
  %4961 = vmatprep.subr.mxu0 0.0
  %v4962 = vand.u32 %v4788, 4294901760
  %v4963 = vsub.f32 %v4788, %v4962
  %v4964 = vand.u32 %v4963, 4294901760
  %v4965 = vsub.f32 %v4963, %v4964
  %v4966 = vand.u32 %v4965, 4294901760
  %4967 = vmatpush1.msra.mxu0 %v4966
  %4968 = vmatprep.subr.mxu0 0.0
  %v4969 = vand.u32 %v4789, 4294901760
  %v4970 = vsub.f32 %v4789, %v4969
  %v4971 = vand.u32 %v4970, 4294901760
  %v4972 = vsub.f32 %v4970, %v4971
  %v4973 = vand.u32 %v4972, 4294901760
  %4974 = vmatpush1.msra.mxu0 %v4973
  %4975 = vmatprep.subr.mxu0 0.0
  %v4976 = vand.u32 %v4790, 4294901760
  %v4977 = vsub.f32 %v4790, %v4976
  %v4978 = vand.u32 %v4977, 4294901760
  %v4979 = vsub.f32 %v4977, %v4978
  %v4980 = vand.u32 %v4979, 4294901760
  %4981 = vmatpush1.msra.mxu0 %v4980
  %4982 = vmatprep.subr.mxu0 0.0
  %v4983 = vand.u32 %v4791, 4294901760
  %v4984 = vsub.f32 %v4791, %v4983
  %v4985 = vand.u32 %v4984, 4294901760
  %v4986 = vsub.f32 %v4984, %v4985
  %v4987 = vand.u32 %v4986, 4294901760
  %4988 = vmatpush1.msra.mxu0 %v4987
  %4989 = vmatprep.subr.mxu0 0.0
  %v4990 = vand.u32 %v4792, 4294901760
  %v4991 = vsub.f32 %v4792, %v4990
  %v4992 = vand.u32 %v4991, 4294901760
  %v4993 = vsub.f32 %v4991, %v4992
  %v4994 = vand.u32 %v4993, 4294901760
  %4995 = vmatpush1.msra.mxu0 %v4994
  %4996 = vmatprep.subr.mxu0 0.0
  %v4997 = vand.u32 %v4793, 4294901760
  %v4998 = vsub.f32 %v4793, %v4997
  %v4999 = vand.u32 %v4998, 4294901760
  %v5000 = vsub.f32 %v4998, %v4999
  %v5001 = vand.u32 %v5000, 4294901760
  %5002 = vmatpush1.msra.mxu0 %v5001
  %5003 = vmatprep.subr.mxu0 0.0
  %v5004 = vand.u32 %v4794, 4294901760
  %v5005 = vsub.f32 %v4794, %v5004
  %v5006 = vand.u32 %v5005, 4294901760
  %v5007 = vsub.f32 %v5005, %v5006
  %v5008 = vand.u32 %v5007, 4294901760
  %5009 = vmatpush1.msra.mxu0 %v5008
  %5010 = vmatprep.subr.mxu0 0.0
  %v5011 = vand.u32 %v4795, 4294901760
  %v5012 = vsub.f32 %v4795, %v5011
  %v5013 = vand.u32 %v5012, 4294901760
  %v5014 = vsub.f32 %v5012, %v5013
  %v5015 = vand.u32 %v5014, 4294901760
  %5016 = vmatpush1.msra.mxu0 %v5015
  %5017 = vmatprep.subr.mxu0 0.0
  %v5018 = vand.u32 %v4796, 4294901760
  %v5019 = vsub.f32 %v4796, %v5018
  %v5020 = vand.u32 %v5019, 4294901760
  %v5021 = vsub.f32 %v5019, %v5020
  %v5022 = vand.u32 %v5021, 4294901760
  %5023 = vmatpush1.msra.mxu0 %v5022
  %5024 = vmatprep.subr.mxu0 0.0
  %v5025 = vand.u32 %v4797, 4294901760
  %v5026 = vsub.f32 %v4797, %v5025
  %v5027 = vand.u32 %v5026, 4294901760
  %v5028 = vsub.f32 %v5026, %v5027
  %v5029 = vand.u32 %v5028, 4294901760
  %5030 = vmatpush1.msra.mxu0 %v5029
  %5031 = vmatprep.subr.mxu0 0.0
  %5032 = vmatpush1.msra.mxu0 0.0
  %5033 = vmatprep.subr.mxu0 0.0
  %5034 = vmatpush1.msra.mxu0 0.0
  %5035 = vmatprep.subr.mxu0 0.0
  %5036 = vmatpush1.msra.mxu0 0.0
  %5037 = vmatprep.subr.mxu0 0.0
  %5038 = vmatpush1.msra.mxu0 0.0
  %5039 = vmatprep.subr.mxu0 0.0
  %5040 = vmatpush1.msra.mxu0 0.0
  %5041 = vmatprep.subr.mxu0 0.0
  %5042 = vmatpush1.msra.mxu0 0.0
  %5043 = vmatprep.subr.mxu0 0.0
  %5044 = vmatpush1.msra.mxu0 0.0
  %5045 = vmatprep.subr.mxu0 0.0
  %5046 = vmatpush1.msra.mxu0 0.0
  %5047 = vmatprep.subr.mxu0 0.0
  %5048 = vmatpush1.msra.mxu0 0.0
  %5049 = vmatprep.subr.mxu0 0.0
  %5050 = vmatpush1.msra.mxu0 0.0
  %5051 = vmatprep.subr.mxu0 0.0
  %5052 = vmatpush1.msra.mxu0 0.0
  %5053 = vmatprep.subr.mxu0 0.0
  %5054 = vmatpush1.msra.mxu0 0.0
  %5055 = vmatprep.subr.mxu0 0.0
  %5056 = vmatpush1.msra.mxu0 0.0
  %5057 = vmatprep.subr.mxu0 0.0
  %5058 = vmatpush1.msra.mxu0 0.0
  %5059 = vmatprep.subr.mxu0 0.0
  %5060 = vmatpush1.msra.mxu0 0.0
  %5061 = vmatprep.subr.mxu0 0.0
  %5062 = vmatpush1.msra.mxu0 0.0
  %5063 = vmatprep.mubr.f32.mxu0 0.0
  %v5064 = vand.u32 %v4777, 4294901760
  %5065 = vmatmul.mubr.f32.gmra.mrb[0].mxu0 %v5064
  %v5066 = vpop.f32.mrb[0].mxu0
  %v5067 = vadd.f32 %v4886, %v5066
  %v5068 = vpop.f32.mrb[0].mxu0
  %5069 = vmatprep.mubr.f32.mxu0 0.0
  %v5070 = vand.u32 %v4778, 4294901760
  %5071 = vmatmul.mubr.f32.gmra.mrb[0].mxu0 %v5070
  %v5072 = vpop.f32.mrb[0].mxu0
  %v5073 = vadd.f32 %v4896, %v5072
  %v5074 = vpop.f32.mrb[0].mxu0
  %5075 = vmatprep.mubr.f32.mxu0 0.0
  %v5076 = vand.u32 %v4779, 4294901760
  %5077 = vmatmul.mubr.f32.gmra.mrb[0].mxu0 %v5076
  %v5078 = vpop.f32.mrb[0].mxu0
  %v5079 = vadd.f32 %v4906, %v5078
  %v5080 = vpop.f32.mrb[0].mxu0
  %5081 = vmatprep.mubr.f32.mxu0 0.0
  %v5082 = vand.u32 %v4780, 4294901760
  %5083 = vmatmul.mubr.f32.gmra.mrb[0].mxu0 %v5082
  %v5084 = vpop.f32.mrb[0].mxu0
  %v5085 = vadd.f32 %v4916, %v5084
  %v5086 = vpop.f32.mrb[0].mxu0
  %5087 = vdwg.mxu0
  %5088 = vmatprep.subr.mxu0 0.0
  %v5089 = vand.u32 %v4782, 4294901760
  %v5090 = vsub.f32 %v4782, %v5089
  %5091 = vmatpush1.msra.mxu0 %v5090
  %5092 = vmatprep.subr.mxu0 0.0
  %v5093 = vand.u32 %v4783, 4294901760
  %v5094 = vsub.f32 %v4783, %v5093
  %5095 = vmatpush1.msra.mxu0 %v5094
  %5096 = vmatprep.subr.mxu0 0.0
  %v5097 = vand.u32 %v4784, 4294901760
  %v5098 = vsub.f32 %v4784, %v5097
  %5099 = vmatpush1.msra.mxu0 %v5098
  %5100 = vmatprep.subr.mxu0 0.0
  %v5101 = vand.u32 %v4785, 4294901760
  %v5102 = vsub.f32 %v4785, %v5101
  %5103 = vmatpush1.msra.mxu0 %v5102
  %5104 = vmatprep.subr.mxu0 0.0
  %v5105 = vand.u32 %v4786, 4294901760
  %v5106 = vsub.f32 %v4786, %v5105
  %5107 = vmatpush1.msra.mxu0 %v5106
  %5108 = vmatprep.subr.mxu0 0.0
  %v5109 = vand.u32 %v4787, 4294901760
  %v5110 = vsub.f32 %v4787, %v5109
  %5111 = vmatpush1.msra.mxu0 %v5110
  %5112 = vmatprep.subr.mxu0 0.0
  %v5113 = vand.u32 %v4788, 4294901760
  %v5114 = vsub.f32 %v4788, %v5113
  %5115 = vmatpush1.msra.mxu0 %v5114
  %5116 = vmatprep.subr.mxu0 0.0
  %v5117 = vand.u32 %v4789, 4294901760
  %v5118 = vsub.f32 %v4789, %v5117
  %5119 = vmatpush1.msra.mxu0 %v5118
  %5120 = vmatprep.subr.mxu0 0.0
  %v5121 = vand.u32 %v4790, 4294901760
  %v5122 = vsub.f32 %v4790, %v5121
  %5123 = vmatpush1.msra.mxu0 %v5122
  %5124 = vmatprep.subr.mxu0 0.0
  %v5125 = vand.u32 %v4791, 4294901760
  %v5126 = vsub.f32 %v4791, %v5125
  %5127 = vmatpush1.msra.mxu0 %v5126
  %5128 = vmatprep.subr.mxu0 0.0
  %v5129 = vand.u32 %v4792, 4294901760
  %v5130 = vsub.f32 %v4792, %v5129
  %5131 = vmatpush1.msra.mxu0 %v5130
  %5132 = vmatprep.subr.mxu0 0.0
  %v5133 = vand.u32 %v4793, 4294901760
  %v5134 = vsub.f32 %v4793, %v5133
  %5135 = vmatpush1.msra.mxu0 %v5134
  %5136 = vmatprep.subr.mxu0 0.0
  %v5137 = vand.u32 %v4794, 4294901760
  %v5138 = vsub.f32 %v4794, %v5137
  %5139 = vmatpush1.msra.mxu0 %v5138
  %5140 = vmatprep.subr.mxu0 0.0
  %v5141 = vand.u32 %v4795, 4294901760
  %v5142 = vsub.f32 %v4795, %v5141
  %5143 = vmatpush1.msra.mxu0 %v5142
  %5144 = vmatprep.subr.mxu0 0.0
  %v5145 = vand.u32 %v4796, 4294901760
  %v5146 = vsub.f32 %v4796, %v5145
  %5147 = vmatpush1.msra.mxu0 %v5146
  %5148 = vmatprep.subr.mxu0 0.0
  %v5149 = vand.u32 %v4797, 4294901760
  %v5150 = vsub.f32 %v4797, %v5149
  %5151 = vmatpush1.msra.mxu0 %v5150
  %5152 = vmatprep.subr.mxu0 0.0
  %5153 = vmatpush1.msra.mxu0 0.0
  %5154 = vmatprep.subr.mxu0 0.0
  %5155 = vmatpush1.msra.mxu0 0.0
  %5156 = vmatprep.subr.mxu0 0.0
  %5157 = vmatpush1.msra.mxu0 0.0
  %5158 = vmatprep.subr.mxu0 0.0
  %5159 = vmatpush1.msra.mxu0 0.0
  %5160 = vmatprep.subr.mxu0 0.0
  %5161 = vmatpush1.msra.mxu0 0.0
  %5162 = vmatprep.subr.mxu0 0.0
  %5163 = vmatpush1.msra.mxu0 0.0
  %5164 = vmatprep.subr.mxu0 0.0
  %5165 = vmatpush1.msra.mxu0 0.0
  %5166 = vmatprep.subr.mxu0 0.0
  %5167 = vmatpush1.msra.mxu0 0.0
  %5168 = vmatprep.subr.mxu0 0.0
  %5169 = vmatpush1.msra.mxu0 0.0
  %5170 = vmatprep.subr.mxu0 0.0
  %5171 = vmatpush1.msra.mxu0 0.0
  %5172 = vmatprep.subr.mxu0 0.0
  %5173 = vmatpush1.msra.mxu0 0.0
  %5174 = vmatprep.subr.mxu0 0.0
  %5175 = vmatpush1.msra.mxu0 0.0
  %5176 = vmatprep.subr.mxu0 0.0
  %5177 = vmatpush1.msra.mxu0 0.0
  %5178 = vmatprep.subr.mxu0 0.0
  %5179 = vmatpush1.msra.mxu0 0.0
  %5180 = vmatprep.subr.mxu0 0.0
  %5181 = vmatpush1.msra.mxu0 0.0
  %5182 = vmatprep.subr.mxu0 0.0
  %5183 = vmatpush1.msra.mxu0 0.0
  %5184 = vmatprep.mubr.f32.mxu0 0.0
  %v5185 = vand.u32 %v4777, 4294901760
  %v5186 = vsub.f32 %v4777, %v5185
  %5187 = vmatmul.mubr.f32.gmra.mrb[0].mxu0 %v5186
  %v5188 = vpop.f32.mrb[0].mxu0
  %v5189 = vadd.f32 %v5067, %v5188
  %v5190 = vpop.f32.mrb[0].mxu0
  %5191 = vmatprep.mubr.f32.mxu0 0.0
  %v5192 = vand.u32 %v4778, 4294901760
  %v5193 = vsub.f32 %v4778, %v5192
  %5194 = vmatmul.mubr.f32.gmra.mrb[0].mxu0 %v5193
  %v5195 = vpop.f32.mrb[0].mxu0
  %v5196 = vadd.f32 %v5073, %v5195
  %v5197 = vpop.f32.mrb[0].mxu0
  %5198 = vmatprep.mubr.f32.mxu0 0.0
  %v5199 = vand.u32 %v4779, 4294901760
  %v5200 = vsub.f32 %v4779, %v5199
  %5201 = vmatmul.mubr.f32.gmra.mrb[0].mxu0 %v5200
  %v5202 = vpop.f32.mrb[0].mxu0
  %v5203 = vadd.f32 %v5079, %v5202
  %v5204 = vpop.f32.mrb[0].mxu0
  %5205 = vmatprep.mubr.f32.mxu0 0.0
  %v5206 = vand.u32 %v4780, 4294901760
  %v5207 = vsub.f32 %v4780, %v5206
  %5208 = vmatmul.mubr.f32.gmra.mrb[0].mxu0 %v5207
  %v5209 = vpop.f32.mrb[0].mxu0
  %v5210 = vadd.f32 %v5085, %v5209
  %v5211 = vpop.f32.mrb[0].mxu0
  %5212 = vdwg.mxu0
  %5213 = vmatprep.subr.mxu0 0.0
  %v5214 = vand.u32 %v4782, 4294901760
  %5215 = vmatpush1.msra.mxu0 %v5214
  %5216 = vmatprep.subr.mxu0 0.0
  %v5217 = vand.u32 %v4783, 4294901760
  %5218 = vmatpush1.msra.mxu0 %v5217
  %5219 = vmatprep.subr.mxu0 0.0
  %v5220 = vand.u32 %v4784, 4294901760
  %5221 = vmatpush1.msra.mxu0 %v5220
  %5222 = vmatprep.subr.mxu0 0.0
  %v5223 = vand.u32 %v4785, 4294901760
  %5224 = vmatpush1.msra.mxu0 %v5223
  %5225 = vmatprep.subr.mxu0 0.0
  %v5226 = vand.u32 %v4786, 4294901760
  %5227 = vmatpush1.msra.mxu0 %v5226
  %5228 = vmatprep.subr.mxu0 0.0
  %v5229 = vand.u32 %v4787, 4294901760
  %5230 = vmatpush1.msra.mxu0 %v5229
  %5231 = vmatprep.subr.mxu0 0.0
  %v5232 = vand.u32 %v4788, 4294901760
  %5233 = vmatpush1.msra.mxu0 %v5232
  %5234 = vmatprep.subr.mxu0 0.0
  %v5235 = vand.u32 %v4789, 4294901760
  %5236 = vmatpush1.msra.mxu0 %v5235
  %5237 = vmatprep.subr.mxu0 0.0
  %v5238 = vand.u32 %v4790, 4294901760
  %5239 = vmatpush1.msra.mxu0 %v5238
  %5240 = vmatprep.subr.mxu0 0.0
  %v5241 = vand.u32 %v4791, 4294901760
  %5242 = vmatpush1.msra.mxu0 %v5241
  %5243 = vmatprep.subr.mxu0 0.0
  %v5244 = vand.u32 %v4792, 4294901760
  %5245 = vmatpush1.msra.mxu0 %v5244
  %5246 = vmatprep.subr.mxu0 0.0
  %v5247 = vand.u32 %v4793, 4294901760
  %5248 = vmatpush1.msra.mxu0 %v5247
  %5249 = vmatprep.subr.mxu0 0.0
  %v5250 = vand.u32 %v4794, 4294901760
  %5251 = vmatpush1.msra.mxu0 %v5250
  %5252 = vmatprep.subr.mxu0 0.0
  %v5253 = vand.u32 %v4795, 4294901760
  %5254 = vmatpush1.msra.mxu0 %v5253
  %5255 = vmatprep.subr.mxu0 0.0
  %v5256 = vand.u32 %v4796, 4294901760
  %5257 = vmatpush1.msra.mxu0 %v5256
  %5258 = vmatprep.subr.mxu0 0.0
  %v5259 = vand.u32 %v4797, 4294901760
  %5260 = vmatpush1.msra.mxu0 %v5259
  %5261 = vmatprep.subr.mxu0 0.0
  %5262 = vmatpush1.msra.mxu0 0.0
  %5263 = vmatprep.subr.mxu0 0.0
  %5264 = vmatpush1.msra.mxu0 0.0
  %5265 = vmatprep.subr.mxu0 0.0
  %5266 = vmatpush1.msra.mxu0 0.0
  %5267 = vmatprep.subr.mxu0 0.0
  %5268 = vmatpush1.msra.mxu0 0.0
  %5269 = vmatprep.subr.mxu0 0.0
  %5270 = vmatpush1.msra.mxu0 0.0
  %5271 = vmatprep.subr.mxu0 0.0
  %5272 = vmatpush1.msra.mxu0 0.0
  %5273 = vmatprep.subr.mxu0 0.0
  %5274 = vmatpush1.msra.mxu0 0.0
  %5275 = vmatprep.subr.mxu0 0.0
  %5276 = vmatpush1.msra.mxu0 0.0
  %5277 = vmatprep.subr.mxu0 0.0
  %5278 = vmatpush1.msra.mxu0 0.0
  %5279 = vmatprep.subr.mxu0 0.0
  %5280 = vmatpush1.msra.mxu0 0.0
  %5281 = vmatprep.subr.mxu0 0.0
  %5282 = vmatpush1.msra.mxu0 0.0
  %5283 = vmatprep.subr.mxu0 0.0
  %5284 = vmatpush1.msra.mxu0 0.0
  %5285 = vmatprep.subr.mxu0 0.0
  %5286 = vmatpush1.msra.mxu0 0.0
  %5287 = vmatprep.subr.mxu0 0.0
  %5288 = vmatpush1.msra.mxu0 0.0
  %5289 = vmatprep.subr.mxu0 0.0
  %5290 = vmatpush1.msra.mxu0 0.0
  %5291 = vmatprep.subr.mxu0 0.0
  %5292 = vmatpush1.msra.mxu0 0.0
  %5293 = vmatprep.mubr.f32.mxu0 0.0
  %v5294 = vand.u32 %v4777, 4294901760
  %v5295 = vsub.f32 %v4777, %v5294
  %v5296 = vand.u32 %v5295, 4294901760
  %5297 = vmatmul.mubr.f32.gmra.mrb[0].mxu0 %v5296
  %v5298 = vpop.f32.mrb[0].mxu0
  %v5299 = vadd.f32 %v5189, %v5298
  %v5300 = vpop.f32.mrb[0].mxu0
  %5301 = vmatprep.mubr.f32.mxu0 0.0
  %v5302 = vand.u32 %v4778, 4294901760
  %v5303 = vsub.f32 %v4778, %v5302
  %v5304 = vand.u32 %v5303, 4294901760
  %5305 = vmatmul.mubr.f32.gmra.mrb[0].mxu0 %v5304
  %v5306 = vpop.f32.mrb[0].mxu0
  %v5307 = vadd.f32 %v5196, %v5306
  %v5308 = vpop.f32.mrb[0].mxu0
  %5309 = vmatprep.mubr.f32.mxu0 0.0
  %v5310 = vand.u32 %v4779, 4294901760
  %v5311 = vsub.f32 %v4779, %v5310
  %v5312 = vand.u32 %v5311, 4294901760
  %5313 = vmatmul.mubr.f32.gmra.mrb[0].mxu0 %v5312
  %v5314 = vpop.f32.mrb[0].mxu0
  %v5315 = vadd.f32 %v5203, %v5314
  %v5316 = vpop.f32.mrb[0].mxu0
  %5317 = vmatprep.mubr.f32.mxu0 0.0
  %v5318 = vand.u32 %v4780, 4294901760
  %v5319 = vsub.f32 %v4780, %v5318
  %v5320 = vand.u32 %v5319, 4294901760
  %5321 = vmatmul.mubr.f32.gmra.mrb[0].mxu0 %v5320
  %v5322 = vpop.f32.mrb[0].mxu0
  %v5323 = vadd.f32 %v5210, %v5322
  %v5324 = vpop.f32.mrb[0].mxu0
  %5325 = vdwg.mxu0
  %5326 = vmatprep.subr.mxu0 0.0
  %v5327 = vand.u32 %v4782, 4294901760
  %v5328 = vsub.f32 %v4782, %v5327
  %v5329 = vand.u32 %v5328, 4294901760
  %5330 = vmatpush1.msra.mxu0 %v5329
  %5331 = vmatprep.subr.mxu0 0.0
  %v5332 = vand.u32 %v4783, 4294901760
  %v5333 = vsub.f32 %v4783, %v5332
  %v5334 = vand.u32 %v5333, 4294901760
  %5335 = vmatpush1.msra.mxu0 %v5334
  %5336 = vmatprep.subr.mxu0 0.0
  %v5337 = vand.u32 %v4784, 4294901760
  %v5338 = vsub.f32 %v4784, %v5337
  %v5339 = vand.u32 %v5338, 4294901760
  %5340 = vmatpush1.msra.mxu0 %v5339
  %5341 = vmatprep.subr.mxu0 0.0
  %v5342 = vand.u32 %v4785, 4294901760
  %v5343 = vsub.f32 %v4785, %v5342
  %v5344 = vand.u32 %v5343, 4294901760
  %5345 = vmatpush1.msra.mxu0 %v5344
  %5346 = vmatprep.subr.mxu0 0.0
  %v5347 = vand.u32 %v4786, 4294901760
  %v5348 = vsub.f32 %v4786, %v5347
  %v5349 = vand.u32 %v5348, 4294901760
  %5350 = vmatpush1.msra.mxu0 %v5349
  %5351 = vmatprep.subr.mxu0 0.0
  %v5352 = vand.u32 %v4787, 4294901760
  %v5353 = vsub.f32 %v4787, %v5352
  %v5354 = vand.u32 %v5353, 4294901760
  %5355 = vmatpush1.msra.mxu0 %v5354
  %5356 = vmatprep.subr.mxu0 0.0
  %v5357 = vand.u32 %v4788, 4294901760
  %v5358 = vsub.f32 %v4788, %v5357
  %v5359 = vand.u32 %v5358, 4294901760
  %5360 = vmatpush1.msra.mxu0 %v5359
  %5361 = vmatprep.subr.mxu0 0.0
  %v5362 = vand.u32 %v4789, 4294901760
  %v5363 = vsub.f32 %v4789, %v5362
  %v5364 = vand.u32 %v5363, 4294901760
  %5365 = vmatpush1.msra.mxu0 %v5364
  %5366 = vmatprep.subr.mxu0 0.0
  %v5367 = vand.u32 %v4790, 4294901760
  %v5368 = vsub.f32 %v4790, %v5367
  %v5369 = vand.u32 %v5368, 4294901760
  %5370 = vmatpush1.msra.mxu0 %v5369
  %5371 = vmatprep.subr.mxu0 0.0
  %v5372 = vand.u32 %v4791, 4294901760
  %v5373 = vsub.f32 %v4791, %v5372
  %v5374 = vand.u32 %v5373, 4294901760
  %5375 = vmatpush1.msra.mxu0 %v5374
  %5376 = vmatprep.subr.mxu0 0.0
  %v5377 = vand.u32 %v4792, 4294901760
  %v5378 = vsub.f32 %v4792, %v5377
  %v5379 = vand.u32 %v5378, 4294901760
  %5380 = vmatpush1.msra.mxu0 %v5379
  %5381 = vmatprep.subr.mxu0 0.0
  %v5382 = vand.u32 %v4793, 4294901760
  %v5383 = vsub.f32 %v4793, %v5382
  %v5384 = vand.u32 %v5383, 4294901760
  %5385 = vmatpush1.msra.mxu0 %v5384
  %5386 = vmatprep.subr.mxu0 0.0
  %v5387 = vand.u32 %v4794, 4294901760
  %v5388 = vsub.f32 %v4794, %v5387
  %v5389 = vand.u32 %v5388, 4294901760
  %5390 = vmatpush1.msra.mxu0 %v5389
  %5391 = vmatprep.subr.mxu0 0.0
  %v5392 = vand.u32 %v4795, 4294901760
  %v5393 = vsub.f32 %v4795, %v5392
  %v5394 = vand.u32 %v5393, 4294901760
  %5395 = vmatpush1.msra.mxu0 %v5394
  %5396 = vmatprep.subr.mxu0 0.0
  %v5397 = vand.u32 %v4796, 4294901760
  %v5398 = vsub.f32 %v4796, %v5397
  %v5399 = vand.u32 %v5398, 4294901760
  %5400 = vmatpush1.msra.mxu0 %v5399
  %5401 = vmatprep.subr.mxu0 0.0
  %v5402 = vand.u32 %v4797, 4294901760
  %v5403 = vsub.f32 %v4797, %v5402
  %v5404 = vand.u32 %v5403, 4294901760
  %5405 = vmatpush1.msra.mxu0 %v5404
  %5406 = vmatprep.subr.mxu0 0.0
  %5407 = vmatpush1.msra.mxu0 0.0
  %5408 = vmatprep.subr.mxu0 0.0
  %5409 = vmatpush1.msra.mxu0 0.0
  %5410 = vmatprep.subr.mxu0 0.0
  %5411 = vmatpush1.msra.mxu0 0.0
  %5412 = vmatprep.subr.mxu0 0.0
  %5413 = vmatpush1.msra.mxu0 0.0
  %5414 = vmatprep.subr.mxu0 0.0
  %5415 = vmatpush1.msra.mxu0 0.0
  %5416 = vmatprep.subr.mxu0 0.0
  %5417 = vmatpush1.msra.mxu0 0.0
  %5418 = vmatprep.subr.mxu0 0.0
  %5419 = vmatpush1.msra.mxu0 0.0
  %5420 = vmatprep.subr.mxu0 0.0
  %5421 = vmatpush1.msra.mxu0 0.0
  %5422 = vmatprep.subr.mxu0 0.0
  %5423 = vmatpush1.msra.mxu0 0.0
  %5424 = vmatprep.subr.mxu0 0.0
  %5425 = vmatpush1.msra.mxu0 0.0
  %5426 = vmatprep.subr.mxu0 0.0
  %5427 = vmatpush1.msra.mxu0 0.0
  %5428 = vmatprep.subr.mxu0 0.0
  %5429 = vmatpush1.msra.mxu0 0.0
  %5430 = vmatprep.subr.mxu0 0.0
  %5431 = vmatpush1.msra.mxu0 0.0
  %5432 = vmatprep.subr.mxu0 0.0
  %5433 = vmatpush1.msra.mxu0 0.0
  %5434 = vmatprep.subr.mxu0 0.0
  %5435 = vmatpush1.msra.mxu0 0.0
  %5436 = vmatprep.subr.mxu0 0.0
  %5437 = vmatpush1.msra.mxu0 0.0
  %5438 = vmatprep.mubr.f32.mxu0 0.0
  %v5439 = vand.u32 %v4777, 4294901760
  %5440 = vmatmul.mubr.f32.gmra.mrb[0].mxu0 %v5439
  %v5441 = vpop.f32.mrb[0].mxu0
  %v5442 = vadd.f32 %v5299, %v5441
  %v5443 = vpop.f32.mrb[0].mxu0
  %5444 = vmatprep.mubr.f32.mxu0 0.0
  %v5445 = vand.u32 %v4778, 4294901760
  %5446 = vmatmul.mubr.f32.gmra.mrb[0].mxu0 %v5445
  %v5447 = vpop.f32.mrb[0].mxu0
  %v5448 = vadd.f32 %v5307, %v5447
  %v5449 = vpop.f32.mrb[0].mxu0
  %5450 = vmatprep.mubr.f32.mxu0 0.0
  %v5451 = vand.u32 %v4779, 4294901760
  %5452 = vmatmul.mubr.f32.gmra.mrb[0].mxu0 %v5451
  %v5453 = vpop.f32.mrb[0].mxu0
  %v5454 = vadd.f32 %v5315, %v5453
  %v5455 = vpop.f32.mrb[0].mxu0
  %5456 = vmatprep.mubr.f32.mxu0 0.0
  %v5457 = vand.u32 %v4780, 4294901760
  %5458 = vmatmul.mubr.f32.gmra.mrb[0].mxu0 %v5457
  %v5459 = vpop.f32.mrb[0].mxu0
  %v5460 = vadd.f32 %v5323, %v5459
  %v5461 = vpop.f32.mrb[0].mxu0
  %5462 = vdwg.mxu0
  %5463 = vmatprep.subr.mxu0 0.0
  %v5464 = vand.u32 %v4782, 4294901760
  %5465 = vmatpush1.msra.mxu0 %v5464
  %5466 = vmatprep.subr.mxu0 0.0
  %v5467 = vand.u32 %v4783, 4294901760
  %5468 = vmatpush1.msra.mxu0 %v5467
  %5469 = vmatprep.subr.mxu0 0.0
  %v5470 = vand.u32 %v4784, 4294901760
  %5471 = vmatpush1.msra.mxu0 %v5470
  %5472 = vmatprep.subr.mxu0 0.0
  %v5473 = vand.u32 %v4785, 4294901760
  %5474 = vmatpush1.msra.mxu0 %v5473
  %5475 = vmatprep.subr.mxu0 0.0
  %v5476 = vand.u32 %v4786, 4294901760
  %5477 = vmatpush1.msra.mxu0 %v5476
  %5478 = vmatprep.subr.mxu0 0.0
  %v5479 = vand.u32 %v4787, 4294901760
  %5480 = vmatpush1.msra.mxu0 %v5479
  %5481 = vmatprep.subr.mxu0 0.0
  %v5482 = vand.u32 %v4788, 4294901760
  %5483 = vmatpush1.msra.mxu0 %v5482
  %5484 = vmatprep.subr.mxu0 0.0
  %v5485 = vand.u32 %v4789, 4294901760
  %5486 = vmatpush1.msra.mxu0 %v5485
  %5487 = vmatprep.subr.mxu0 0.0
  %v5488 = vand.u32 %v4790, 4294901760
  %5489 = vmatpush1.msra.mxu0 %v5488
  %5490 = vmatprep.subr.mxu0 0.0
  %v5491 = vand.u32 %v4791, 4294901760
  %5492 = vmatpush1.msra.mxu0 %v5491
  %5493 = vmatprep.subr.mxu0 0.0
  %v5494 = vand.u32 %v4792, 4294901760
  %5495 = vmatpush1.msra.mxu0 %v5494
  %5496 = vmatprep.subr.mxu0 0.0
  %v5497 = vand.u32 %v4793, 4294901760
  %5498 = vmatpush1.msra.mxu0 %v5497
  %5499 = vmatprep.subr.mxu0 0.0
  %v5500 = vand.u32 %v4794, 4294901760
  %5501 = vmatpush1.msra.mxu0 %v5500
  %5502 = vmatprep.subr.mxu0 0.0
  %v5503 = vand.u32 %v4795, 4294901760
  %5504 = vmatpush1.msra.mxu0 %v5503
  %5505 = vmatprep.subr.mxu0 0.0
  %v5506 = vand.u32 %v4796, 4294901760
  %5507 = vmatpush1.msra.mxu0 %v5506
  %5508 = vmatprep.subr.mxu0 0.0
  %v5509 = vand.u32 %v4797, 4294901760
  %5510 = vmatpush1.msra.mxu0 %v5509
  %5511 = vmatprep.subr.mxu0 0.0
  %5512 = vmatpush1.msra.mxu0 0.0
  %5513 = vmatprep.subr.mxu0 0.0
  %5514 = vmatpush1.msra.mxu0 0.0
  %5515 = vmatprep.subr.mxu0 0.0
  %5516 = vmatpush1.msra.mxu0 0.0
  %5517 = vmatprep.subr.mxu0 0.0
  %5518 = vmatpush1.msra.mxu0 0.0
  %5519 = vmatprep.subr.mxu0 0.0
  %5520 = vmatpush1.msra.mxu0 0.0
  %5521 = vmatprep.subr.mxu0 0.0
  %5522 = vmatpush1.msra.mxu0 0.0
  %5523 = vmatprep.subr.mxu0 0.0
  %5524 = vmatpush1.msra.mxu0 0.0
  %5525 = vmatprep.subr.mxu0 0.0
  %5526 = vmatpush1.msra.mxu0 0.0
  %5527 = vmatprep.subr.mxu0 0.0
  %5528 = vmatpush1.msra.mxu0 0.0
  %5529 = vmatprep.subr.mxu0 0.0
  %5530 = vmatpush1.msra.mxu0 0.0
  %5531 = vmatprep.subr.mxu0 0.0
  %5532 = vmatpush1.msra.mxu0 0.0
  %5533 = vmatprep.subr.mxu0 0.0
  %5534 = vmatpush1.msra.mxu0 0.0
  %5535 = vmatprep.subr.mxu0 0.0
  %5536 = vmatpush1.msra.mxu0 0.0
  %5537 = vmatprep.subr.mxu0 0.0
  %5538 = vmatpush1.msra.mxu0 0.0
  %5539 = vmatprep.subr.mxu0 0.0
  %5540 = vmatpush1.msra.mxu0 0.0
  %5541 = vmatprep.subr.mxu0 0.0
  %5542 = vmatpush1.msra.mxu0 0.0
  %5543 = vmatprep.mubr.f32.mxu0 0.0
  %v5544 = vand.u32 %v4777, 4294901760
  %5545 = vmatmul.mubr.f32.gmra.mrb[0].mxu0 %v5544
  %v5546 = vpop.f32.mrb[0].mxu0
  %v5547 = vadd.f32 %v5442, %v5546
  %v5548 = vpop.f32.mrb[0].mxu0
  %5549 = vmatprep.mubr.f32.mxu0 0.0
  %v5550 = vand.u32 %v4778, 4294901760
  %5551 = vmatmul.mubr.f32.gmra.mrb[0].mxu0 %v5550
  %v5552 = vpop.f32.mrb[0].mxu0
  %v5553 = vadd.f32 %v5448, %v5552
  %v5554 = vpop.f32.mrb[0].mxu0
  %5555 = vmatprep.mubr.f32.mxu0 0.0
  %v5556 = vand.u32 %v4779, 4294901760
  %5557 = vmatmul.mubr.f32.gmra.mrb[0].mxu0 %v5556
  %v5558 = vpop.f32.mrb[0].mxu0
  %v5559 = vadd.f32 %v5454, %v5558
  %v5560 = vpop.f32.mrb[0].mxu0
  %5561 = vmatprep.mubr.f32.mxu0 0.0
  %v5562 = vand.u32 %v4780, 4294901760
  %5563 = vmatmul.mubr.f32.gmra.mrb[0].mxu0 %v5562
  %v5564 = vpop.f32.mrb[0].mxu0
  %v5565 = vadd.f32 %v5460, %v5564
  %v5566 = vpop.f32.mrb[0].mxu0
  %5567 = vdwg.mxu0
  %v5568 = vadd.f32 %v4773, %v5547
  %v5569 = vadd.f32 %v4774, %v5553
  %v5570 = vadd.f32 %v4775, %v5559
  %v5571 = vadd.f32 %v4776, %v5565
  %v5572 = vld [vmem:[%s2] sm:$0x1]
  %v5574 = vlaneseq
  %v5575 = vshrl.u32 %v5574, 7
  %v5576 = vsub.s32 0, %v5575
  %v5577 = vrot.slane %v5572, %v5576
  %v5579 = vadd.f32 %v5568, %v5577
  %v5580 = vadd.f32 %v5569, %v5577
  %v5581 = vadd.f32 %v5570, %v5577
  %v5582 = vadd.f32 %v5571, %v5577
  %5583 = vst [vmem:[%s3] sm:$0xff] %v5579
  %5584 = vst [vmem:[%s3 + $0x8] sm:$0xff] %v5580
  %5585 = vst [vmem:[%s3 + $0x10] sm:$0xff] %v5581
  %5586 = vst [vmem:[%s3 + $0x18] sm:$0xff] %v5582
  %v5587 = vadd.f32 %v5579, %v5580
  %v5588 = vrot.slane %v5587, 4
  %v5589 = vadd.f32 %v5587, %v5588
  %v5590 = vrot.slane %v5589, 2
  %v5591 = vadd.f32 %v5589, %v5590
  %v5592 = vrot.slane %v5591, 1
  %v5593 = vadd.f32 %v5591, %v5592
  %v5594 = vadd.f32 %v5581, %v5582
  %v5595 = vrot.slane %v5594, 4
  %v5596 = vadd.f32 %v5594, %v5595
  %v5597 = vrot.slane %v5596, 2
  %v5598 = vadd.f32 %v5596, %v5597
  %v5599 = vrot.slane %v5598, 1
  %v5600 = vadd.f32 %v5598, %v5599
  %v5601 = vmul.f32 %v5579, %v5579
  %v5602 = vmul.f32 %v5580, %v5580
  %v5603 = vmul.f32 %v5581, %v5581
  %v5604 = vmul.f32 %v5582, %v5582
  %v5605 = vadd.f32 %v5601, %v5602
  %v5606 = vrot.slane %v5605, 4
  %v5607 = vadd.f32 %v5605, %v5606
  %v5608 = vrot.slane %v5607, 2
  %v5609 = vadd.f32 %v5607, %v5608
  %v5610 = vrot.slane %v5609, 1
  %v5611 = vadd.f32 %v5609, %v5610
  %v5612 = vadd.f32 %v5603, %v5604
  %v5613 = vrot.slane %v5612, 4
  %v5614 = vadd.f32 %v5612, %v5613
  %v5615 = vrot.slane %v5614, 2
  %v5616 = vadd.f32 %v5614, %v5615
  %v5617 = vrot.slane %v5616, 1
  %v5618 = vadd.f32 %v5616, %v5617
  %vm5619 = vcmask 1040384
  %v5620 = vsel %vm5619, %v5593, %v5611
  %v5621 = vsel %vm5619, %v5600, %v5618
  %5622 = vst [vmem:[%s4] sm:$0x3] %v5620
  %5623 = vst [vmem:[%s4 + $0x2] sm:$0x3] %v5621
  // Predicated region
  $region14: #{mtam_forward.2} parent=0 // pred_check
    _
  $region15: #{mtam_forward.2} parent=0 // pred_check_branch
    %5625 = sbr.rel (0) target = $region17
  $region16: #{mtam_forward.2} parent=0 // pred_region
    _
  $region17: #{mtam_forward.2} parent=0 // pred_fallthru
    _
  // Predicated region
  $region18: #{mtam_forward.2} parent=0 // pred_check
    _
  $region19: #{mtam_forward.2} parent=0 // pred_check_branch
    %5627 = sbr.rel (0) target = $region21
  $region20: #{mtam_forward.2} parent=0 // pred_region
    _
  $region21: #{mtam_forward.2} parent=0 // pred_fallthru
    _
  // Predicated region
  $region22: #{mtam_forward.2} parent=0 // pred_check
    _
  $region23: #{mtam_forward.2} parent=0 // pred_check_branch
    %5629 = sbr.rel (0) target = $region25
  $region24: #{mtam_forward.2} parent=0 // pred_region
    _
  $region25: #{mtam_forward.2} parent=0 // pred_fallthru
    _
  // Predicated region
  $region26: #{mtam_forward.2} parent=0 // pred_check
    _
  $region27: #{mtam_forward.2} parent=0 // pred_check_branch
    %5631 = sbr.rel (0) target = $region29
  $region28: #{mtam_forward.2} parent=0 // pred_region
    _
  $region29: #{mtam_forward.2} parent=0 // pred_fallthru
    _

// kernel: squeeze.59
$region0: #{squeeze.59}
  %s0 = inlined_call_operand.vmem [shape: f32[2,128], index: 0, kind: input, shape index: {}]
  %s1 = inlined_call_operand.vmem [shape: f32[2,16,8], index: 1, kind: output, shape index: {}]
  $region1: #{squeeze.59} parent=0
    #allocation0 [shape = 'u8[4096]{0}', space=vmem, size = 0x1000, scoped, tag = 'scoped mem for input reshape']
    %s3 = sshllo.u32 0, 2
    %v4 = vld [vmem:[%s0] sm:%s3]
    %5 = vst [vmem:[#allocation0] sm:%s3] %v4
    %v6 = vld [vmem:[#allocation0] sm:$0x3]
    %vm7 = vcmask 64512
    %8 = vst.msk [vmem:[%s1] ss:$16 sm:$0x3] %vm7, %v6
    %v9 = vld [vmem:[#allocation0] sm:$0x3]
    %10 = vrot.lane.b32.xlu0 %v9, 120
    %v11 = vpop.permute.xlu0 %10
    %vm12 = vcmask 64512
    %s13 = scalar_lea.vmem %s1, 1
    %14 = vst.msk [vmem:[%s13] ss:$16 sm:$0x3] %vm12, %v11
    %v15 = vld [vmem:[#allocation0] sm:$0x3]
    %16 = vrot.lane.b32.xlu0 %v15, 112
    %v17 = vpop.permute.xlu0 %16
    %vm18 = vcmask 64512
    %s19 = scalar_lea.vmem %s1, 2
    %20 = vst.msk [vmem:[%s19] ss:$16 sm:$0x3] %vm18, %v17
    %v21 = vld [vmem:[#allocation0] sm:$0x3]
    %22 = vrot.lane.b32.xlu0 %v21, 104
    %v23 = vpop.permute.xlu0 %22
    %vm24 = vcmask 64512
    %s25 = scalar_lea.vmem %s1, 3
    %26 = vst.msk [vmem:[%s25] ss:$16 sm:$0x3] %vm24, %v23
    %v27 = vld [vmem:[#allocation0] sm:$0x3]
    %28 = vrot.lane.b32.xlu0 %v27, 96
    %v29 = vpop.permute.xlu0 %28
    %vm30 = vcmask 64512
    %s31 = scalar_lea.vmem %s1, 4
    %32 = vst.msk [vmem:[%s31] ss:$16 sm:$0x3] %vm30, %v29
    %v33 = vld [vmem:[#allocation0] sm:$0x3]
    %34 = vrot.lane.b32.xlu0 %v33, 88
    %v35 = vpop.permute.xlu0 %34
    %vm36 = vcmask 64512
    %s37 = scalar_lea.vmem %s1, 5
    %38 = vst.msk [vmem:[%s37] ss:$16 sm:$0x3] %vm36, %v35
    %v39 = vld [vmem:[#allocation0] sm:$0x3]
    %40 = vrot.lane.b32.xlu0 %v39, 80
    %v41 = vpop.permute.xlu0 %40
    %vm42 = vcmask 64512
    %s43 = scalar_lea.vmem %s1, 6
    %44 = vst.msk [vmem:[%s43] ss:$16 sm:$0x3] %vm42, %v41
    %v45 = vld [vmem:[#allocation0] sm:$0x3]
    %46 = vrot.lane.b32.xlu0 %v45, 72
    %v47 = vpop.permute.xlu0 %46
    %vm48 = vcmask 64512
    %s49 = scalar_lea.vmem %s1, 7
    %50 = vst.msk [vmem:[%s49] ss:$16 sm:$0x3] %vm48, %v47
    %v51 = vld [vmem:[#allocation0] sm:$0x3]
    %52 = vrot.lane.b32.xlu0 %v51, 64
    %v53 = vpop.permute.xlu0 %52
    %vm54 = vcmask 64512
    %s55 = scalar_lea.vmem %s1, 8
    %56 = vst.msk [vmem:[%s55] ss:$16 sm:$0x3] %vm54, %v53
    %v57 = vld [vmem:[#allocation0] sm:$0x3]
    %58 = vrot.lane.b32.xlu0 %v57, 56
    %v59 = vpop.permute.xlu0 %58
    %vm60 = vcmask 64512
    %s61 = scalar_lea.vmem %s1, 9
    %62 = vst.msk [vmem:[%s61] ss:$16 sm:$0x3] %vm60, %v59
    %v63 = vld [vmem:[#allocation0] sm:$0x3]
    %64 = vrot.lane.b32.xlu0 %v63, 48
    %v65 = vpop.permute.xlu0 %64
    %vm66 = vcmask 64512
    %s67 = scalar_lea.vmem %s1, 10
    %68 = vst.msk [vmem:[%s67] ss:$16 sm:$0x3] %vm66, %v65
    %v69 = vld [vmem:[#allocation0] sm:$0x3]
    %70 = vrot.lane.b32.xlu0 %v69, 40
    %v71 = vpop.permute.xlu0 %70
    %vm72 = vcmask 64512
    %s73 = scalar_lea.vmem %s1, 11
    %74 = vst.msk [vmem:[%s73] ss:$16 sm:$0x3] %vm72, %v71
    %v75 = vld [vmem:[#allocation0] sm:$0x3]
    %76 = vrot.lane.b32.xlu0 %v75, 32
    %v77 = vpop.permute.xlu0 %76
    %vm78 = vcmask 64512
    %s79 = scalar_lea.vmem %s1, 12
    %80 = vst.msk [vmem:[%s79] ss:$16 sm:$0x3] %vm78, %v77
    %v81 = vld [vmem:[#allocation0] sm:$0x3]
    %82 = vrot.lane.b32.xlu0 %v81, 24
    %v83 = vpop.permute.xlu0 %82
    %vm84 = vcmask 64512
    %s85 = scalar_lea.vmem %s1, 13
    %86 = vst.msk [vmem:[%s85] ss:$16 sm:$0x3] %vm84, %v83
    %v87 = vld [vmem:[#allocation0] sm:$0x3]
    %88 = vrot.lane.b32.xlu0 %v87, 16
    %v89 = vpop.permute.xlu0 %88
    %vm90 = vcmask 64512
    %s91 = scalar_lea.vmem %s1, 14
    %92 = vst.msk [vmem:[%s91] ss:$16 sm:$0x3] %vm90, %v89
    %v93 = vld [vmem:[#allocation0] sm:$0x3]
    %94 = vrot.lane.b32.xlu0 %v93, 8
    %v95 = vpop.permute.xlu0 %94
    %vm96 = vcmask 64512
    %s97 = scalar_lea.vmem %s1, 15
    %98 = vst.msk [vmem:[%s97] ss:$16 sm:$0x3] %vm96, %v95

// kernel: tile.29
$region0: #{tile.29}
  %s0 = inlined_call_operand.vmem [shape: f32[16,8], index: 0, kind: input, shape index: {}]
  %s1 = inlined_call_operand.vmem [shape: f32[1,1,128], index: 1, kind: output, shape index: {}]
  $region1: #{tile.29} parent=0
    #allocation0 [shape = 'u8[4096]{0}', space=vmem, size = 0x1000, scoped, tag = 'scoped mem for output reshape']
    %v2 = vld [vmem:[%s0] sm:$0x1]
    %vm3 = vcmask 64512
    %4 = vst.msk [vmem:[#allocation0] sm:$0x1] %vm3, %v2
    %s5 = scalar_lea.vmem %s0, 15
    %v6 = vld [vmem:[%s5] sm:$0x1]
    %7 = vrot.lane.b32.xlu0 %v6, 120
    %v8 = vpop.permute.xlu0 %7
    %vm9 = vcmask 1048512
    %10 = vst.msk [vmem:[#allocation0] sm:$0x1] %vm9, %v8
    %s11 = scalar_lea.vmem %s0, 14
    %v12 = vld [vmem:[%s11] sm:$0x1]
    %13 = vrot.lane.b32.xlu0 %v12, 112
    %v14 = vpop.permute.xlu0 %13
    %vm15 = vcmask 982912
    %16 = vst.msk [vmem:[#allocation0] sm:$0x1] %vm15, %v14
    %s17 = scalar_lea.vmem %s0, 13
    %v18 = vld [vmem:[%s17] sm:$0x1]
    %19 = vrot.lane.b32.xlu0 %v18, 104
    %v20 = vpop.permute.xlu0 %19
    %vm21 = vcmask 917312
    %22 = vst.msk [vmem:[#allocation0] sm:$0x1] %vm21, %v20
    %s23 = scalar_lea.vmem %s0, 12
    %v24 = vld [vmem:[%s23] sm:$0x1]
    %25 = vrot.lane.b32.xlu0 %v24, 96
    %v26 = vpop.permute.xlu0 %25
    %vm27 = vcmask 851712
    %28 = vst.msk [vmem:[#allocation0] sm:$0x1] %vm27, %v26
    %s29 = scalar_lea.vmem %s0, 11
    %v30 = vld [vmem:[%s29] sm:$0x1]
    %31 = vrot.lane.b32.xlu0 %v30, 88
    %v32 = vpop.permute.xlu0 %31
    %vm33 = vcmask 786112
    %34 = vst.msk [vmem:[#allocation0] sm:$0x1] %vm33, %v32
    %s35 = scalar_lea.vmem %s0, 10
    %v36 = vld [vmem:[%s35] sm:$0x1]
    %37 = vrot.lane.b32.xlu0 %v36, 80
    %v38 = vpop.permute.xlu0 %37
    %vm39 = vcmask 720512
    %40 = vst.msk [vmem:[#allocation0] sm:$0x1] %vm39, %v38
    %s41 = scalar_lea.vmem %s0, 9
    %v42 = vld [vmem:[%s41] sm:$0x1]
    %43 = vrot.lane.b32.xlu0 %v42, 72
    %v44 = vpop.permute.xlu0 %43
    %vm45 = vcmask 654912
    %46 = vst.msk [vmem:[#allocation0] sm:$0x1] %vm45, %v44
    %s47 = scalar_lea.vmem %s0, 8
    %v48 = vld [vmem:[%s47] sm:$0x1]
    %49 = vrot.lane.b32.xlu0 %v48, 64
    %v50 = vpop.permute.xlu0 %49
    %vm51 = vcmask 589312
    %52 = vst.msk [vmem:[#allocation0] sm:$0x1] %vm51, %v50
    %s53 = scalar_lea.vmem %s0, 7
    %v54 = vld [vmem:[%s53] sm:$0x1]
    %55 = vrot.lane.b32.xlu0 %v54, 56
    %v56 = vpop.permute.xlu0 %55
    %vm57 = vcmask 523712
    %58 = vst.msk [vmem:[#allocation0] sm:$0x1] %vm57, %v56
    %s59 = scalar_lea.vmem %s0, 6
    %v60 = vld [vmem:[%s59] sm:$0x1]
    %61 = vrot.lane.b32.xlu0 %v60, 48
    %v62 = vpop.permute.xlu0 %61
    %vm63 = vcmask 458112
    %64 = vst.msk [vmem:[#allocation0] sm:$0x1] %vm63, %v62
    %s65 = scalar_lea.vmem %s0, 5
    %v66 = vld [vmem:[%s65] sm:$0x1]
    %67 = vrot.lane.b32.xlu0 %v66, 40
    %v68 = vpop.permute.xlu0 %67
    %vm69 = vcmask 392512
    %70 = vst.msk [vmem:[#allocation0] sm:$0x1] %vm69, %v68
    %s71 = scalar_lea.vmem %s0, 4
    %v72 = vld [vmem:[%s71] sm:$0x1]
    %73 = vrot.lane.b32.xlu0 %v72, 32
    %v74 = vpop.permute.xlu0 %73
    %vm75 = vcmask 326912
    %76 = vst.msk [vmem:[#allocation0] sm:$0x1] %vm75, %v74
    %s77 = scalar_lea.vmem %s0, 3
    %v78 = vld [vmem:[%s77] sm:$0x1]
    %79 = vrot.lane.b32.xlu0 %v78, 24
    %v80 = vpop.permute.xlu0 %79
    %vm81 = vcmask 261312
    %82 = vst.msk [vmem:[#allocation0] sm:$0x1] %vm81, %v80
    %s83 = scalar_lea.vmem %s0, 2
    %v84 = vld [vmem:[%s83] sm:$0x1]
    %85 = vrot.lane.b32.xlu0 %v84, 16
    %v86 = vpop.permute.xlu0 %85
    %vm87 = vcmask 195712
    %88 = vst.msk [vmem:[#allocation0] sm:$0x1] %vm87, %v86
    %s89 = scalar_lea.vmem %s0, 1
    %v90 = vld [vmem:[%s89] sm:$0x1]
    %91 = vrot.lane.b32.xlu0 %v90, 8
    %v92 = vpop.permute.xlu0 %91
    %vm93 = vcmask 130112
    %94 = vst.msk [vmem:[#allocation0] sm:$0x1] %vm93, %v92
    %s96 = sshllo.u32 0, 1
    %v98 = vld [vmem:[#allocation0] sm:%s96]
    %s99 = sshllo.u32 0, 1
    %100 = vst [vmem:[%s1] sm:%s99] %v98

// kernel: mtam_forward.3
$region0: #{mtam_forward.3}
  #allocation0 [shape = 'u32[]', space=smem, size = 0x4, offset = 0x4, fixed_abs, tag = 'smem constant byte address 0x4 - core index']
  #allocation1 [shape = 'u32[144,128]{1,0:T(1,128)}', space=vmem, size = 0x12000, scoped, tag = 'internal scratch']
  %s0 = inlined_call_operand.vmem [shape: f32[2,16,128], index: 0, kind: input, shape index: {}]
  %s1 = inlined_call_operand.vmem [shape: f32[2,1,128], index: 1, kind: input, shape index: {}]
  %s2 = inlined_call_operand.vmem [shape: f32[1,1,128], index: 2, kind: input, shape index: {}]
  %s3 = inlined_call_operand.vmem [shape: f32[2,16,128], index: 3, kind: output, shape index: {}]
  %s4 = sld [smem:[#allocation0]]
  $region22: #{mtam_forward.3} parent=0
    _
  %s6 = ssub.s32 1, %s4
  %s7 = scalar_select 0, %s6, %s4
  // Predicated region
  $region2: #{mtam_forward.3} parent=0 // pred_check
    _
  $region3: #{mtam_forward.3} parent=0 // pred_check_branch
    %9 = sbr.rel (0) target = $region5
  $region4: #{mtam_forward.3} parent=0 // pred_region
    _
  $region5: #{mtam_forward.3} parent=0 // pred_fallthru
    _
  // Predicated region
  $region6: #{mtam_forward.3} parent=0 // pred_check
    _
  $region7: #{mtam_forward.3} parent=0 // pred_check_branch
    %11 = sbr.rel (0) target = $region9
  $region8: #{mtam_forward.3} parent=0 // pred_region
    _
  $region9: #{mtam_forward.3} parent=0 // pred_fallthru
    _
  // Predicated region
  $region10: #{mtam_forward.3} parent=0 // pred_check
    _
  $region11: #{mtam_forward.3} parent=0 // pred_check_branch
    %13 = sbr.rel (0) target = $region13
  $region12: #{mtam_forward.3} parent=0 // pred_region
    _
  $region13: #{mtam_forward.3} parent=0 // pred_fallthru
    _
  %v14 = vld [vmem:[%s0] sm:$0xff]
  %v15 = vld [vmem:[%s0 + $0x8] sm:$0xff]
  %v16 = vld [vmem:[%s0 + $0x10] sm:$0xff]
  %v17 = vld [vmem:[%s0 + $0x18] sm:$0xff]
  %v18 = vld [vmem:[%s1] sm:$0x1]
  %v19 = vld [vmem:[%s1 + $0x1] sm:$0x1]
  %v22 = vlaneseq
  %v23 = vshrl.u32 %v22, 7
  %v24 = vsub.s32 0, %v23
  %v25 = vrot.slane %v18, %v24
  %v26 = vlaneseq
  %v27 = vshrl.u32 %v26, 7
  %v28 = vsub.s32 0, %v27
  %v29 = vrot.slane %v19, %v28
  %v32 = vmul.f32 %v14, %v25
  %v33 = vmul.f32 %v15, %v25
  %v34 = vmul.f32 %v16, %v29
  %v35 = vmul.f32 %v17, %v29
  %v36 = vld [vmem:[%s2] sm:$0x1]
  %v38 = vlaneseq
  %v39 = vshrl.u32 %v38, 7
  %v40 = vsub.s32 0, %v39
  %v41 = vrot.slane %v36, %v40
  %v43 = vadd.f32 %v32, %v41
  %v44 = vadd.f32 %v33, %v41
  %v45 = vadd.f32 %v34, %v41
  %v46 = vadd.f32 %v35, %v41
  %v47 = vmax.f32 %v43, 0.0
  %v48 = vmax.f32 %v44, 0.0
  %v49 = vmax.f32 %v45, 0.0
  %v50 = vmax.f32 %v46, 0.0
  %51 = vst [vmem:[%s3] sm:$0xff] %v47
  %52 = vst [vmem:[%s3 + $0x8] sm:$0xff] %v48
  %53 = vst [vmem:[%s3 + $0x10] sm:$0xff] %v49
  %54 = vst [vmem:[%s3 + $0x18] sm:$0xff] %v50
  // Predicated region
  $region14: #{mtam_forward.3} parent=0 // pred_check
    _
  $region15: #{mtam_forward.3} parent=0 // pred_check_branch
    %56 = sbr.rel (0) target = $region17
  $region16: #{mtam_forward.3} parent=0 // pred_region
    _
  $region17: #{mtam_forward.3} parent=0 // pred_fallthru
    _
  // Predicated region
  $region18: #{mtam_forward.3} parent=0 // pred_check
    _
  $region19: #{mtam_forward.3} parent=0 // pred_check_branch
    %58 = sbr.rel (0) target = $region21
  $region20: #{mtam_forward.3} parent=0 // pred_region
    _
  $region21: #{mtam_forward.3} parent=0 // pred_fallthru
    _

</llo_original>
